<compile_context>
chip_gen: v5e
topology: v5e:2x2
jax: 0.10.0
libtpu: 0.0.40
codegen_flags: <defaults>
</compile_context>

<pallas_src>
import jax
import jax.numpy as jnp
from jax.experimental import pallas as pl
from jax.experimental.pallas import tpu as pltpu

LATENT_DIMS = 32
H1, H2, OUT = 256, 512, 2352          # 2352 = 3 * 28 * 28
OUT_PAD = 2432                        # 19 * 128 -> lane-aligned W3 for the MXU


def _round_up(x, m):
    return (x + m - 1) // m * m


def _pick_tiling(B):
    """Choose (tile_b, B_pad): <=256 rows/step, >=2 steps when batch allows,
    and minimal row padding (avoids the B=264 -> 512-row blowup)."""
    B8 = _round_up(max(B, 1), 8)
    n_steps = pl.cdiv(B8, 256)
    if B8 >= 16:                      # >=2 steps so v7x's 2 TCs both get work
        n_steps = max(n_steps, 2)
    tile_b = _round_up(pl.cdiv(B8, n_steps), 8)
    return tile_b, n_steps * tile_b


def decoder_kernel(z_ref, w1_ref, b1_ref, w2_ref, b2_ref, w3_ref, b3_ref, o_ref):
    """Fused 3-layer MLP (relu, relu, sigmoid) for one batch tile.

    Weights arrive as bf16 (halved HBM traffic); activations are cast to bf16
    at each MXU input; accumulation stays f32 via preferred_element_type.
    """
    z = z_ref[...].astype(jnp.bfloat16)                            # (tb, L)

    h1 = jnp.dot(z, w1_ref[...], preferred_element_type=jnp.float32)
    h1 = jnp.maximum(h1 + b1_ref[...], 0.0)                        # (tb, 256) f32

    h2 = jnp.dot(h1.astype(jnp.bfloat16), w2_ref[...],
                 preferred_element_type=jnp.float32)
    h2 = jnp.maximum(h2 + b2_ref[...], 0.0)                        # (tb, 512) f32

    logits = jnp.dot(h2.astype(jnp.bfloat16), w3_ref[...],
                     preferred_element_type=jnp.float32)           # (tb, OUT_PAD)

    # Drop the lane-alignment pad columns before any elementwise work / store:
    # padded logits never leave VMEM, and sigmoid is only paid on real columns.
    x = logits[:, :OUT] + b3_ref[...]                              # (tb, OUT)

    # sigmoid(x) = 1 / (1 + exp(-x)); exp + approx reciprocal both use the EUP
    # slot (slack next to the MXU) instead of a VALU divide.
    y = pl.reciprocal(1.0 + jnp.exp(-x), approx=True)
    o_ref[...] = y.astype(o_ref.dtype)


def decoder_forward(z, params, *, tile_b=None, out_dtype=jnp.float32):
    """z: (B, latent) f32 -> (B, 3, 28, 28). Matches torch Decoder.forward.

    out_dtype=jnp.bfloat16 halves the dominant output HBM write (v6e win) at
    the cost of ~0.4% relative error on [0,1] sigmoid outputs.
    """
    w1, b1, w2, b2, w3, b3 = params
    B, L = z.shape

    if tile_b is None:
        tile_b, B_pad = _pick_tiling(B)
    else:
        assert tile_b % 8 == 0, "batch tile must be a multiple of the 8-row sublane"
        B_pad = _round_up(B, tile_b)

    # PyTorch layout (out, in) -> (in, out); weights to bf16 (f32 accumulation
    # happens in-kernel).  W3 columns are zero-padded 2352 -> 2432 so the W3
    # matmul is 128-lane aligned; the pad columns are dropped inside the
    # kernel and never stored.  Biases stay f32, un-padded.
    w1t = w1.T.astype(jnp.bfloat16)                                # (L, 256)
    w2t = w2.T.astype(jnp.bfloat16)                                # (256, 512)
    w3t = jnp.pad(w3.T, ((0, 0), (0, OUT_PAD - OUT))).astype(jnp.bfloat16)
    b1r = b1.reshape(1, H1).astype(jnp.float32)
    b2r = b2.reshape(1, H2).astype(jnp.float32)
    b3r = b3.reshape(1, OUT).astype(jnp.float32)

    z_p = z if B_pad == B else jnp.pad(z, ((0, B_pad - B), (0, 0)))

    grid = (B_pad // tile_b,)

    # Weights / biases: grid-invariant (same full block every step).
    full = lambda shape: pl.BlockSpec(shape, lambda i: (0, 0))

    out_flat = pl.pallas_call(
        decoder_kernel,
        out_shape=jax.ShapeDtypeStruct((B_pad, OUT), out_dtype),
        grid_spec=pltpu.PrefetchScalarGridSpec(
            num_scalar_prefetch=0,
            grid=grid,
            in_specs=[
                pl.BlockSpec((tile_b, L), lambda i: (i, 0)),       # z batch tile
                full((L, H1)), full((1, H1)),
                full((H1, H2)), full((1, H2)),
                full((H2, OUT_PAD)), full((1, OUT)),
            ],
            # Full last dim (2352) -> legal block; only the final 48-lane
            # vreg store is masked, and no wrapper-side de-pad copy is needed.
            out_specs=pl.BlockSpec((tile_b, OUT), lambda i: (i, 0)),
        ),
        compiler_params=pltpu.CompilerParams(
            dimension_semantics=("parallel",),      # batch axis -> both TCs on v7x
            vmem_limit_bytes=32 * 1024 * 1024,      # headroom over v5e 16 MiB default
        ),
    )(z_p, w1t, b1r, w2t, b2r, w3t, b3r)

    # Row pad (if any) is the only thing left to trim; reshape is contiguous.
    if B_pad != B:
        out_flat = out_flat[:B]
    return out_flat.reshape(-1, 3, 28, 28)


def init_params(key, latent_dims):
    """Deterministic synthetic params, PyTorch nn.Linear shapes (out, in)."""
    ks = jax.random.split(key, 6)

    def linear_init(kw, kb, fan_in, fan_out):
        bound = 1.0 / jnp.sqrt(fan_in)
        w = jax.random.uniform(kw, (fan_out, fan_in), jnp.float32, -bound, bound)
        b = jax.random.uniform(kb, (fan_out,), jnp.float32, -bound, bound)
        return w, b

    w1, b1 = linear_init(ks[0], ks[1], latent_dims, H1)
    w2, b2 = linear_init(ks[2], ks[3], H1, H2)
    w3, b3 = linear_init(ks[4], ks[5], H2, OUT)
    return (w1, b1, w2, b2, w3, b3)


def reference_forward(z, params):
    """Pure-JAX f32 reference matching torch semantics."""
    w1, b1, w2, b2, w3, b3 = params
    h1 = jnp.maximum(z @ w1.T + b1, 0.0)
    h2 = jnp.maximum(h1 @ w2.T + b2, 0.0)
    y = jax.nn.sigmoid(h2 @ w3.T + b3)
    return y.reshape(-1, 3, 28, 28)


if __name__ == "__main__":
    key = jax.random.PRNGKey(0)
    k_z, k_p = jax.random.split(key)

    B = 8
    z = jax.random.normal(k_z, (B, LATENT_DIMS), jnp.float32)
    params = init_params(k_p, LATENT_DIMS)

    out = decoder_forward(z, params)
    out = jax.block_until_ready(out)

    ref = reference_forward(z, params)
    assert out.shape == (B, 3, 28, 28), out.shape
    # bf16 weights/activations + approx-reciprocal sigmoid, f32 accumulation:
    # intentional quantization of the model -> slightly looser tolerance.
    assert jnp.allclose(out, ref, atol=1e-2, rtol=1e-2), "mismatch vs reference"

    print("KERNEL_OK")
</pallas_src>

<mosaic_0001>
module attributes {stable_mosaic.version = 11 : i64} {
  func.func @decoder_kernel(%arg0: i32, %arg1: memref<8x32xf32, #tpu.memory_space<vmem>>, %arg2: memref<32x256xbf16, #tpu.memory_space<vmem>>, %arg3: memref<1x256xf32, #tpu.memory_space<vmem>>, %arg4: memref<256x512xbf16, #tpu.memory_space<vmem>>, %arg5: memref<1x512xf32, #tpu.memory_space<vmem>>, %arg6: memref<512x2432xbf16, #tpu.memory_space<vmem>>, %arg7: memref<1x2352xf32, #tpu.memory_space<vmem>>, %arg8: memref<8x2352xf32, #tpu.memory_space<vmem>>) attributes {dimension_semantics = [#tpu.dimension_semantics<parallel>], iteration_bounds = array<i64: 1>, scalar_prefetch = 0 : i64, scratch_operands = 0 : i64, tpu.core_type = #tpu.core_type<tc>, window_params = [{transform_indices = @transform_0, window_bounds = array<i64: 8, 32>}, {pipeline_mode = #tpu.pipeline_mode<synchronous>, transform_indices = @transform_1, window_bounds = array<i64: 32, 256>}, {pipeline_mode = #tpu.pipeline_mode<synchronous>, transform_indices = @transform_2, window_bounds = array<i64: 1, 256>}, {pipeline_mode = #tpu.pipeline_mode<synchronous>, transform_indices = @transform_3, window_bounds = array<i64: 256, 512>}, {pipeline_mode = #tpu.pipeline_mode<synchronous>, transform_indices = @transform_4, window_bounds = array<i64: 1, 512>}, {pipeline_mode = #tpu.pipeline_mode<synchronous>, transform_indices = @transform_5, window_bounds = array<i64: 512, 2432>}, {pipeline_mode = #tpu.pipeline_mode<synchronous>, transform_indices = @transform_6, window_bounds = array<i64: 1, 2352>}, {transform_indices = @transform_7, window_bounds = array<i64: 8, 2352>}]} {
    %c0 = arith.constant 0 : index
    %c0_0 = arith.constant 0 : index
    %0 = vector.load %arg1[%c0, %c0_0] : memref<8x32xf32, #tpu.memory_space<vmem>>, vector<8x32xf32>
    %1 = arith.truncf %0 : vector<8x32xf32> to vector<8x32xbf16>
    %c0_1 = arith.constant 0 : index
    %c0_2 = arith.constant 0 : index
    %2 = vector.load %arg2[%c0_1, %c0_2] : memref<32x256xbf16, #tpu.memory_space<vmem>>, vector<32x256xbf16>
    %cst = arith.constant dense<0.000000e+00> : vector<8x256xf32>
    %3 = tpu.matmul %1, %2, %cst {dimension_numbers = #tpu.dot_dimension_numbers<[1], [0], [0], [1], [0, 0, 1, 1], [], []>} : vector<8x32xbf16>, vector<32x256xbf16>, vector<8x256xf32> -> vector<8x256xf32>
    %c0_3 = arith.constant 0 : index
    %c0_4 = arith.constant 0 : index
    %4 = vector.load %arg3[%c0_3, %c0_4] : memref<1x256xf32, #tpu.memory_space<vmem>>, vector<1x256xf32>
    %5 = vector.broadcast %4 : vector<1x256xf32> to vector<8x256xf32>
    %6 = arith.addf %3, %5 : vector<8x256xf32>
    %cst_5 = arith.constant 0.000000e+00 : f32
    %7 = vector.broadcast %cst_5 : f32 to vector<8x256xf32>
    %8 = arith.maximumf %6, %7 : vector<8x256xf32>
    %9 = arith.truncf %8 : vector<8x256xf32> to vector<8x256xbf16>
    %c0_6 = arith.constant 0 : index
    %c0_7 = arith.constant 0 : index
    %10 = vector.load %arg4[%c0_6, %c0_7] : memref<256x512xbf16, #tpu.memory_space<vmem>>, vector<256x512xbf16>
    %cst_8 = arith.constant dense<0.000000e+00> : vector<8x512xf32>
    %11 = tpu.matmul %9, %10, %cst_8 {dimension_numbers = #tpu.dot_dimension_numbers<[1], [0], [0], [1], [0, 0, 1, 1], [], []>} : vector<8x256xbf16>, vector<256x512xbf16>, vector<8x512xf32> -> vector<8x512xf32>
    %c0_9 = arith.constant 0 : index
    %c0_10 = arith.constant 0 : index
    %12 = vector.load %arg5[%c0_9, %c0_10] : memref<1x512xf32, #tpu.memory_space<vmem>>, vector<1x512xf32>
    %13 = vector.broadcast %12 : vector<1x512xf32> to vector<8x512xf32>
    %14 = arith.addf %11, %13 : vector<8x512xf32>
    %cst_11 = arith.constant 0.000000e+00 : f32
    %15 = vector.broadcast %cst_11 : f32 to vector<8x512xf32>
    %16 = arith.maximumf %14, %15 : vector<8x512xf32>
    %17 = arith.truncf %16 : vector<8x512xf32> to vector<8x512xbf16>
    %c0_12 = arith.constant 0 : index
    %c0_13 = arith.constant 0 : index
    %18 = vector.load %arg6[%c0_12, %c0_13] : memref<512x2432xbf16, #tpu.memory_space<vmem>>, vector<512x2432xbf16>
    %cst_14 = arith.constant dense<0.000000e+00> : vector<8x2432xf32>
    %19 = tpu.matmul %17, %18, %cst_14 {dimension_numbers = #tpu.dot_dimension_numbers<[1], [0], [0], [1], [0, 0, 1, 1], [], []>} : vector<8x512xbf16>, vector<512x2432xbf16>, vector<8x2432xf32> -> vector<8x2432xf32>
    %20 = vector.extract_strided_slice %19 {offsets = [0, 0], sizes = [8, 2352], strides = [1, 1]} : vector<8x2432xf32> to vector<8x2352xf32>
    %c0_15 = arith.constant 0 : index
    %c0_16 = arith.constant 0 : index
    %21 = vector.load %arg7[%c0_15, %c0_16] : memref<1x2352xf32, #tpu.memory_space<vmem>>, vector<1x2352xf32>
    %22 = vector.broadcast %21 : vector<1x2352xf32> to vector<8x2352xf32>
    %23 = arith.addf %20, %22 : vector<8x2352xf32>
    %cst_17 = arith.constant 0.000000e+00 : f32
    %24 = vector.broadcast %cst_17 : f32 to vector<8x2352xf32>
    %25 = arith.subf %24, %23 : vector<8x2352xf32>
    %26 = math.exp %25 : vector<8x2352xf32>
    %cst_18 = arith.constant 1.000000e+00 : f32
    %27 = vector.broadcast %cst_18 : f32 to vector<8x2352xf32>
    %28 = arith.addf %27, %26 : vector<8x2352xf32>
    %29 = tpu.reciprocal %28 {approx = true} : vector<8x2352xf32> -> vector<8x2352xf32>
    %c0_19 = arith.constant 0 : index
    %c0_20 = arith.constant 0 : index
    %30 = vector.load %arg8[%c0_19, %c0_20] : memref<8x2352xf32, #tpu.memory_space<vmem>>, vector<8x2352xf32>
    tpu.vector_store %arg8[%c0_19, %c0_20], %29 {strides = array<i32>} : memref<8x2352xf32, #tpu.memory_space<vmem>>, vector<8x2352xf32>,
    return
  }
  func.func @transform_0(%arg0: i32) -> (i32, i32) {
    %c0_i32 = arith.constant 0 : i32
    %c0_i32_0 = arith.constant 0 : i32
    return %arg0, %c0_i32 : i32, i32
  }
  func.func @transform_1(%arg0: i32) -> (i32, i32) {
    %c0_i32 = arith.constant 0 : i32
    %c0_i32_0 = arith.constant 0 : i32
    %c0_i32_1 = arith.constant 0 : i32
    return %c0_i32, %c0_i32_0 : i32, i32
  }
  func.func @transform_2(%arg0: i32) -> (i32, i32) {
    %c0_i32 = arith.constant 0 : i32
    %c0_i32_0 = arith.constant 0 : i32
    %c0_i32_1 = arith.constant 0 : i32
    return %c0_i32, %c0_i32_0 : i32, i32
  }
  func.func @transform_3(%arg0: i32) -> (i32, i32) {
    %c0_i32 = arith.constant 0 : i32
    %c0_i32_0 = arith.constant 0 : i32
    %c0_i32_1 = arith.constant 0 : i32
    return %c0_i32, %c0_i32_0 : i32, i32
  }
  func.func @transform_4(%arg0: i32) -> (i32, i32) {
    %c0_i32 = arith.constant 0 : i32
    %c0_i32_0 = arith.constant 0 : i32
    %c0_i32_1 = arith.constant 0 : i32
    return %c0_i32, %c0_i32_0 : i32, i32
  }
  func.func @transform_5(%arg0: i32) -> (i32, i32) {
    %c0_i32 = arith.constant 0 : i32
    %c0_i32_0 = arith.constant 0 : i32
    %c0_i32_1 = arith.constant 0 : i32
    return %c0_i32, %c0_i32_0 : i32, i32
  }
  func.func @transform_6(%arg0: i32) -> (i32, i32) {
    %c0_i32 = arith.constant 0 : i32
    %c0_i32_0 = arith.constant 0 : i32
    %c0_i32_1 = arith.constant 0 : i32
    return %c0_i32, %c0_i32_0 : i32, i32
  }
  func.func @transform_7(%arg0: i32) -> (i32, i32) {
    %c0_i32 = arith.constant 0 : i32
    %c0_i32_0 = arith.constant 0 : i32
    return %arg0, %c0_i32 : i32, i32
  }
}

</mosaic_0001>

<llo_original>
// kernel: tpu_custom_call.1
$region0: #{tpu_custom_call.1}
  #allocation0 [shape = 'u32[]', space=smem, size = 0x4, offset = 0x4, fixed_abs, tag = 'smem constant byte address 0x4 - core index']
  #allocation1 [shape = 'u32[72,128]{1,0:T(1,128)}', space=vmem, size = 0x9000, scoped, tag = 'internal scratch']
  %s0 = inlined_call_operand.hbm [shape: f32[8,32], index: 0, kind: input, shape index: {}]
  %s1 = inlined_call_operand.hbm [shape: bf16[32,256], index: 1, kind: input, shape index: {}]
  %s2 = inlined_call_operand.hbm [shape: f32[1,256], index: 2, kind: input, shape index: {}]
  %s3 = inlined_call_operand.hbm [shape: bf16[256,512], index: 3, kind: input, shape index: {}]
  %s4 = inlined_call_operand.hbm [shape: f32[1,512], index: 4, kind: input, shape index: {}]
  %s5 = inlined_call_operand.hbm [shape: bf16[512,2432], index: 5, kind: input, shape index: {}]
  %s6 = inlined_call_operand.hbm [shape: f32[1,2352], index: 6, kind: input, shape index: {}]
  %s7 = inlined_call_operand.hbm [shape: f32[8,2352], index: 7, kind: output, shape index: {}]
  %s8 = sld [smem:[#allocation0]]
  $region66: #{tpu_custom_call.1} parent=0
    _
  %s10 = ssub.s32 1, %s8
  %s11 = scalar_select 0, %s10, %s8
  $region1: #{tpu_custom_call.1} parent=0
    #allocation2 [shape = 'u8[4096]{0}', space=vmem, size = 0x1000, scoped, tag = 'input window, operand 0, single buffered']
    #allocation3 [shape = 's32[1]{0}', space=sflag, size = 0x4, scoped, tag = 'scoped memory for tpu_custom_call.1']
    #allocation4 [shape = 's32[1]{0}', space=sflag, size = 0x4, scoped, tag = 'scoped memory for tpu_custom_call.1']
    #allocation5 [shape = 'u8[16384]{0}', space=vmem, size = 0x4000, scoped, tag = 'input window, operand 1, single buffered']
    #allocation6 [shape = 's32[1]{0}', space=sflag, size = 0x4, scoped, tag = 'scoped memory for tpu_custom_call.1']
    #allocation7 [shape = 'u8[1024]{0}', space=vmem, size = 0x400, scoped, tag = 'input window, operand 2, single buffered']
    #allocation8 [shape = 'u8[262144]{0}', space=vmem, size = 0x40000, scoped, tag = 'input window, operand 3, single buffered']
    #allocation9 [shape = 's32[1]{0}', space=sflag, size = 0x4, scoped, tag = 'scoped memory for tpu_custom_call.1']
    #allocation10 [shape = 'u8[2048]{0}', space=vmem, size = 0x800, scoped, tag = 'input window, operand 4, single buffered']
    #allocation11 [shape = 'u8[2490368]{0}', space=vmem, size = 0x260000, scoped, tag = 'input window, operand 5, single buffered']
    #allocation12 [shape = 's32[1]{0}', space=sflag, size = 0x4, scoped, tag = 'scoped memory for tpu_custom_call.1']
    #allocation13 [shape = 'u8[9728]{0}', space=vmem, size = 0x2800, scoped, tag = 'input window, operand 6, single buffered']
    #allocation14 [shape = 'u8[77824]{0}', space=vmem, size = 0x13000, scoped, tag = 'output window, operand 0, single buffered']
    %12 = vsyncpa [#allocation3], 0
    %13 = vsyncpa [#allocation6], 0
    %14 = vsyncpa [#allocation9], 0
    %15 = vsyncpa [#allocation12], 0
    %16 = vsyncpa [#allocation4], 0
    // Predicated region
    $region2: #{tpu_custom_call.1} parent=1 // pred_check
      _
    $region3: #{tpu_custom_call.1} parent=1 // pred_check_branch
      %18 = sbr.rel (0) target = $region5
    $region4: #{tpu_custom_call.1} parent=1 // pred_region
      %20 = vsyncadd [#allocation3], 0
      %s22 = sshll.u32 %s0, 4
      %s23 = int_to_ptr.hbm [resolvable:$true] %s22
      %s24 = sshll.u32 [#allocation2], 4
      %s25 = int_to_ptr.vmem [resolvable:$true] %s24
      %27 = dma.hbm_to_vmem [thread:$0]  %s23, 128, %s25, [#allocation3]
    $region5: #{tpu_custom_call.1} parent=1 // pred_fallthru
      _
    // Predicated region
    $region6: #{tpu_custom_call.1} parent=1 // pred_check
      _
    $region7: #{tpu_custom_call.1} parent=1 // pred_check_branch
      %29 = sbr.rel (0) target = $region9
    $region8: #{tpu_custom_call.1} parent=1 // pred_region
      %31 = vsyncadd [#allocation6], 0
      %s32 = sshll.u32 %s1, 4
      %s33 = int_to_ptr.hbm [resolvable:$true] %s32
      %s34 = sshll.u32 [#allocation5], 4
      %s35 = int_to_ptr.vmem [resolvable:$true] %s34
      %40 = dma.hbm_to_vmem [thread:$0]  %s33, 512, %s35, [#allocation6], 128, 128, 8
    $region9: #{tpu_custom_call.1} parent=1 // pred_fallthru
      _
    // Predicated region
    $region10: #{tpu_custom_call.1} parent=1 // pred_check
      _
    $region11: #{tpu_custom_call.1} parent=1 // pred_check_branch
      %42 = sbr.rel (0) target = $region13
    $region12: #{tpu_custom_call.1} parent=1 // pred_region
      %44 = vsyncadd [#allocation6], 0
      %s46 = sshll.u32 %s2, 4
      %s47 = int_to_ptr.hbm [resolvable:$true] %s46
      %s48 = sshll.u32 [#allocation7], 4
      %s49 = int_to_ptr.vmem [resolvable:$true] %s48
      %51 = dma.hbm_to_vmem [thread:$0]  %s47, 32, %s49, [#allocation6]
    $region13: #{tpu_custom_call.1} parent=1 // pred_fallthru
      _
    // Predicated region
    $region14: #{tpu_custom_call.1} parent=1 // pred_check
      _
    $region15: #{tpu_custom_call.1} parent=1 // pred_check_branch
      %53 = sbr.rel (0) target = $region17
    $region16: #{tpu_custom_call.1} parent=1 // pred_region
      %55 = vsyncadd [#allocation9], 0
      %s56 = sshll.u32 %s3, 4
      %s57 = int_to_ptr.hbm [resolvable:$true] %s56
      %s58 = sshll.u32 [#allocation8], 4
      %s59 = int_to_ptr.vmem [resolvable:$true] %s58
      %64 = dma.hbm_to_vmem [thread:$0]  %s57, 8192, %s59, [#allocation9], 256, 256, 16
    $region17: #{tpu_custom_call.1} parent=1 // pred_fallthru
      _
    // Predicated region
    $region18: #{tpu_custom_call.1} parent=1 // pred_check
      _
    $region19: #{tpu_custom_call.1} parent=1 // pred_check_branch
      %66 = sbr.rel (0) target = $region21
    $region20: #{tpu_custom_call.1} parent=1 // pred_region
      %68 = vsyncadd [#allocation9], 0
      %s70 = sshll.u32 %s4, 4
      %s71 = int_to_ptr.hbm [resolvable:$true] %s70
      %s72 = sshll.u32 [#allocation10], 4
      %s73 = int_to_ptr.vmem [resolvable:$true] %s72
      %75 = dma.hbm_to_vmem [thread:$0]  %s71, 64, %s73, [#allocation9]
    $region21: #{tpu_custom_call.1} parent=1 // pred_fallthru
      _
    // Predicated region
    $region22: #{tpu_custom_call.1} parent=1 // pred_check
      _
    $region23: #{tpu_custom_call.1} parent=1 // pred_check_branch
      %77 = sbr.rel (0) target = $region25
    $region24: #{tpu_custom_call.1} parent=1 // pred_region
      %79 = vsyncadd [#allocation12], 0
      %s80 = sshll.u32 %s5, 4
      %s81 = int_to_ptr.hbm [resolvable:$true] %s80
      %s82 = sshll.u32 [#allocation11], 4
      %s83 = int_to_ptr.vmem [resolvable:$true] %s82
      %88 = dma.hbm_to_vmem [thread:$0]  %s81, 77824, %s83, [#allocation12], 1216, 1216, 76
    $region25: #{tpu_custom_call.1} parent=1 // pred_fallthru
      _
    // Predicated region
    $region26: #{tpu_custom_call.1} parent=1 // pred_check
      _
    $region27: #{tpu_custom_call.1} parent=1 // pred_check_branch
      %90 = sbr.rel (0) target = $region29
    $region28: #{tpu_custom_call.1} parent=1 // pred_region
      %92 = vsyncadd [#allocation12], 0
      %s94 = sshll.u32 %s6, 4
      %s95 = int_to_ptr.hbm [resolvable:$true] %s94
      %s96 = sshll.u32 [#allocation13], 4
      %s97 = int_to_ptr.vmem [resolvable:$true] %s96
      %99 = dma.hbm_to_vmem [thread:$0]  %s95, 304, %s97, [#allocation12]
    $region29: #{tpu_custom_call.1} parent=1 // pred_fallthru
      _
    // Predicated region
    $region30: #{tpu_custom_call.1} parent=1 // pred_check
      _
    $region31: #{tpu_custom_call.1} parent=1 // pred_check_branch
      %101 = sbr.rel (0) target = $region33
    $region32: #{tpu_custom_call.1} parent=1 // pred_region
      %103 = dma.done [#allocation3], 128
    $region33: #{tpu_custom_call.1} parent=1 // pred_fallthru
      _
    // Predicated region
    $region34: #{tpu_custom_call.1} parent=1 // pred_check
      _
    $region35: #{tpu_custom_call.1} parent=1 // pred_check_branch
      %105 = sbr.rel (0) target = $region37
    $region36: #{tpu_custom_call.1} parent=1 // pred_region
      %107 = dma.done [#allocation6], 512
    $region37: #{tpu_custom_call.1} parent=1 // pred_fallthru
      _
    // Predicated region
    $region38: #{tpu_custom_call.1} parent=1 // pred_check
      _
    $region39: #{tpu_custom_call.1} parent=1 // pred_check_branch
      %109 = sbr.rel (0) target = $region41
    $region40: #{tpu_custom_call.1} parent=1 // pred_region
      %111 = dma.done [#allocation6], 32
    $region41: #{tpu_custom_call.1} parent=1 // pred_fallthru
      _
    // Predicated region
    $region42: #{tpu_custom_call.1} parent=1 // pred_check
      _
    $region43: #{tpu_custom_call.1} parent=1 // pred_check_branch
      %113 = sbr.rel (0) target = $region45
    $region44: #{tpu_custom_call.1} parent=1 // pred_region
      %115 = dma.done [#allocation9], 8192
    $region45: #{tpu_custom_call.1} parent=1 // pred_fallthru
      _
    // Predicated region
    $region46: #{tpu_custom_call.1} parent=1 // pred_check
      _
    $region47: #{tpu_custom_call.1} parent=1 // pred_check_branch
      %117 = sbr.rel (0) target = $region49
    $region48: #{tpu_custom_call.1} parent=1 // pred_region
      %119 = dma.done [#allocation9], 64
    $region49: #{tpu_custom_call.1} parent=1 // pred_fallthru
      _
    // Predicated region
    $region50: #{tpu_custom_call.1} parent=1 // pred_check
      _
    $region51: #{tpu_custom_call.1} parent=1 // pred_check_branch
      %121 = sbr.rel (0) target = $region53
    $region52: #{tpu_custom_call.1} parent=1 // pred_region
      %123 = dma.done [#allocation12], 77824
    $region53: #{tpu_custom_call.1} parent=1 // pred_fallthru
      _
    // Predicated region
    $region54: #{tpu_custom_call.1} parent=1 // pred_check
      _
    $region55: #{tpu_custom_call.1} parent=1 // pred_check_branch
      %125 = sbr.rel (0) target = $region57
    $region56: #{tpu_custom_call.1} parent=1 // pred_region
      %127 = dma.done [#allocation12], 304
    $region57: #{tpu_custom_call.1} parent=1 // pred_fallthru
      _
    %v129 = vld [vmem:[#allocation2] sm:$0xff]
    %v130 = vpack.c.bf16 %v129, %v129
    %v131 = vld [vmem:[#allocation5] sm:$0xff]
    %v132 = vld [vmem:[#allocation5 + $0x8] sm:$0xff]
    %v133 = vld [vmem:[#allocation5 + $0x10] sm:$0xff]
    %v134 = vld [vmem:[#allocation5 + $0x18] sm:$0xff]
    %v135 = vld [vmem:[#allocation7] sm:$0x3]
    %v137 = vperm.slane %v135, 0
    %v138 = vperm.slane %v135, 1
    %v145 = vunpack.c.l.b16 %v131
    %v146 = vunpack.c.h.b16 %v131
    %v147 = vunpack.c.l.b16 %v132
    %v148 = vunpack.c.h.b16 %v132
    %v149 = vunpack.c.l.b16 %v133
    %v150 = vunpack.c.h.b16 %v133
    %v151 = vunpack.c.l.b16 %v134
    %v152 = vunpack.c.h.b16 %v134
    %v153 = vpack.c.b16 %v147, %v145
    %v154 = vpack.c.b16 %v148, %v146
    %v155 = vpack.c.b16 %v151, %v149
    %v156 = vpack.c.b16 %v152, %v150
    %vm161 = vcmask 261120
    %v163 = vsel %vm161, %v130, 0
    %165 = vmatpush.bf16.msra.mxu0 0
    %166 = vmatpush.bf16.msra.mxu0 0
    %167 = vmatpush.bf16.msra.mxu0 0
    %168 = vmatpush.bf16.msra.mxu0 0
    %169 = vmatpush.bf16.msra.mxu0 0
    %170 = vmatpush.bf16.msra.mxu0 0
    %171 = vmatpush.bf16.msra.mxu0 %v155
    %172 = vmatpush.bf16.msra.mxu0 %v153
    %173 = vmatmul.bf16.gmra.mxu0 %v163
    %v174 = vpop.f32.mrf.mxu0
    %v175 = vadd.f32 %v137, %v174
    %v176 = vpop.f32.mrf.mxu0
    %177 = vdwg.mxu0
    %178 = vmatpush.bf16.msra.mxu0 0
    %179 = vmatpush.bf16.msra.mxu0 0
    %180 = vmatpush.bf16.msra.mxu0 0
    %181 = vmatpush.bf16.msra.mxu0 0
    %182 = vmatpush.bf16.msra.mxu0 0
    %183 = vmatpush.bf16.msra.mxu0 0
    %184 = vmatpush.bf16.msra.mxu0 %v156
    %185 = vmatpush.bf16.msra.mxu0 %v154
    %186 = vmatmul.bf16.gmra.mxu0 %v163
    %v187 = vpop.f32.mrf.mxu0
    %v188 = vadd.f32 %v138, %v187
    %v189 = vpop.f32.mrf.mxu0
    %190 = vdwg.mxu0
    %v191 = vmax.f32 %v175, 0.0
    %v192 = vmax.f32 %v188, 0.0
    %v193 = vpack.c.bf16 %v191, %v191
    %v194 = vpack.c.bf16 %v192, %v192
    %v195 = vld [vmem:[#allocation8] sm:$0xff]
    %v196 = vld [vmem:[#allocation8 + $0x8] sm:$0xff]
    %v197 = vld [vmem:[#allocation8 + $0x10] sm:$0xff]
    %v198 = vld [vmem:[#allocation8 + $0x18] sm:$0xff]
    %v199 = vld [vmem:[#allocation8 + $0x20] sm:$0xff]
    %v200 = vld [vmem:[#allocation8 + $0x28] sm:$0xff]
    %v201 = vld [vmem:[#allocation8 + $0x30] sm:$0xff]
    %v202 = vld [vmem:[#allocation8 + $0x38] sm:$0xff]
    %v203 = vld [vmem:[#allocation8 + $0x40] sm:$0xff]
    %v204 = vld [vmem:[#allocation8 + $0x48] sm:$0xff]
    %v205 = vld [vmem:[#allocation8 + $0x50] sm:$0xff]
    %v206 = vld [vmem:[#allocation8 + $0x58] sm:$0xff]
    %v207 = vld [vmem:[#allocation8 + $0x60] sm:$0xff]
    %v208 = vld [vmem:[#allocation8 + $0x68] sm:$0xff]
    %v209 = vld [vmem:[#allocation8 + $0x70] sm:$0xff]
    %v210 = vld [vmem:[#allocation8 + $0x78] sm:$0xff]
    %v211 = vld [vmem:[#allocation8 + $0x80] sm:$0xff]
    %v212 = vld [vmem:[#allocation8 + $0x88] sm:$0xff]
    %v213 = vld [vmem:[#allocation8 + $0x90] sm:$0xff]
    %v214 = vld [vmem:[#allocation8 + $0x98] sm:$0xff]
    %v215 = vld [vmem:[#allocation8 + $0xa0] sm:$0xff]
    %v216 = vld [vmem:[#allocation8 + $0xa8] sm:$0xff]
    %v217 = vld [vmem:[#allocation8 + $0xb0] sm:$0xff]
    %v218 = vld [vmem:[#allocation8 + $0xb8] sm:$0xff]
    %v219 = vld [vmem:[#allocation8 + $0xc0] sm:$0xff]
    %v220 = vld [vmem:[#allocation8 + $0xc8] sm:$0xff]
    %v221 = vld [vmem:[#allocation8 + $0xd0] sm:$0xff]
    %v222 = vld [vmem:[#allocation8 + $0xd8] sm:$0xff]
    %v223 = vld [vmem:[#allocation8 + $0xe0] sm:$0xff]
    %v224 = vld [vmem:[#allocation8 + $0xe8] sm:$0xff]
    %v225 = vld [vmem:[#allocation8 + $0xf0] sm:$0xff]
    %v226 = vld [vmem:[#allocation8 + $0xf8] sm:$0xff]
    %v227 = vld [vmem:[#allocation8 + $0x100] sm:$0xff]
    %v228 = vld [vmem:[#allocation8 + $0x108] sm:$0xff]
    %v229 = vld [vmem:[#allocation8 + $0x110] sm:$0xff]
    %v230 = vld [vmem:[#allocation8 + $0x118] sm:$0xff]
    %v231 = vld [vmem:[#allocation8 + $0x120] sm:$0xff]
    %v232 = vld [vmem:[#allocation8 + $0x128] sm:$0xff]
    %v233 = vld [vmem:[#allocation8 + $0x130] sm:$0xff]
    %v234 = vld [vmem:[#allocation8 + $0x138] sm:$0xff]
    %v235 = vld [vmem:[#allocation8 + $0x140] sm:$0xff]
    %v236 = vld [vmem:[#allocation8 + $0x148] sm:$0xff]
    %v237 = vld [vmem:[#allocation8 + $0x150] sm:$0xff]
    %v238 = vld [vmem:[#allocation8 + $0x158] sm:$0xff]
    %v239 = vld [vmem:[#allocation8 + $0x160] sm:$0xff]
    %v240 = vld [vmem:[#allocation8 + $0x168] sm:$0xff]
    %v241 = vld [vmem:[#allocation8 + $0x170] sm:$0xff]
    %v242 = vld [vmem:[#allocation8 + $0x178] sm:$0xff]
    %v243 = vld [vmem:[#allocation8 + $0x180] sm:$0xff]
    %v244 = vld [vmem:[#allocation8 + $0x188] sm:$0xff]
    %v245 = vld [vmem:[#allocation8 + $0x190] sm:$0xff]
    %v246 = vld [vmem:[#allocation8 + $0x198] sm:$0xff]
    %v247 = vld [vmem:[#allocation8 + $0x1a0] sm:$0xff]
    %v248 = vld [vmem:[#allocation8 + $0x1a8] sm:$0xff]
    %v249 = vld [vmem:[#allocation8 + $0x1b0] sm:$0xff]
    %v250 = vld [vmem:[#allocation8 + $0x1b8] sm:$0xff]
    %v251 = vld [vmem:[#allocation8 + $0x1c0] sm:$0xff]
    %v252 = vld [vmem:[#allocation8 + $0x1c8] sm:$0xff]
    %v253 = vld [vmem:[#allocation8 + $0x1d0] sm:$0xff]
    %v254 = vld [vmem:[#allocation8 + $0x1d8] sm:$0xff]
    %v255 = vld [vmem:[#allocation8 + $0x1e0] sm:$0xff]
    %v256 = vld [vmem:[#allocation8 + $0x1e8] sm:$0xff]
    %v257 = vld [vmem:[#allocation8 + $0x1f0] sm:$0xff]
    %v258 = vld [vmem:[#allocation8 + $0x1f8] sm:$0xff]
    %v259 = vld [vmem:[#allocation10] sm:$0xf]
    %v261 = vperm.slane %v259, 0
    %v262 = vperm.slane %v259, 1
    %v263 = vperm.slane %v259, 2
    %v264 = vperm.slane %v259, 3
    %v333 = vunpack.c.l.b16 %v195
    %v334 = vunpack.c.h.b16 %v195
    %v335 = vunpack.c.l.b16 %v196
    %v336 = vunpack.c.h.b16 %v196
    %v337 = vunpack.c.l.b16 %v197
    %v338 = vunpack.c.h.b16 %v197
    %v339 = vunpack.c.l.b16 %v198
    %v340 = vunpack.c.h.b16 %v198
    %v341 = vunpack.c.l.b16 %v199
    %v342 = vunpack.c.h.b16 %v199
    %v343 = vunpack.c.l.b16 %v200
    %v344 = vunpack.c.h.b16 %v200
    %v345 = vunpack.c.l.b16 %v201
    %v346 = vunpack.c.h.b16 %v201
    %v347 = vunpack.c.l.b16 %v202
    %v348 = vunpack.c.h.b16 %v202
    %v349 = vunpack.c.l.b16 %v203
    %v350 = vunpack.c.h.b16 %v203
    %v351 = vunpack.c.l.b16 %v204
    %v352 = vunpack.c.h.b16 %v204
    %v353 = vunpack.c.l.b16 %v205
    %v354 = vunpack.c.h.b16 %v205
    %v355 = vunpack.c.l.b16 %v206
    %v356 = vunpack.c.h.b16 %v206
    %v357 = vunpack.c.l.b16 %v207
    %v358 = vunpack.c.h.b16 %v207
    %v359 = vunpack.c.l.b16 %v208
    %v360 = vunpack.c.h.b16 %v208
    %v361 = vunpack.c.l.b16 %v209
    %v362 = vunpack.c.h.b16 %v209
    %v363 = vunpack.c.l.b16 %v210
    %v364 = vunpack.c.h.b16 %v210
    %v365 = vunpack.c.l.b16 %v211
    %v366 = vunpack.c.h.b16 %v211
    %v367 = vunpack.c.l.b16 %v212
    %v368 = vunpack.c.h.b16 %v212
    %v369 = vunpack.c.l.b16 %v213
    %v370 = vunpack.c.h.b16 %v213
    %v371 = vunpack.c.l.b16 %v214
    %v372 = vunpack.c.h.b16 %v214
    %v373 = vunpack.c.l.b16 %v215
    %v374 = vunpack.c.h.b16 %v215
    %v375 = vunpack.c.l.b16 %v216
    %v376 = vunpack.c.h.b16 %v216
    %v377 = vunpack.c.l.b16 %v217
    %v378 = vunpack.c.h.b16 %v217
    %v379 = vunpack.c.l.b16 %v218
    %v380 = vunpack.c.h.b16 %v218
    %v381 = vunpack.c.l.b16 %v219
    %v382 = vunpack.c.h.b16 %v219
    %v383 = vunpack.c.l.b16 %v220
    %v384 = vunpack.c.h.b16 %v220
    %v385 = vunpack.c.l.b16 %v221
    %v386 = vunpack.c.h.b16 %v221
    %v387 = vunpack.c.l.b16 %v222
    %v388 = vunpack.c.h.b16 %v222
    %v389 = vunpack.c.l.b16 %v223
    %v390 = vunpack.c.h.b16 %v223
    %v391 = vunpack.c.l.b16 %v224
    %v392 = vunpack.c.h.b16 %v224
    %v393 = vunpack.c.l.b16 %v225
    %v394 = vunpack.c.h.b16 %v225
    %v395 = vunpack.c.l.b16 %v226
    %v396 = vunpack.c.h.b16 %v226
    %v397 = vunpack.c.l.b16 %v227
    %v398 = vunpack.c.h.b16 %v227
    %v399 = vunpack.c.l.b16 %v228
    %v400 = vunpack.c.h.b16 %v228
    %v401 = vunpack.c.l.b16 %v229
    %v402 = vunpack.c.h.b16 %v229
    %v403 = vunpack.c.l.b16 %v230
    %v404 = vunpack.c.h.b16 %v230
    %v405 = vunpack.c.l.b16 %v231
    %v406 = vunpack.c.h.b16 %v231
    %v407 = vunpack.c.l.b16 %v232
    %v408 = vunpack.c.h.b16 %v232
    %v409 = vunpack.c.l.b16 %v233
    %v410 = vunpack.c.h.b16 %v233
    %v411 = vunpack.c.l.b16 %v234
    %v412 = vunpack.c.h.b16 %v234
    %v413 = vunpack.c.l.b16 %v235
    %v414 = vunpack.c.h.b16 %v235
    %v415 = vunpack.c.l.b16 %v236
    %v416 = vunpack.c.h.b16 %v236
    %v417 = vunpack.c.l.b16 %v237
    %v418 = vunpack.c.h.b16 %v237
    %v419 = vunpack.c.l.b16 %v238
    %v420 = vunpack.c.h.b16 %v238
    %v421 = vunpack.c.l.b16 %v239
    %v422 = vunpack.c.h.b16 %v239
    %v423 = vunpack.c.l.b16 %v240
    %v424 = vunpack.c.h.b16 %v240
    %v425 = vunpack.c.l.b16 %v241
    %v426 = vunpack.c.h.b16 %v241
    %v427 = vunpack.c.l.b16 %v242
    %v428 = vunpack.c.h.b16 %v242
    %v429 = vunpack.c.l.b16 %v243
    %v430 = vunpack.c.h.b16 %v243
    %v431 = vunpack.c.l.b16 %v244
    %v432 = vunpack.c.h.b16 %v244
    %v433 = vunpack.c.l.b16 %v245
    %v434 = vunpack.c.h.b16 %v245
    %v435 = vunpack.c.l.b16 %v246
    %v436 = vunpack.c.h.b16 %v246
    %v437 = vunpack.c.l.b16 %v247
    %v438 = vunpack.c.h.b16 %v247
    %v439 = vunpack.c.l.b16 %v248
    %v440 = vunpack.c.h.b16 %v248
    %v441 = vunpack.c.l.b16 %v249
    %v442 = vunpack.c.h.b16 %v249
    %v443 = vunpack.c.l.b16 %v250
    %v444 = vunpack.c.h.b16 %v250
    %v445 = vunpack.c.l.b16 %v251
    %v446 = vunpack.c.h.b16 %v251
    %v447 = vunpack.c.l.b16 %v252
    %v448 = vunpack.c.h.b16 %v252
    %v449 = vunpack.c.l.b16 %v253
    %v450 = vunpack.c.h.b16 %v253
    %v451 = vunpack.c.l.b16 %v254
    %v452 = vunpack.c.h.b16 %v254
    %v453 = vunpack.c.l.b16 %v255
    %v454 = vunpack.c.h.b16 %v255
    %v455 = vunpack.c.l.b16 %v256
    %v456 = vunpack.c.h.b16 %v256
    %v457 = vunpack.c.l.b16 %v257
    %v458 = vunpack.c.h.b16 %v257
    %v459 = vunpack.c.l.b16 %v258
    %v460 = vunpack.c.h.b16 %v258
    %v461 = vpack.c.b16 %v337, %v333
    %v462 = vpack.c.b16 %v338, %v334
    %v463 = vpack.c.b16 %v339, %v335
    %v464 = vpack.c.b16 %v340, %v336
    %v465 = vpack.c.b16 %v345, %v341
    %v466 = vpack.c.b16 %v346, %v342
    %v467 = vpack.c.b16 %v347, %v343
    %v468 = vpack.c.b16 %v348, %v344
    %v469 = vpack.c.b16 %v353, %v349
    %v470 = vpack.c.b16 %v354, %v350
    %v471 = vpack.c.b16 %v355, %v351
    %v472 = vpack.c.b16 %v356, %v352
    %v473 = vpack.c.b16 %v361, %v357
    %v474 = vpack.c.b16 %v362, %v358
    %v475 = vpack.c.b16 %v363, %v359
    %v476 = vpack.c.b16 %v364, %v360
    %v477 = vpack.c.b16 %v369, %v365
    %v478 = vpack.c.b16 %v370, %v366
    %v479 = vpack.c.b16 %v371, %v367
    %v480 = vpack.c.b16 %v372, %v368
    %v481 = vpack.c.b16 %v377, %v373
    %v482 = vpack.c.b16 %v378, %v374
    %v483 = vpack.c.b16 %v379, %v375
    %v484 = vpack.c.b16 %v380, %v376
    %v485 = vpack.c.b16 %v385, %v381
    %v486 = vpack.c.b16 %v386, %v382
    %v487 = vpack.c.b16 %v387, %v383
    %v488 = vpack.c.b16 %v388, %v384
    %v489 = vpack.c.b16 %v393, %v389
    %v490 = vpack.c.b16 %v394, %v390
    %v491 = vpack.c.b16 %v395, %v391
    %v492 = vpack.c.b16 %v396, %v392
    %v493 = vpack.c.b16 %v401, %v397
    %v494 = vpack.c.b16 %v402, %v398
    %v495 = vpack.c.b16 %v403, %v399
    %v496 = vpack.c.b16 %v404, %v400
    %v497 = vpack.c.b16 %v409, %v405
    %v498 = vpack.c.b16 %v410, %v406
    %v499 = vpack.c.b16 %v411, %v407
    %v500 = vpack.c.b16 %v412, %v408
    %v501 = vpack.c.b16 %v417, %v413
    %v502 = vpack.c.b16 %v418, %v414
    %v503 = vpack.c.b16 %v419, %v415
    %v504 = vpack.c.b16 %v420, %v416
    %v505 = vpack.c.b16 %v425, %v421
    %v506 = vpack.c.b16 %v426, %v422
    %v507 = vpack.c.b16 %v427, %v423
    %v508 = vpack.c.b16 %v428, %v424
    %v509 = vpack.c.b16 %v433, %v429
    %v510 = vpack.c.b16 %v434, %v430
    %v511 = vpack.c.b16 %v435, %v431
    %v512 = vpack.c.b16 %v436, %v432
    %v513 = vpack.c.b16 %v441, %v437
    %v514 = vpack.c.b16 %v442, %v438
    %v515 = vpack.c.b16 %v443, %v439
    %v516 = vpack.c.b16 %v444, %v440
    %v517 = vpack.c.b16 %v449, %v445
    %v518 = vpack.c.b16 %v450, %v446
    %v519 = vpack.c.b16 %v451, %v447
    %v520 = vpack.c.b16 %v452, %v448
    %v521 = vpack.c.b16 %v457, %v453
    %v522 = vpack.c.b16 %v458, %v454
    %v523 = vpack.c.b16 %v459, %v455
    %v524 = vpack.c.b16 %v460, %v456
    %589 = vmatpush.bf16.msra.mxu0 %v489
    %590 = vmatpush.bf16.msra.mxu0 %v485
    %591 = vmatpush.bf16.msra.mxu0 %v481
    %592 = vmatpush.bf16.msra.mxu0 %v477
    %593 = vmatpush.bf16.msra.mxu0 %v473
    %594 = vmatpush.bf16.msra.mxu0 %v469
    %595 = vmatpush.bf16.msra.mxu0 %v465
    %596 = vmatpush.bf16.msra.mxu0 %v461
    %597 = vmatmul.bf16.gmra.mxu0 %v193
    %v598 = vpop.f32.mrf.mxu0
    %v599 = vadd.f32 %v261, %v598
    %v600 = vpop.f32.mrf.mxu0
    %601 = vdwg.mxu0
    %602 = vmatpush.bf16.msra.mxu0 %v521
    %603 = vmatpush.bf16.msra.mxu0 %v517
    %604 = vmatpush.bf16.msra.mxu0 %v513
    %605 = vmatpush.bf16.msra.mxu0 %v509
    %606 = vmatpush.bf16.msra.mxu0 %v505
    %607 = vmatpush.bf16.msra.mxu0 %v501
    %608 = vmatpush.bf16.msra.mxu0 %v497
    %609 = vmatpush.bf16.msra.mxu0 %v493
    %610 = vmatmul.bf16.gmra.mxu0 %v194
    %v611 = vpop.f32.mrf.mxu0
    %v612 = vadd.f32 %v599, %v611
    %v613 = vpop.f32.mrf.mxu0
    %614 = vdwg.mxu0
    %615 = vmatpush.bf16.msra.mxu0 %v490
    %616 = vmatpush.bf16.msra.mxu0 %v486
    %617 = vmatpush.bf16.msra.mxu0 %v482
    %618 = vmatpush.bf16.msra.mxu0 %v478
    %619 = vmatpush.bf16.msra.mxu0 %v474
    %620 = vmatpush.bf16.msra.mxu0 %v470
    %621 = vmatpush.bf16.msra.mxu0 %v466
    %622 = vmatpush.bf16.msra.mxu0 %v462
    %623 = vmatmul.bf16.gmra.mxu0 %v193
    %v624 = vpop.f32.mrf.mxu0
    %v625 = vadd.f32 %v262, %v624
    %v626 = vpop.f32.mrf.mxu0
    %627 = vdwg.mxu0
    %628 = vmatpush.bf16.msra.mxu0 %v522
    %629 = vmatpush.bf16.msra.mxu0 %v518
    %630 = vmatpush.bf16.msra.mxu0 %v514
    %631 = vmatpush.bf16.msra.mxu0 %v510
    %632 = vmatpush.bf16.msra.mxu0 %v506
    %633 = vmatpush.bf16.msra.mxu0 %v502
    %634 = vmatpush.bf16.msra.mxu0 %v498
    %635 = vmatpush.bf16.msra.mxu0 %v494
    %636 = vmatmul.bf16.gmra.mxu0 %v194
    %v637 = vpop.f32.mrf.mxu0
    %v638 = vadd.f32 %v625, %v637
    %v639 = vpop.f32.mrf.mxu0
    %640 = vdwg.mxu0
    %641 = vmatpush.bf16.msra.mxu0 %v491
    %642 = vmatpush.bf16.msra.mxu0 %v487
    %643 = vmatpush.bf16.msra.mxu0 %v483
    %644 = vmatpush.bf16.msra.mxu0 %v479
    %645 = vmatpush.bf16.msra.mxu0 %v475
    %646 = vmatpush.bf16.msra.mxu0 %v471
    %647 = vmatpush.bf16.msra.mxu0 %v467
    %648 = vmatpush.bf16.msra.mxu0 %v463
    %649 = vmatmul.bf16.gmra.mxu0 %v193
    %v650 = vpop.f32.mrf.mxu0
    %v651 = vadd.f32 %v263, %v650
    %v652 = vpop.f32.mrf.mxu0
    %653 = vdwg.mxu0
    %654 = vmatpush.bf16.msra.mxu0 %v523
    %655 = vmatpush.bf16.msra.mxu0 %v519
    %656 = vmatpush.bf16.msra.mxu0 %v515
    %657 = vmatpush.bf16.msra.mxu0 %v511
    %658 = vmatpush.bf16.msra.mxu0 %v507
    %659 = vmatpush.bf16.msra.mxu0 %v503
    %660 = vmatpush.bf16.msra.mxu0 %v499
    %661 = vmatpush.bf16.msra.mxu0 %v495
    %662 = vmatmul.bf16.gmra.mxu0 %v194
    %v663 = vpop.f32.mrf.mxu0
    %v664 = vadd.f32 %v651, %v663
    %v665 = vpop.f32.mrf.mxu0
    %666 = vdwg.mxu0
    %667 = vmatpush.bf16.msra.mxu0 %v492
    %668 = vmatpush.bf16.msra.mxu0 %v488
    %669 = vmatpush.bf16.msra.mxu0 %v484
    %670 = vmatpush.bf16.msra.mxu0 %v480
    %671 = vmatpush.bf16.msra.mxu0 %v476
    %672 = vmatpush.bf16.msra.mxu0 %v472
    %673 = vmatpush.bf16.msra.mxu0 %v468
    %674 = vmatpush.bf16.msra.mxu0 %v464
    %675 = vmatmul.bf16.gmra.mxu0 %v193
    %v676 = vpop.f32.mrf.mxu0
    %v677 = vadd.f32 %v264, %v676
    %v678 = vpop.f32.mrf.mxu0
    %679 = vdwg.mxu0
    %680 = vmatpush.bf16.msra.mxu0 %v524
    %681 = vmatpush.bf16.msra.mxu0 %v520
    %682 = vmatpush.bf16.msra.mxu0 %v516
    %683 = vmatpush.bf16.msra.mxu0 %v512
    %684 = vmatpush.bf16.msra.mxu0 %v508
    %685 = vmatpush.bf16.msra.mxu0 %v504
    %686 = vmatpush.bf16.msra.mxu0 %v500
    %687 = vmatpush.bf16.msra.mxu0 %v496
    %688 = vmatmul.bf16.gmra.mxu0 %v194
    %v689 = vpop.f32.mrf.mxu0
    %v690 = vadd.f32 %v677, %v689
    %v691 = vpop.f32.mrf.mxu0
    %692 = vdwg.mxu0
    %v693 = vmax.f32 %v612, 0.0
    %v694 = vmax.f32 %v638, 0.0
    %v695 = vmax.f32 %v664, 0.0
    %v696 = vmax.f32 %v690, 0.0
    %v697 = vpack.c.bf16 %v693, %v693
    %v698 = vpack.c.bf16 %v694, %v694
    %v699 = vpack.c.bf16 %v695, %v695
    %v700 = vpack.c.bf16 %v696, %v696
    %v701 = vld [vmem:[#allocation11] sm:$0xff]
    %v702 = vld [vmem:[#allocation11 + $0x8] sm:$0xff]
    %v703 = vld [vmem:[#allocation11 + $0x10] sm:$0xff]
    %v704 = vld [vmem:[#allocation11 + $0x18] sm:$0xff]
    %v705 = vld [vmem:[#allocation11 + $0x20] sm:$0xff]
    %v706 = vld [vmem:[#allocation11 + $0x28] sm:$0xff]
    %v707 = vld [vmem:[#allocation11 + $0x30] sm:$0xff]
    %v708 = vld [vmem:[#allocation11 + $0x38] sm:$0xff]
    %v709 = vld [vmem:[#allocation11 + $0x40] sm:$0xff]
    %v710 = vld [vmem:[#allocation11 + $0x48] sm:$0xf]
    %v711 = vld [vmem:[#allocation11 + $0x4c] sm:$0xff]
    %v712 = vld [vmem:[#allocation11 + $0x54] sm:$0xff]
    %v713 = vld [vmem:[#allocation11 + $0x5c] sm:$0xff]
    %v714 = vld [vmem:[#allocation11 + $0x64] sm:$0xff]
    %v715 = vld [vmem:[#allocation11 + $0x6c] sm:$0xff]
    %v716 = vld [vmem:[#allocation11 + $0x74] sm:$0xff]
    %v717 = vld [vmem:[#allocation11 + $0x7c] sm:$0xff]
    %v718 = vld [vmem:[#allocation11 + $0x84] sm:$0xff]
    %v719 = vld [vmem:[#allocation11 + $0x8c] sm:$0xff]
    %v720 = vld [vmem:[#allocation11 + $0x94] sm:$0xf]
    %v721 = vld [vmem:[#allocation11 + $0x98] sm:$0xff]
    %v722 = vld [vmem:[#allocation11 + $0xa0] sm:$0xff]
    %v723 = vld [vmem:[#allocation11 + $0xa8] sm:$0xff]
    %v724 = vld [vmem:[#allocation11 + $0xb0] sm:$0xff]
    %v725 = vld [vmem:[#allocation11 + $0xb8] sm:$0xff]
    %v726 = vld [vmem:[#allocation11 + $0xc0] sm:$0xff]
    %v727 = vld [vmem:[#allocation11 + $0xc8] sm:$0xff]
    %v728 = vld [vmem:[#allocation11 + $0xd0] sm:$0xff]
    %v729 = vld [vmem:[#allocation11 + $0xd8] sm:$0xff]
    %v730 = vld [vmem:[#allocation11 + $0xe0] sm:$0xf]
    %v731 = vld [vmem:[#allocation11 + $0xe4] sm:$0xff]
    %v732 = vld [vmem:[#allocation11 + $0xec] sm:$0xff]
    %v733 = vld [vmem:[#allocation11 + $0xf4] sm:$0xff]
    %v734 = vld [vmem:[#allocation11 + $0xfc] sm:$0xff]
    %v735 = vld [vmem:[#allocation11 + $0x104] sm:$0xff]
    %v736 = vld [vmem:[#allocation11 + $0x10c] sm:$0xff]
    %v737 = vld [vmem:[#allocation11 + $0x114] sm:$0xff]
    %v738 = vld [vmem:[#allocation11 + $0x11c] sm:$0xff]
    %v739 = vld [vmem:[#allocation11 + $0x124] sm:$0xff]
    %v740 = vld [vmem:[#allocation11 + $0x12c] sm:$0xf]
    %v741 = vld [vmem:[#allocation11 + $0x130] sm:$0xff]
    %v742 = vld [vmem:[#allocation11 + $0x138] sm:$0xff]
    %v743 = vld [vmem:[#allocation11 + $0x140] sm:$0xff]
    %v744 = vld [vmem:[#allocation11 + $0x148] sm:$0xff]
    %v745 = vld [vmem:[#allocation11 + $0x150] sm:$0xff]
    %v746 = vld [vmem:[#allocation11 + $0x158] sm:$0xff]
    %v747 = vld [vmem:[#allocation11 + $0x160] sm:$0xff]
    %v748 = vld [vmem:[#allocation11 + $0x168] sm:$0xff]
    %v749 = vld [vmem:[#allocation11 + $0x170] sm:$0xff]
    %v750 = vld [vmem:[#allocation11 + $0x178] sm:$0xf]
    %v751 = vld [vmem:[#allocation11 + $0x17c] sm:$0xff]
    %v752 = vld [vmem:[#allocation11 + $0x184] sm:$0xff]
    %v753 = vld [vmem:[#allocation11 + $0x18c] sm:$0xff]
    %v754 = vld [vmem:[#allocation11 + $0x194] sm:$0xff]
    %v755 = vld [vmem:[#allocation11 + $0x19c] sm:$0xff]
    %v756 = vld [vmem:[#allocation11 + $0x1a4] sm:$0xff]
    %v757 = vld [vmem:[#allocation11 + $0x1ac] sm:$0xff]
    %v758 = vld [vmem:[#allocation11 + $0x1b4] sm:$0xff]
    %v759 = vld [vmem:[#allocation11 + $0x1bc] sm:$0xff]
    %v760 = vld [vmem:[#allocation11 + $0x1c4] sm:$0xf]
    %v761 = vld [vmem:[#allocation11 + $0x1c8] sm:$0xff]
    %v762 = vld [vmem:[#allocation11 + $0x1d0] sm:$0xff]
    %v763 = vld [vmem:[#allocation11 + $0x1d8] sm:$0xff]
    %v764 = vld [vmem:[#allocation11 + $0x1e0] sm:$0xff]
    %v765 = vld [vmem:[#allocation11 + $0x1e8] sm:$0xff]
    %v766 = vld [vmem:[#allocation11 + $0x1f0] sm:$0xff]
    %v767 = vld [vmem:[#allocation11 + $0x1f8] sm:$0xff]
    %v768 = vld [vmem:[#allocation11 + $0x200] sm:$0xff]
    %v769 = vld [vmem:[#allocation11 + $0x208] sm:$0xff]
    %v770 = vld [vmem:[#allocation11 + $0x210] sm:$0xf]
    %v771 = vld [vmem:[#allocation11 + $0x214] sm:$0xff]
    %v772 = vld [vmem:[#allocation11 + $0x21c] sm:$0xff]
    %v773 = vld [vmem:[#allocation11 + $0x224] sm:$0xff]
    %v774 = vld [vmem:[#allocation11 + $0x22c] sm:$0xff]
    %v775 = vld [vmem:[#allocation11 + $0x234] sm:$0xff]
    %v776 = vld [vmem:[#allocation11 + $0x23c] sm:$0xff]
    %v777 = vld [vmem:[#allocation11 + $0x244] sm:$0xff]
    %v778 = vld [vmem:[#allocation11 + $0x24c] sm:$0xff]
    %v779 = vld [vmem:[#allocation11 + $0x254] sm:$0xff]
    %v780 = vld [vmem:[#allocation11 + $0x25c] sm:$0xf]
    %v781 = vld [vmem:[#allocation11 + $0x260] sm:$0xff]
    %v782 = vld [vmem:[#allocation11 + $0x268] sm:$0xff]
    %v783 = vld [vmem:[#allocation11 + $0x270] sm:$0xff]
    %v784 = vld [vmem:[#allocation11 + $0x278] sm:$0xff]
    %v785 = vld [vmem:[#allocation11 + $0x280] sm:$0xff]
    %v786 = vld [vmem:[#allocation11 + $0x288] sm:$0xff]
    %v787 = vld [vmem:[#allocation11 + $0x290] sm:$0xff]
    %v788 = vld [vmem:[#allocation11 + $0x298] sm:$0xff]
    %v789 = vld [vmem:[#allocation11 + $0x2a0] sm:$0xff]
    %v790 = vld [vmem:[#allocation11 + $0x2a8] sm:$0xf]
    %v791 = vld [vmem:[#allocation11 + $0x2ac] sm:$0xff]
    %v792 = vld [vmem:[#allocation11 + $0x2b4] sm:$0xff]
    %v793 = vld [vmem:[#allocation11 + $0x2bc] sm:$0xff]
    %v794 = vld [vmem:[#allocation11 + $0x2c4] sm:$0xff]
    %v795 = vld [vmem:[#allocation11 + $0x2cc] sm:$0xff]
    %v796 = vld [vmem:[#allocation11 + $0x2d4] sm:$0xff]
    %v797 = vld [vmem:[#allocation11 + $0x2dc] sm:$0xff]
    %v798 = vld [vmem:[#allocation11 + $0x2e4] sm:$0xff]
    %v799 = vld [vmem:[#allocation11 + $0x2ec] sm:$0xff]
    %v800 = vld [vmem:[#allocation11 + $0x2f4] sm:$0xf]
    %v801 = vld [vmem:[#allocation11 + $0x2f8] sm:$0xff]
    %v802 = vld [vmem:[#allocation11 + $0x300] sm:$0xff]
    %v803 = vld [vmem:[#allocation11 + $0x308] sm:$0xff]
    %v804 = vld [vmem:[#allocation11 + $0x310] sm:$0xff]
    %v805 = vld [vmem:[#allocation11 + $0x318] sm:$0xff]
    %v806 = vld [vmem:[#allocation11 + $0x320] sm:$0xff]
    %v807 = vld [vmem:[#allocation11 + $0x328] sm:$0xff]
    %v808 = vld [vmem:[#allocation11 + $0x330] sm:$0xff]
    %v809 = vld [vmem:[#allocation11 + $0x338] sm:$0xff]
    %v810 = vld [vmem:[#allocation11 + $0x340] sm:$0xf]
    %v811 = vld [vmem:[#allocation11 + $0x344] sm:$0xff]
    %v812 = vld [vmem:[#allocation11 + $0x34c] sm:$0xff]
    %v813 = vld [vmem:[#allocation11 + $0x354] sm:$0xff]
    %v814 = vld [vmem:[#allocation11 + $0x35c] sm:$0xff]
    %v815 = vld [vmem:[#allocation11 + $0x364] sm:$0xff]
    %v816 = vld [vmem:[#allocation11 + $0x36c] sm:$0xff]
    %v817 = vld [vmem:[#allocation11 + $0x374] sm:$0xff]
    %v818 = vld [vmem:[#allocation11 + $0x37c] sm:$0xff]
    %v819 = vld [vmem:[#allocation11 + $0x384] sm:$0xff]
    %v820 = vld [vmem:[#allocation11 + $0x38c] sm:$0xf]
    %v821 = vld [vmem:[#allocation11 + $0x390] sm:$0xff]
    %v822 = vld [vmem:[#allocation11 + $0x398] sm:$0xff]
    %v823 = vld [vmem:[#allocation11 + $0x3a0] sm:$0xff]
    %v824 = vld [vmem:[#allocation11 + $0x3a8] sm:$0xff]
    %v825 = vld [vmem:[#allocation11 + $0x3b0] sm:$0xff]
    %v826 = vld [vmem:[#allocation11 + $0x3b8] sm:$0xff]
    %v827 = vld [vmem:[#allocation11 + $0x3c0] sm:$0xff]
    %v828 = vld [vmem:[#allocation11 + $0x3c8] sm:$0xff]
    %v829 = vld [vmem:[#allocation11 + $0x3d0] sm:$0xff]
    %v830 = vld [vmem:[#allocation11 + $0x3d8] sm:$0xf]
    %v831 = vld [vmem:[#allocation11 + $0x3dc] sm:$0xff]
    %v832 = vld [vmem:[#allocation11 + $0x3e4] sm:$0xff]
    %v833 = vld [vmem:[#allocation11 + $0x3ec] sm:$0xff]
    %v834 = vld [vmem:[#allocation11 + $0x3f4] sm:$0xff]
    %v835 = vld [vmem:[#allocation11 + $0x3fc] sm:$0xff]
    %v836 = vld [vmem:[#allocation11 + $0x404] sm:$0xff]
    %v837 = vld [vmem:[#allocation11 + $0x40c] sm:$0xff]
    %v838 = vld [vmem:[#allocation11 + $0x414] sm:$0xff]
    %v839 = vld [vmem:[#allocation11 + $0x41c] sm:$0xff]
    %v840 = vld [vmem:[#allocation11 + $0x424] sm:$0xf]
    %v841 = vld [vmem:[#allocation11 + $0x428] sm:$0xff]
    %v842 = vld [vmem:[#allocation11 + $0x430] sm:$0xff]
    %v843 = vld [vmem:[#allocation11 + $0x438] sm:$0xff]
    %v844 = vld [vmem:[#allocation11 + $0x440] sm:$0xff]
    %v845 = vld [vmem:[#allocation11 + $0x448] sm:$0xff]
    %v846 = vld [vmem:[#allocation11 + $0x450] sm:$0xff]
    %v847 = vld [vmem:[#allocation11 + $0x458] sm:$0xff]
    %v848 = vld [vmem:[#allocation11 + $0x460] sm:$0xff]
    %v849 = vld [vmem:[#allocation11 + $0x468] sm:$0xff]
    %v850 = vld [vmem:[#allocation11 + $0x470] sm:$0xf]
    %v851 = vld [vmem:[#allocation11 + $0x474] sm:$0xff]
    %v852 = vld [vmem:[#allocation11 + $0x47c] sm:$0xff]
    %v853 = vld [vmem:[#allocation11 + $0x484] sm:$0xff]
    %v854 = vld [vmem:[#allocation11 + $0x48c] sm:$0xff]
    %v855 = vld [vmem:[#allocation11 + $0x494] sm:$0xff]
    %v856 = vld [vmem:[#allocation11 + $0x49c] sm:$0xff]
    %v857 = vld [vmem:[#allocation11 + $0x4a4] sm:$0xff]
    %v858 = vld [vmem:[#allocation11 + $0x4ac] sm:$0xff]
    %v859 = vld [vmem:[#allocation11 + $0x4b4] sm:$0xff]
    %v860 = vld [vmem:[#allocation11 + $0x4bc] sm:$0xf]
    %v861 = vld [vmem:[#allocation11 + $0x4c0] sm:$0xff]
    %v862 = vld [vmem:[#allocation11 + $0x4c8] sm:$0xff]
    %v863 = vld [vmem:[#allocation11 + $0x4d0] sm:$0xff]
    %v864 = vld [vmem:[#allocation11 + $0x4d8] sm:$0xff]
    %v865 = vld [vmem:[#allocation11 + $0x4e0] sm:$0xff]
    %v866 = vld [vmem:[#allocation11 + $0x4e8] sm:$0xff]
    %v867 = vld [vmem:[#allocation11 + $0x4f0] sm:$0xff]
    %v868 = vld [vmem:[#allocation11 + $0x4f8] sm:$0xff]
    %v869 = vld [vmem:[#allocation11 + $0x500] sm:$0xff]
    %v870 = vld [vmem:[#allocation11 + $0x508] sm:$0xf]
    %v871 = vld [vmem:[#allocation11 + $0x50c] sm:$0xff]
    %v872 = vld [vmem:[#allocation11 + $0x514] sm:$0xff]
    %v873 = vld [vmem:[#allocation11 + $0x51c] sm:$0xff]
    %v874 = vld [vmem:[#allocation11 + $0x524] sm:$0xff]
    %v875 = vld [vmem:[#allocation11 + $0x52c] sm:$0xff]
    %v876 = vld [vmem:[#allocation11 + $0x534] sm:$0xff]
    %v877 = vld [vmem:[#allocation11 + $0x53c] sm:$0xff]
    %v878 = vld [vmem:[#allocation11 + $0x544] sm:$0xff]
    %v879 = vld [vmem:[#allocation11 + $0x54c] sm:$0xff]
    %v880 = vld [vmem:[#allocation11 + $0x554] sm:$0xf]
    %v881 = vld [vmem:[#allocation11 + $0x558] sm:$0xff]
    %v882 = vld [vmem:[#allocation11 + $0x560] sm:$0xff]
    %v883 = vld [vmem:[#allocation11 + $0x568] sm:$0xff]
    %v884 = vld [vmem:[#allocation11 + $0x570] sm:$0xff]
    %v885 = vld [vmem:[#allocation11 + $0x578] sm:$0xff]
    %v886 = vld [vmem:[#allocation11 + $0x580] sm:$0xff]
    %v887 = vld [vmem:[#allocation11 + $0x588] sm:$0xff]
    %v888 = vld [vmem:[#allocation11 + $0x590] sm:$0xff]
    %v889 = vld [vmem:[#allocation11 + $0x598] sm:$0xff]
    %v890 = vld [vmem:[#allocation11 + $0x5a0] sm:$0xf]
    %v891 = vld [vmem:[#allocation11 + $0x5a4] sm:$0xff]
    %v892 = vld [vmem:[#allocation11 + $0x5ac] sm:$0xff]
    %v893 = vld [vmem:[#allocation11 + $0x5b4] sm:$0xff]
    %v894 = vld [vmem:[#allocation11 + $0x5bc] sm:$0xff]
    %v895 = vld [vmem:[#allocation11 + $0x5c4] sm:$0xff]
    %v896 = vld [vmem:[#allocation11 + $0x5cc] sm:$0xff]
    %v897 = vld [vmem:[#allocation11 + $0x5d4] sm:$0xff]
    %v898 = vld [vmem:[#allocation11 + $0x5dc] sm:$0xff]
    %v899 = vld [vmem:[#allocation11 + $0x5e4] sm:$0xff]
    %v900 = vld [vmem:[#allocation11 + $0x5ec] sm:$0xf]
    %v901 = vld [vmem:[#allocation11 + $0x5f0] sm:$0xff]
    %v902 = vld [vmem:[#allocation11 + $0x5f8] sm:$0xff]
    %v903 = vld [vmem:[#allocation11 + $0x600] sm:$0xff]
    %v904 = vld [vmem:[#allocation11 + $0x608] sm:$0xff]
    %v905 = vld [vmem:[#allocation11 + $0x610] sm:$0xff]
    %v906 = vld [vmem:[#allocation11 + $0x618] sm:$0xff]
    %v907 = vld [vmem:[#allocation11 + $0x620] sm:$0xff]
    %v908 = vld [vmem:[#allocation11 + $0x628] sm:$0xff]
    %v909 = vld [vmem:[#allocation11 + $0x630] sm:$0xff]
    %v910 = vld [vmem:[#allocation11 + $0x638] sm:$0xf]
    %v911 = vld [vmem:[#allocation11 + $0x63c] sm:$0xff]
    %v912 = vld [vmem:[#allocation11 + $0x644] sm:$0xff]
    %v913 = vld [vmem:[#allocation11 + $0x64c] sm:$0xff]
    %v914 = vld [vmem:[#allocation11 + $0x654] sm:$0xff]
    %v915 = vld [vmem:[#allocation11 + $0x65c] sm:$0xff]
    %v916 = vld [vmem:[#allocation11 + $0x664] sm:$0xff]
    %v917 = vld [vmem:[#allocation11 + $0x66c] sm:$0xff]
    %v918 = vld [vmem:[#allocation11 + $0x674] sm:$0xff]
    %v919 = vld [vmem:[#allocation11 + $0x67c] sm:$0xff]
    %v920 = vld [vmem:[#allocation11 + $0x684] sm:$0xf]
    %v921 = vld [vmem:[#allocation11 + $0x688] sm:$0xff]
    %v922 = vld [vmem:[#allocation11 + $0x690] sm:$0xff]
    %v923 = vld [vmem:[#allocation11 + $0x698] sm:$0xff]
    %v924 = vld [vmem:[#allocation11 + $0x6a0] sm:$0xff]
    %v925 = vld [vmem:[#allocation11 + $0x6a8] sm:$0xff]
    %v926 = vld [vmem:[#allocation11 + $0x6b0] sm:$0xff]
    %v927 = vld [vmem:[#allocation11 + $0x6b8] sm:$0xff]
    %v928 = vld [vmem:[#allocation11 + $0x6c0] sm:$0xff]
    %v929 = vld [vmem:[#allocation11 + $0x6c8] sm:$0xff]
    %v930 = vld [vmem:[#allocation11 + $0x6d0] sm:$0xf]
    %v931 = vld [vmem:[#allocation11 + $0x6d4] sm:$0xff]
    %v932 = vld [vmem:[#allocation11 + $0x6dc] sm:$0xff]
    %v933 = vld [vmem:[#allocation11 + $0x6e4] sm:$0xff]
    %v934 = vld [vmem:[#allocation11 + $0x6ec] sm:$0xff]
    %v935 = vld [vmem:[#allocation11 + $0x6f4] sm:$0xff]
    %v936 = vld [vmem:[#allocation11 + $0x6fc] sm:$0xff]
    %v937 = vld [vmem:[#allocation11 + $0x704] sm:$0xff]
    %v938 = vld [vmem:[#allocation11 + $0x70c] sm:$0xff]
    %v939 = vld [vmem:[#allocation11 + $0x714] sm:$0xff]
    %v940 = vld [vmem:[#allocation11 + $0x71c] sm:$0xf]
    %v941 = vld [vmem:[#allocation11 + $0x720] sm:$0xff]
    %v942 = vld [vmem:[#allocation11 + $0x728] sm:$0xff]
    %v943 = vld [vmem:[#allocation11 + $0x730] sm:$0xff]
    %v944 = vld [vmem:[#allocation11 + $0x738] sm:$0xff]
    %v945 = vld [vmem:[#allocation11 + $0x740] sm:$0xff]
    %v946 = vld [vmem:[#allocation11 + $0x748] sm:$0xff]
    %v947 = vld [vmem:[#allocation11 + $0x750] sm:$0xff]
    %v948 = vld [vmem:[#allocation11 + $0x758] sm:$0xff]
    %v949 = vld [vmem:[#allocation11 + $0x760] sm:$0xff]
    %v950 = vld [vmem:[#allocation11 + $0x768] sm:$0xf]
    %v951 = vld [vmem:[#allocation11 + $0x76c] sm:$0xff]
    %v952 = vld [vmem:[#allocation11 + $0x774] sm:$0xff]
    %v953 = vld [vmem:[#allocation11 + $0x77c] sm:$0xff]
    %v954 = vld [vmem:[#allocation11 + $0x784] sm:$0xff]
    %v955 = vld [vmem:[#allocation11 + $0x78c] sm:$0xff]
    %v956 = vld [vmem:[#allocation11 + $0x794] sm:$0xff]
    %v957 = vld [vmem:[#allocation11 + $0x79c] sm:$0xff]
    %v958 = vld [vmem:[#allocation11 + $0x7a4] sm:$0xff]
    %v959 = vld [vmem:[#allocation11 + $0x7ac] sm:$0xff]
    %v960 = vld [vmem:[#allocation11 + $0x7b4] sm:$0xf]
    %v961 = vld [vmem:[#allocation11 + $0x7b8] sm:$0xff]
    %v962 = vld [vmem:[#allocation11 + $0x7c0] sm:$0xff]
    %v963 = vld [vmem:[#allocation11 + $0x7c8] sm:$0xff]
    %v964 = vld [vmem:[#allocation11 + $0x7d0] sm:$0xff]
    %v965 = vld [vmem:[#allocation11 + $0x7d8] sm:$0xff]
    %v966 = vld [vmem:[#allocation11 + $0x7e0] sm:$0xff]
    %v967 = vld [vmem:[#allocation11 + $0x7e8] sm:$0xff]
    %v968 = vld [vmem:[#allocation11 + $0x7f0] sm:$0xff]
    %v969 = vld [vmem:[#allocation11 + $0x7f8] sm:$0xff]
    %v970 = vld [vmem:[#allocation11 + $0x800] sm:$0xf]
    %v971 = vld [vmem:[#allocation11 + $0x804] sm:$0xff]
    %v972 = vld [vmem:[#allocation11 + $0x80c] sm:$0xff]
    %v973 = vld [vmem:[#allocation11 + $0x814] sm:$0xff]
    %v974 = vld [vmem:[#allocation11 + $0x81c] sm:$0xff]
    %v975 = vld [vmem:[#allocation11 + $0x824] sm:$0xff]
    %v976 = vld [vmem:[#allocation11 + $0x82c] sm:$0xff]
    %v977 = vld [vmem:[#allocation11 + $0x834] sm:$0xff]
    %v978 = vld [vmem:[#allocation11 + $0x83c] sm:$0xff]
    %v979 = vld [vmem:[#allocation11 + $0x844] sm:$0xff]
    %v980 = vld [vmem:[#allocation11 + $0x84c] sm:$0xf]
    %v981 = vld [vmem:[#allocation11 + $0x850] sm:$0xff]
    %v982 = vld [vmem:[#allocation11 + $0x858] sm:$0xff]
    %v983 = vld [vmem:[#allocation11 + $0x860] sm:$0xff]
    %v984 = vld [vmem:[#allocation11 + $0x868] sm:$0xff]
    %v985 = vld [vmem:[#allocation11 + $0x870] sm:$0xff]
    %v986 = vld [vmem:[#allocation11 + $0x878] sm:$0xff]
    %v987 = vld [vmem:[#allocation11 + $0x880] sm:$0xff]
    %v988 = vld [vmem:[#allocation11 + $0x888] sm:$0xff]
    %v989 = vld [vmem:[#allocation11 + $0x890] sm:$0xff]
    %v990 = vld [vmem:[#allocation11 + $0x898] sm:$0xf]
    %v991 = vld [vmem:[#allocation11 + $0x89c] sm:$0xff]
    %v992 = vld [vmem:[#allocation11 + $0x8a4] sm:$0xff]
    %v993 = vld [vmem:[#allocation11 + $0x8ac] sm:$0xff]
    %v994 = vld [vmem:[#allocation11 + $0x8b4] sm:$0xff]
    %v995 = vld [vmem:[#allocation11 + $0x8bc] sm:$0xff]
    %v996 = vld [vmem:[#allocation11 + $0x8c4] sm:$0xff]
    %v997 = vld [vmem:[#allocation11 + $0x8cc] sm:$0xff]
    %v998 = vld [vmem:[#allocation11 + $0x8d4] sm:$0xff]
    %v999 = vld [vmem:[#allocation11 + $0x8dc] sm:$0xff]
    %v1000 = vld [vmem:[#allocation11 + $0x8e4] sm:$0xf]
    %v1001 = vld [vmem:[#allocation11 + $0x8e8] sm:$0xff]
    %v1002 = vld [vmem:[#allocation11 + $0x8f0] sm:$0xff]
    %v1003 = vld [vmem:[#allocation11 + $0x8f8] sm:$0xff]
    %v1004 = vld [vmem:[#allocation11 + $0x900] sm:$0xff]
    %v1005 = vld [vmem:[#allocation11 + $0x908] sm:$0xff]
    %v1006 = vld [vmem:[#allocation11 + $0x910] sm:$0xff]
    %v1007 = vld [vmem:[#allocation11 + $0x918] sm:$0xff]
    %v1008 = vld [vmem:[#allocation11 + $0x920] sm:$0xff]
    %v1009 = vld [vmem:[#allocation11 + $0x928] sm:$0xff]
    %v1010 = vld [vmem:[#allocation11 + $0x930] sm:$0xf]
    %v1011 = vld [vmem:[#allocation11 + $0x934] sm:$0xff]
    %v1012 = vld [vmem:[#allocation11 + $0x93c] sm:$0xff]
    %v1013 = vld [vmem:[#allocation11 + $0x944] sm:$0xff]
    %v1014 = vld [vmem:[#allocation11 + $0x94c] sm:$0xff]
    %v1015 = vld [vmem:[#allocation11 + $0x954] sm:$0xff]
    %v1016 = vld [vmem:[#allocation11 + $0x95c] sm:$0xff]
    %v1017 = vld [vmem:[#allocation11 + $0x964] sm:$0xff]
    %v1018 = vld [vmem:[#allocation11 + $0x96c] sm:$0xff]
    %v1019 = vld [vmem:[#allocation11 + $0x974] sm:$0xff]
    %v1020 = vld [vmem:[#allocation11 + $0x97c] sm:$0xf]
    %v1021 = vld [vmem:[#allocation11 + $0x980] sm:$0xff]
    %v1022 = vld [vmem:[#allocation11 + $0x988] sm:$0xff]
    %v1023 = vld [vmem:[#allocation11 + $0x990] sm:$0xff]
    %v1024 = vld [vmem:[#allocation11 + $0x998] sm:$0xff]
    %v1025 = vld [vmem:[#allocation11 + $0x9a0] sm:$0xff]
    %v1026 = vld [vmem:[#allocation11 + $0x9a8] sm:$0xff]
    %v1027 = vld [vmem:[#allocation11 + $0x9b0] sm:$0xff]
    %v1028 = vld [vmem:[#allocation11 + $0x9b8] sm:$0xff]
    %v1029 = vld [vmem:[#allocation11 + $0x9c0] sm:$0xff]
    %v1030 = vld [vmem:[#allocation11 + $0x9c8] sm:$0xf]
    %v1031 = vld [vmem:[#allocation11 + $0x9cc] sm:$0xff]
    %v1032 = vld [vmem:[#allocation11 + $0x9d4] sm:$0xff]
    %v1033 = vld [vmem:[#allocation11 + $0x9dc] sm:$0xff]
    %v1034 = vld [vmem:[#allocation11 + $0x9e4] sm:$0xff]
    %v1035 = vld [vmem:[#allocation11 + $0x9ec] sm:$0xff]
    %v1036 = vld [vmem:[#allocation11 + $0x9f4] sm:$0xff]
    %v1037 = vld [vmem:[#allocation11 + $0x9fc] sm:$0xff]
    %v1038 = vld [vmem:[#allocation11 + $0xa04] sm:$0xff]
    %v1039 = vld [vmem:[#allocation11 + $0xa0c] sm:$0xff]
    %v1040 = vld [vmem:[#allocation11 + $0xa14] sm:$0xf]
    %v1041 = vld [vmem:[#allocation11 + $0xa18] sm:$0xff]
    %v1042 = vld [vmem:[#allocation11 + $0xa20] sm:$0xff]
    %v1043 = vld [vmem:[#allocation11 + $0xa28] sm:$0xff]
    %v1044 = vld [vmem:[#allocation11 + $0xa30] sm:$0xff]
    %v1045 = vld [vmem:[#allocation11 + $0xa38] sm:$0xff]
    %v1046 = vld [vmem:[#allocation11 + $0xa40] sm:$0xff]
    %v1047 = vld [vmem:[#allocation11 + $0xa48] sm:$0xff]
    %v1048 = vld [vmem:[#allocation11 + $0xa50] sm:$0xff]
    %v1049 = vld [vmem:[#allocation11 + $0xa58] sm:$0xff]
    %v1050 = vld [vmem:[#allocation11 + $0xa60] sm:$0xf]
    %v1051 = vld [vmem:[#allocation11 + $0xa64] sm:$0xff]
    %v1052 = vld [vmem:[#allocation11 + $0xa6c] sm:$0xff]
    %v1053 = vld [vmem:[#allocation11 + $0xa74] sm:$0xff]
    %v1054 = vld [vmem:[#allocation11 + $0xa7c] sm:$0xff]
    %v1055 = vld [vmem:[#allocation11 + $0xa84] sm:$0xff]
    %v1056 = vld [vmem:[#allocation11 + $0xa8c] sm:$0xff]
    %v1057 = vld [vmem:[#allocation11 + $0xa94] sm:$0xff]
    %v1058 = vld [vmem:[#allocation11 + $0xa9c] sm:$0xff]
    %v1059 = vld [vmem:[#allocation11 + $0xaa4] sm:$0xff]
    %v1060 = vld [vmem:[#allocation11 + $0xaac] sm:$0xf]
    %v1061 = vld [vmem:[#allocation11 + $0xab0] sm:$0xff]
    %v1062 = vld [vmem:[#allocation11 + $0xab8] sm:$0xff]
    %v1063 = vld [vmem:[#allocation11 + $0xac0] sm:$0xff]
    %v1064 = vld [vmem:[#allocation11 + $0xac8] sm:$0xff]
    %v1065 = vld [vmem:[#allocation11 + $0xad0] sm:$0xff]
    %v1066 = vld [vmem:[#allocation11 + $0xad8] sm:$0xff]
    %v1067 = vld [vmem:[#allocation11 + $0xae0] sm:$0xff]
    %v1068 = vld [vmem:[#allocation11 + $0xae8] sm:$0xff]
    %v1069 = vld [vmem:[#allocation11 + $0xaf0] sm:$0xff]
    %v1070 = vld [vmem:[#allocation11 + $0xaf8] sm:$0xf]
    %v1071 = vld [vmem:[#allocation11 + $0xafc] sm:$0xff]
    %v1072 = vld [vmem:[#allocation11 + $0xb04] sm:$0xff]
    %v1073 = vld [vmem:[#allocation11 + $0xb0c] sm:$0xff]
    %v1074 = vld [vmem:[#allocation11 + $0xb14] sm:$0xff]
    %v1075 = vld [vmem:[#allocation11 + $0xb1c] sm:$0xff]
    %v1076 = vld [vmem:[#allocation11 + $0xb24] sm:$0xff]
    %v1077 = vld [vmem:[#allocation11 + $0xb2c] sm:$0xff]
    %v1078 = vld [vmem:[#allocation11 + $0xb34] sm:$0xff]
    %v1079 = vld [vmem:[#allocation11 + $0xb3c] sm:$0xff]
    %v1080 = vld [vmem:[#allocation11 + $0xb44] sm:$0xf]
    %v1081 = vld [vmem:[#allocation11 + $0xb48] sm:$0xff]
    %v1082 = vld [vmem:[#allocation11 + $0xb50] sm:$0xff]
    %v1083 = vld [vmem:[#allocation11 + $0xb58] sm:$0xff]
    %v1084 = vld [vmem:[#allocation11 + $0xb60] sm:$0xff]
    %v1085 = vld [vmem:[#allocation11 + $0xb68] sm:$0xff]
    %v1086 = vld [vmem:[#allocation11 + $0xb70] sm:$0xff]
    %v1087 = vld [vmem:[#allocation11 + $0xb78] sm:$0xff]
    %v1088 = vld [vmem:[#allocation11 + $0xb80] sm:$0xff]
    %v1089 = vld [vmem:[#allocation11 + $0xb88] sm:$0xff]
    %v1090 = vld [vmem:[#allocation11 + $0xb90] sm:$0xf]
    %v1091 = vld [vmem:[#allocation11 + $0xb94] sm:$0xff]
    %v1092 = vld [vmem:[#allocation11 + $0xb9c] sm:$0xff]
    %v1093 = vld [vmem:[#allocation11 + $0xba4] sm:$0xff]
    %v1094 = vld [vmem:[#allocation11 + $0xbac] sm:$0xff]
    %v1095 = vld [vmem:[#allocation11 + $0xbb4] sm:$0xff]
    %v1096 = vld [vmem:[#allocation11 + $0xbbc] sm:$0xff]
    %v1097 = vld [vmem:[#allocation11 + $0xbc4] sm:$0xff]
    %v1098 = vld [vmem:[#allocation11 + $0xbcc] sm:$0xff]
    %v1099 = vld [vmem:[#allocation11 + $0xbd4] sm:$0xff]
    %v1100 = vld [vmem:[#allocation11 + $0xbdc] sm:$0xf]
    %v1101 = vld [vmem:[#allocation11 + $0xbe0] sm:$0xff]
    %v1102 = vld [vmem:[#allocation11 + $0xbe8] sm:$0xff]
    %v1103 = vld [vmem:[#allocation11 + $0xbf0] sm:$0xff]
    %v1104 = vld [vmem:[#allocation11 + $0xbf8] sm:$0xff]
    %v1105 = vld [vmem:[#allocation11 + $0xc00] sm:$0xff]
    %v1106 = vld [vmem:[#allocation11 + $0xc08] sm:$0xff]
    %v1107 = vld [vmem:[#allocation11 + $0xc10] sm:$0xff]
    %v1108 = vld [vmem:[#allocation11 + $0xc18] sm:$0xff]
    %v1109 = vld [vmem:[#allocation11 + $0xc20] sm:$0xff]
    %v1110 = vld [vmem:[#allocation11 + $0xc28] sm:$0xf]
    %v1111 = vld [vmem:[#allocation11 + $0xc2c] sm:$0xff]
    %v1112 = vld [vmem:[#allocation11 + $0xc34] sm:$0xff]
    %v1113 = vld [vmem:[#allocation11 + $0xc3c] sm:$0xff]
    %v1114 = vld [vmem:[#allocation11 + $0xc44] sm:$0xff]
    %v1115 = vld [vmem:[#allocation11 + $0xc4c] sm:$0xff]
    %v1116 = vld [vmem:[#allocation11 + $0xc54] sm:$0xff]
    %v1117 = vld [vmem:[#allocation11 + $0xc5c] sm:$0xff]
    %v1118 = vld [vmem:[#allocation11 + $0xc64] sm:$0xff]
    %v1119 = vld [vmem:[#allocation11 + $0xc6c] sm:$0xff]
    %v1120 = vld [vmem:[#allocation11 + $0xc74] sm:$0xf]
    %v1121 = vld [vmem:[#allocation11 + $0xc78] sm:$0xff]
    %v1122 = vld [vmem:[#allocation11 + $0xc80] sm:$0xff]
    %v1123 = vld [vmem:[#allocation11 + $0xc88] sm:$0xff]
    %v1124 = vld [vmem:[#allocation11 + $0xc90] sm:$0xff]
    %v1125 = vld [vmem:[#allocation11 + $0xc98] sm:$0xff]
    %v1126 = vld [vmem:[#allocation11 + $0xca0] sm:$0xff]
    %v1127 = vld [vmem:[#allocation11 + $0xca8] sm:$0xff]
    %v1128 = vld [vmem:[#allocation11 + $0xcb0] sm:$0xff]
    %v1129 = vld [vmem:[#allocation11 + $0xcb8] sm:$0xff]
    %v1130 = vld [vmem:[#allocation11 + $0xcc0] sm:$0xf]
    %v1131 = vld [vmem:[#allocation11 + $0xcc4] sm:$0xff]
    %v1132 = vld [vmem:[#allocation11 + $0xccc] sm:$0xff]
    %v1133 = vld [vmem:[#allocation11 + $0xcd4] sm:$0xff]
    %v1134 = vld [vmem:[#allocation11 + $0xcdc] sm:$0xff]
    %v1135 = vld [vmem:[#allocation11 + $0xce4] sm:$0xff]
    %v1136 = vld [vmem:[#allocation11 + $0xcec] sm:$0xff]
    %v1137 = vld [vmem:[#allocation11 + $0xcf4] sm:$0xff]
    %v1138 = vld [vmem:[#allocation11 + $0xcfc] sm:$0xff]
    %v1139 = vld [vmem:[#allocation11 + $0xd04] sm:$0xff]
    %v1140 = vld [vmem:[#allocation11 + $0xd0c] sm:$0xf]
    %v1141 = vld [vmem:[#allocation11 + $0xd10] sm:$0xff]
    %v1142 = vld [vmem:[#allocation11 + $0xd18] sm:$0xff]
    %v1143 = vld [vmem:[#allocation11 + $0xd20] sm:$0xff]
    %v1144 = vld [vmem:[#allocation11 + $0xd28] sm:$0xff]
    %v1145 = vld [vmem:[#allocation11 + $0xd30] sm:$0xff]
    %v1146 = vld [vmem:[#allocation11 + $0xd38] sm:$0xff]
    %v1147 = vld [vmem:[#allocation11 + $0xd40] sm:$0xff]
    %v1148 = vld [vmem:[#allocation11 + $0xd48] sm:$0xff]
    %v1149 = vld [vmem:[#allocation11 + $0xd50] sm:$0xff]
    %v1150 = vld [vmem:[#allocation11 + $0xd58] sm:$0xf]
    %v1151 = vld [vmem:[#allocation11 + $0xd5c] sm:$0xff]
    %v1152 = vld [vmem:[#allocation11 + $0xd64] sm:$0xff]
    %v1153 = vld [vmem:[#allocation11 + $0xd6c] sm:$0xff]
    %v1154 = vld [vmem:[#allocation11 + $0xd74] sm:$0xff]
    %v1155 = vld [vmem:[#allocation11 + $0xd7c] sm:$0xff]
    %v1156 = vld [vmem:[#allocation11 + $0xd84] sm:$0xff]
    %v1157 = vld [vmem:[#allocation11 + $0xd8c] sm:$0xff]
    %v1158 = vld [vmem:[#allocation11 + $0xd94] sm:$0xff]
    %v1159 = vld [vmem:[#allocation11 + $0xd9c] sm:$0xff]
    %v1160 = vld [vmem:[#allocation11 + $0xda4] sm:$0xf]
    %v1161 = vld [vmem:[#allocation11 + $0xda8] sm:$0xff]
    %v1162 = vld [vmem:[#allocation11 + $0xdb0] sm:$0xff]
    %v1163 = vld [vmem:[#allocation11 + $0xdb8] sm:$0xff]
    %v1164 = vld [vmem:[#allocation11 + $0xdc0] sm:$0xff]
    %v1165 = vld [vmem:[#allocation11 + $0xdc8] sm:$0xff]
    %v1166 = vld [vmem:[#allocation11 + $0xdd0] sm:$0xff]
    %v1167 = vld [vmem:[#allocation11 + $0xdd8] sm:$0xff]
    %v1168 = vld [vmem:[#allocation11 + $0xde0] sm:$0xff]
    %v1169 = vld [vmem:[#allocation11 + $0xde8] sm:$0xff]
    %v1170 = vld [vmem:[#allocation11 + $0xdf0] sm:$0xf]
    %v1171 = vld [vmem:[#allocation11 + $0xdf4] sm:$0xff]
    %v1172 = vld [vmem:[#allocation11 + $0xdfc] sm:$0xff]
    %v1173 = vld [vmem:[#allocation11 + $0xe04] sm:$0xff]
    %v1174 = vld [vmem:[#allocation11 + $0xe0c] sm:$0xff]
    %v1175 = vld [vmem:[#allocation11 + $0xe14] sm:$0xff]
    %v1176 = vld [vmem:[#allocation11 + $0xe1c] sm:$0xff]
    %v1177 = vld [vmem:[#allocation11 + $0xe24] sm:$0xff]
    %v1178 = vld [vmem:[#allocation11 + $0xe2c] sm:$0xff]
    %v1179 = vld [vmem:[#allocation11 + $0xe34] sm:$0xff]
    %v1180 = vld [vmem:[#allocation11 + $0xe3c] sm:$0xf]
    %v1181 = vld [vmem:[#allocation11 + $0xe40] sm:$0xff]
    %v1182 = vld [vmem:[#allocation11 + $0xe48] sm:$0xff]
    %v1183 = vld [vmem:[#allocation11 + $0xe50] sm:$0xff]
    %v1184 = vld [vmem:[#allocation11 + $0xe58] sm:$0xff]
    %v1185 = vld [vmem:[#allocation11 + $0xe60] sm:$0xff]
    %v1186 = vld [vmem:[#allocation11 + $0xe68] sm:$0xff]
    %v1187 = vld [vmem:[#allocation11 + $0xe70] sm:$0xff]
    %v1188 = vld [vmem:[#allocation11 + $0xe78] sm:$0xff]
    %v1189 = vld [vmem:[#allocation11 + $0xe80] sm:$0xff]
    %v1190 = vld [vmem:[#allocation11 + $0xe88] sm:$0xf]
    %v1191 = vld [vmem:[#allocation11 + $0xe8c] sm:$0xff]
    %v1192 = vld [vmem:[#allocation11 + $0xe94] sm:$0xff]
    %v1193 = vld [vmem:[#allocation11 + $0xe9c] sm:$0xff]
    %v1194 = vld [vmem:[#allocation11 + $0xea4] sm:$0xff]
    %v1195 = vld [vmem:[#allocation11 + $0xeac] sm:$0xff]
    %v1196 = vld [vmem:[#allocation11 + $0xeb4] sm:$0xff]
    %v1197 = vld [vmem:[#allocation11 + $0xebc] sm:$0xff]
    %v1198 = vld [vmem:[#allocation11 + $0xec4] sm:$0xff]
    %v1199 = vld [vmem:[#allocation11 + $0xecc] sm:$0xff]
    %v1200 = vld [vmem:[#allocation11 + $0xed4] sm:$0xf]
    %v1201 = vld [vmem:[#allocation11 + $0xed8] sm:$0xff]
    %v1202 = vld [vmem:[#allocation11 + $0xee0] sm:$0xff]
    %v1203 = vld [vmem:[#allocation11 + $0xee8] sm:$0xff]
    %v1204 = vld [vmem:[#allocation11 + $0xef0] sm:$0xff]
    %v1205 = vld [vmem:[#allocation11 + $0xef8] sm:$0xff]
    %v1206 = vld [vmem:[#allocation11 + $0xf00] sm:$0xff]
    %v1207 = vld [vmem:[#allocation11 + $0xf08] sm:$0xff]
    %v1208 = vld [vmem:[#allocation11 + $0xf10] sm:$0xff]
    %v1209 = vld [vmem:[#allocation11 + $0xf18] sm:$0xff]
    %v1210 = vld [vmem:[#allocation11 + $0xf20] sm:$0xf]
    %v1211 = vld [vmem:[#allocation11 + $0xf24] sm:$0xff]
    %v1212 = vld [vmem:[#allocation11 + $0xf2c] sm:$0xff]
    %v1213 = vld [vmem:[#allocation11 + $0xf34] sm:$0xff]
    %v1214 = vld [vmem:[#allocation11 + $0xf3c] sm:$0xff]
    %v1215 = vld [vmem:[#allocation11 + $0xf44] sm:$0xff]
    %v1216 = vld [vmem:[#allocation11 + $0xf4c] sm:$0xff]
    %v1217 = vld [vmem:[#allocation11 + $0xf54] sm:$0xff]
    %v1218 = vld [vmem:[#allocation11 + $0xf5c] sm:$0xff]
    %v1219 = vld [vmem:[#allocation11 + $0xf64] sm:$0xff]
    %v1220 = vld [vmem:[#allocation11 + $0xf6c] sm:$0xf]
    %v1221 = vld [vmem:[#allocation11 + $0xf70] sm:$0xff]
    %v1222 = vld [vmem:[#allocation11 + $0xf78] sm:$0xff]
    %v1223 = vld [vmem:[#allocation11 + $0xf80] sm:$0xff]
    %v1224 = vld [vmem:[#allocation11 + $0xf88] sm:$0xff]
    %v1225 = vld [vmem:[#allocation11 + $0xf90] sm:$0xff]
    %v1226 = vld [vmem:[#allocation11 + $0xf98] sm:$0xff]
    %v1227 = vld [vmem:[#allocation11 + $0xfa0] sm:$0xff]
    %v1228 = vld [vmem:[#allocation11 + $0xfa8] sm:$0xff]
    %v1229 = vld [vmem:[#allocation11 + $0xfb0] sm:$0xff]
    %v1230 = vld [vmem:[#allocation11 + $0xfb8] sm:$0xf]
    %v1231 = vld [vmem:[#allocation11 + $0xfbc] sm:$0xff]
    %v1232 = vld [vmem:[#allocation11 + $0xfc4] sm:$0xff]
    %v1233 = vld [vmem:[#allocation11 + $0xfcc] sm:$0xff]
    %v1234 = vld [vmem:[#allocation11 + $0xfd4] sm:$0xff]
    %v1235 = vld [vmem:[#allocation11 + $0xfdc] sm:$0xff]
    %v1236 = vld [vmem:[#allocation11 + $0xfe4] sm:$0xff]
    %v1237 = vld [vmem:[#allocation11 + $0xfec] sm:$0xff]
    %v1238 = vld [vmem:[#allocation11 + $0xff4] sm:$0xff]
    %v1239 = vld [vmem:[#allocation11 + $0xffc] sm:$0xff]
    %v1240 = vld [vmem:[#allocation11 + $0x1004] sm:$0xf]
    %v1241 = vld [vmem:[#allocation11 + $0x1008] sm:$0xff]
    %v1242 = vld [vmem:[#allocation11 + $0x1010] sm:$0xff]
    %v1243 = vld [vmem:[#allocation11 + $0x1018] sm:$0xff]
    %v1244 = vld [vmem:[#allocation11 + $0x1020] sm:$0xff]
    %v1245 = vld [vmem:[#allocation11 + $0x1028] sm:$0xff]
    %v1246 = vld [vmem:[#allocation11 + $0x1030] sm:$0xff]
    %v1247 = vld [vmem:[#allocation11 + $0x1038] sm:$0xff]
    %v1248 = vld [vmem:[#allocation11 + $0x1040] sm:$0xff]
    %v1249 = vld [vmem:[#allocation11 + $0x1048] sm:$0xff]
    %v1250 = vld [vmem:[#allocation11 + $0x1050] sm:$0xf]
    %v1251 = vld [vmem:[#allocation11 + $0x1054] sm:$0xff]
    %v1252 = vld [vmem:[#allocation11 + $0x105c] sm:$0xff]
    %v1253 = vld [vmem:[#allocation11 + $0x1064] sm:$0xff]
    %v1254 = vld [vmem:[#allocation11 + $0x106c] sm:$0xff]
    %v1255 = vld [vmem:[#allocation11 + $0x1074] sm:$0xff]
    %v1256 = vld [vmem:[#allocation11 + $0x107c] sm:$0xff]
    %v1257 = vld [vmem:[#allocation11 + $0x1084] sm:$0xff]
    %v1258 = vld [vmem:[#allocation11 + $0x108c] sm:$0xff]
    %v1259 = vld [vmem:[#allocation11 + $0x1094] sm:$0xff]
    %v1260 = vld [vmem:[#allocation11 + $0x109c] sm:$0xf]
    %v1261 = vld [vmem:[#allocation11 + $0x10a0] sm:$0xff]
    %v1262 = vld [vmem:[#allocation11 + $0x10a8] sm:$0xff]
    %v1263 = vld [vmem:[#allocation11 + $0x10b0] sm:$0xff]
    %v1264 = vld [vmem:[#allocation11 + $0x10b8] sm:$0xff]
    %v1265 = vld [vmem:[#allocation11 + $0x10c0] sm:$0xff]
    %v1266 = vld [vmem:[#allocation11 + $0x10c8] sm:$0xff]
    %v1267 = vld [vmem:[#allocation11 + $0x10d0] sm:$0xff]
    %v1268 = vld [vmem:[#allocation11 + $0x10d8] sm:$0xff]
    %v1269 = vld [vmem:[#allocation11 + $0x10e0] sm:$0xff]
    %v1270 = vld [vmem:[#allocation11 + $0x10e8] sm:$0xf]
    %v1271 = vld [vmem:[#allocation11 + $0x10ec] sm:$0xff]
    %v1272 = vld [vmem:[#allocation11 + $0x10f4] sm:$0xff]
    %v1273 = vld [vmem:[#allocation11 + $0x10fc] sm:$0xff]
    %v1274 = vld [vmem:[#allocation11 + $0x1104] sm:$0xff]
    %v1275 = vld [vmem:[#allocation11 + $0x110c] sm:$0xff]
    %v1276 = vld [vmem:[#allocation11 + $0x1114] sm:$0xff]
    %v1277 = vld [vmem:[#allocation11 + $0x111c] sm:$0xff]
    %v1278 = vld [vmem:[#allocation11 + $0x1124] sm:$0xff]
    %v1279 = vld [vmem:[#allocation11 + $0x112c] sm:$0xff]
    %v1280 = vld [vmem:[#allocation11 + $0x1134] sm:$0xf]
    %v1281 = vld [vmem:[#allocation11 + $0x1138] sm:$0xff]
    %v1282 = vld [vmem:[#allocation11 + $0x1140] sm:$0xff]
    %v1283 = vld [vmem:[#allocation11 + $0x1148] sm:$0xff]
    %v1284 = vld [vmem:[#allocation11 + $0x1150] sm:$0xff]
    %v1285 = vld [vmem:[#allocation11 + $0x1158] sm:$0xff]
    %v1286 = vld [vmem:[#allocation11 + $0x1160] sm:$0xff]
    %v1287 = vld [vmem:[#allocation11 + $0x1168] sm:$0xff]
    %v1288 = vld [vmem:[#allocation11 + $0x1170] sm:$0xff]
    %v1289 = vld [vmem:[#allocation11 + $0x1178] sm:$0xff]
    %v1290 = vld [vmem:[#allocation11 + $0x1180] sm:$0xf]
    %v1291 = vld [vmem:[#allocation11 + $0x1184] sm:$0xff]
    %v1292 = vld [vmem:[#allocation11 + $0x118c] sm:$0xff]
    %v1293 = vld [vmem:[#allocation11 + $0x1194] sm:$0xff]
    %v1294 = vld [vmem:[#allocation11 + $0x119c] sm:$0xff]
    %v1295 = vld [vmem:[#allocation11 + $0x11a4] sm:$0xff]
    %v1296 = vld [vmem:[#allocation11 + $0x11ac] sm:$0xff]
    %v1297 = vld [vmem:[#allocation11 + $0x11b4] sm:$0xff]
    %v1298 = vld [vmem:[#allocation11 + $0x11bc] sm:$0xff]
    %v1299 = vld [vmem:[#allocation11 + $0x11c4] sm:$0xff]
    %v1300 = vld [vmem:[#allocation11 + $0x11cc] sm:$0xf]
    %v1301 = vld [vmem:[#allocation11 + $0x11d0] sm:$0xff]
    %v1302 = vld [vmem:[#allocation11 + $0x11d8] sm:$0xff]
    %v1303 = vld [vmem:[#allocation11 + $0x11e0] sm:$0xff]
    %v1304 = vld [vmem:[#allocation11 + $0x11e8] sm:$0xff]
    %v1305 = vld [vmem:[#allocation11 + $0x11f0] sm:$0xff]
    %v1306 = vld [vmem:[#allocation11 + $0x11f8] sm:$0xff]
    %v1307 = vld [vmem:[#allocation11 + $0x1200] sm:$0xff]
    %v1308 = vld [vmem:[#allocation11 + $0x1208] sm:$0xff]
    %v1309 = vld [vmem:[#allocation11 + $0x1210] sm:$0xff]
    %v1310 = vld [vmem:[#allocation11 + $0x1218] sm:$0xf]
    %v1311 = vld [vmem:[#allocation11 + $0x121c] sm:$0xff]
    %v1312 = vld [vmem:[#allocation11 + $0x1224] sm:$0xff]
    %v1313 = vld [vmem:[#allocation11 + $0x122c] sm:$0xff]
    %v1314 = vld [vmem:[#allocation11 + $0x1234] sm:$0xff]
    %v1315 = vld [vmem:[#allocation11 + $0x123c] sm:$0xff]
    %v1316 = vld [vmem:[#allocation11 + $0x1244] sm:$0xff]
    %v1317 = vld [vmem:[#allocation11 + $0x124c] sm:$0xff]
    %v1318 = vld [vmem:[#allocation11 + $0x1254] sm:$0xff]
    %v1319 = vld [vmem:[#allocation11 + $0x125c] sm:$0xff]
    %v1320 = vld [vmem:[#allocation11 + $0x1264] sm:$0xf]
    %v1321 = vld [vmem:[#allocation11 + $0x1268] sm:$0xff]
    %v1322 = vld [vmem:[#allocation11 + $0x1270] sm:$0xff]
    %v1323 = vld [vmem:[#allocation11 + $0x1278] sm:$0xff]
    %v1324 = vld [vmem:[#allocation11 + $0x1280] sm:$0xff]
    %v1325 = vld [vmem:[#allocation11 + $0x1288] sm:$0xff]
    %v1326 = vld [vmem:[#allocation11 + $0x1290] sm:$0xff]
    %v1327 = vld [vmem:[#allocation11 + $0x1298] sm:$0xff]
    %v1328 = vld [vmem:[#allocation11 + $0x12a0] sm:$0xff]
    %v1329 = vld [vmem:[#allocation11 + $0x12a8] sm:$0xff]
    %v1330 = vld [vmem:[#allocation11 + $0x12b0] sm:$0xf]
    %v1331 = vld [vmem:[#allocation11 + $0x12b4] sm:$0xff]
    %v1332 = vld [vmem:[#allocation11 + $0x12bc] sm:$0xff]
    %v1333 = vld [vmem:[#allocation11 + $0x12c4] sm:$0xff]
    %v1334 = vld [vmem:[#allocation11 + $0x12cc] sm:$0xff]
    %v1335 = vld [vmem:[#allocation11 + $0x12d4] sm:$0xff]
    %v1336 = vld [vmem:[#allocation11 + $0x12dc] sm:$0xff]
    %v1337 = vld [vmem:[#allocation11 + $0x12e4] sm:$0xff]
    %v1338 = vld [vmem:[#allocation11 + $0x12ec] sm:$0xff]
    %v1339 = vld [vmem:[#allocation11 + $0x12f4] sm:$0xff]
    %v1340 = vld [vmem:[#allocation11 + $0x12fc] sm:$0xf]
    %v1981 = vunpack.c.l.b16 %v701
    %v1982 = vunpack.c.h.b16 %v701
    %v1983 = vunpack.c.l.b16 %v702
    %v1984 = vunpack.c.h.b16 %v702
    %v1985 = vunpack.c.l.b16 %v703
    %v1986 = vunpack.c.h.b16 %v703
    %v1987 = vunpack.c.l.b16 %v704
    %v1988 = vunpack.c.h.b16 %v704
    %v1989 = vunpack.c.l.b16 %v705
    %v1990 = vunpack.c.h.b16 %v705
    %v1991 = vunpack.c.l.b16 %v706
    %v1992 = vunpack.c.h.b16 %v706
    %v1993 = vunpack.c.l.b16 %v707
    %v1994 = vunpack.c.h.b16 %v707
    %v1995 = vunpack.c.l.b16 %v708
    %v1996 = vunpack.c.h.b16 %v708
    %v1997 = vunpack.c.l.b16 %v709
    %v1998 = vunpack.c.h.b16 %v709
    %v1999 = vunpack.c.l.b16 %v710
    %v2000 = vunpack.c.l.b16 %v711
    %v2001 = vunpack.c.h.b16 %v711
    %v2002 = vunpack.c.l.b16 %v712
    %v2003 = vunpack.c.h.b16 %v712
    %v2004 = vunpack.c.l.b16 %v713
    %v2005 = vunpack.c.h.b16 %v713
    %v2006 = vunpack.c.l.b16 %v714
    %v2007 = vunpack.c.h.b16 %v714
    %v2008 = vunpack.c.l.b16 %v715
    %v2009 = vunpack.c.h.b16 %v715
    %v2010 = vunpack.c.l.b16 %v716
    %v2011 = vunpack.c.h.b16 %v716
    %v2012 = vunpack.c.l.b16 %v717
    %v2013 = vunpack.c.h.b16 %v717
    %v2014 = vunpack.c.l.b16 %v718
    %v2015 = vunpack.c.h.b16 %v718
    %v2016 = vunpack.c.l.b16 %v719
    %v2017 = vunpack.c.h.b16 %v719
    %v2018 = vunpack.c.l.b16 %v720
    %v2019 = vunpack.c.l.b16 %v721
    %v2020 = vunpack.c.h.b16 %v721
    %v2021 = vunpack.c.l.b16 %v722
    %v2022 = vunpack.c.h.b16 %v722
    %v2023 = vunpack.c.l.b16 %v723
    %v2024 = vunpack.c.h.b16 %v723
    %v2025 = vunpack.c.l.b16 %v724
    %v2026 = vunpack.c.h.b16 %v724
    %v2027 = vunpack.c.l.b16 %v725
    %v2028 = vunpack.c.h.b16 %v725
    %v2029 = vunpack.c.l.b16 %v726
    %v2030 = vunpack.c.h.b16 %v726
    %v2031 = vunpack.c.l.b16 %v727
    %v2032 = vunpack.c.h.b16 %v727
    %v2033 = vunpack.c.l.b16 %v728
    %v2034 = vunpack.c.h.b16 %v728
    %v2035 = vunpack.c.l.b16 %v729
    %v2036 = vunpack.c.h.b16 %v729
    %v2037 = vunpack.c.l.b16 %v730
    %v2038 = vunpack.c.l.b16 %v731
    %v2039 = vunpack.c.h.b16 %v731
    %v2040 = vunpack.c.l.b16 %v732
    %v2041 = vunpack.c.h.b16 %v732
    %v2042 = vunpack.c.l.b16 %v733
    %v2043 = vunpack.c.h.b16 %v733
    %v2044 = vunpack.c.l.b16 %v734
    %v2045 = vunpack.c.h.b16 %v734
    %v2046 = vunpack.c.l.b16 %v735
    %v2047 = vunpack.c.h.b16 %v735
    %v2048 = vunpack.c.l.b16 %v736
    %v2049 = vunpack.c.h.b16 %v736
    %v2050 = vunpack.c.l.b16 %v737
    %v2051 = vunpack.c.h.b16 %v737
    %v2052 = vunpack.c.l.b16 %v738
    %v2053 = vunpack.c.h.b16 %v738
    %v2054 = vunpack.c.l.b16 %v739
    %v2055 = vunpack.c.h.b16 %v739
    %v2056 = vunpack.c.l.b16 %v740
    %v2057 = vunpack.c.l.b16 %v741
    %v2058 = vunpack.c.h.b16 %v741
    %v2059 = vunpack.c.l.b16 %v742
    %v2060 = vunpack.c.h.b16 %v742
    %v2061 = vunpack.c.l.b16 %v743
    %v2062 = vunpack.c.h.b16 %v743
    %v2063 = vunpack.c.l.b16 %v744
    %v2064 = vunpack.c.h.b16 %v744
    %v2065 = vunpack.c.l.b16 %v745
    %v2066 = vunpack.c.h.b16 %v745
    %v2067 = vunpack.c.l.b16 %v746
    %v2068 = vunpack.c.h.b16 %v746
    %v2069 = vunpack.c.l.b16 %v747
    %v2070 = vunpack.c.h.b16 %v747
    %v2071 = vunpack.c.l.b16 %v748
    %v2072 = vunpack.c.h.b16 %v748
    %v2073 = vunpack.c.l.b16 %v749
    %v2074 = vunpack.c.h.b16 %v749
    %v2075 = vunpack.c.l.b16 %v750
    %v2076 = vunpack.c.l.b16 %v751
    %v2077 = vunpack.c.h.b16 %v751
    %v2078 = vunpack.c.l.b16 %v752
    %v2079 = vunpack.c.h.b16 %v752
    %v2080 = vunpack.c.l.b16 %v753
    %v2081 = vunpack.c.h.b16 %v753
    %v2082 = vunpack.c.l.b16 %v754
    %v2083 = vunpack.c.h.b16 %v754
    %v2084 = vunpack.c.l.b16 %v755
    %v2085 = vunpack.c.h.b16 %v755
    %v2086 = vunpack.c.l.b16 %v756
    %v2087 = vunpack.c.h.b16 %v756
    %v2088 = vunpack.c.l.b16 %v757
    %v2089 = vunpack.c.h.b16 %v757
    %v2090 = vunpack.c.l.b16 %v758
    %v2091 = vunpack.c.h.b16 %v758
    %v2092 = vunpack.c.l.b16 %v759
    %v2093 = vunpack.c.h.b16 %v759
    %v2094 = vunpack.c.l.b16 %v760
    %v2095 = vunpack.c.l.b16 %v761
    %v2096 = vunpack.c.h.b16 %v761
    %v2097 = vunpack.c.l.b16 %v762
    %v2098 = vunpack.c.h.b16 %v762
    %v2099 = vunpack.c.l.b16 %v763
    %v2100 = vunpack.c.h.b16 %v763
    %v2101 = vunpack.c.l.b16 %v764
    %v2102 = vunpack.c.h.b16 %v764
    %v2103 = vunpack.c.l.b16 %v765
    %v2104 = vunpack.c.h.b16 %v765
    %v2105 = vunpack.c.l.b16 %v766
    %v2106 = vunpack.c.h.b16 %v766
    %v2107 = vunpack.c.l.b16 %v767
    %v2108 = vunpack.c.h.b16 %v767
    %v2109 = vunpack.c.l.b16 %v768
    %v2110 = vunpack.c.h.b16 %v768
    %v2111 = vunpack.c.l.b16 %v769
    %v2112 = vunpack.c.h.b16 %v769
    %v2113 = vunpack.c.l.b16 %v770
    %v2114 = vunpack.c.l.b16 %v771
    %v2115 = vunpack.c.h.b16 %v771
    %v2116 = vunpack.c.l.b16 %v772
    %v2117 = vunpack.c.h.b16 %v772
    %v2118 = vunpack.c.l.b16 %v773
    %v2119 = vunpack.c.h.b16 %v773
    %v2120 = vunpack.c.l.b16 %v774
    %v2121 = vunpack.c.h.b16 %v774
    %v2122 = vunpack.c.l.b16 %v775
    %v2123 = vunpack.c.h.b16 %v775
    %v2124 = vunpack.c.l.b16 %v776
    %v2125 = vunpack.c.h.b16 %v776
    %v2126 = vunpack.c.l.b16 %v777
    %v2127 = vunpack.c.h.b16 %v777
    %v2128 = vunpack.c.l.b16 %v778
    %v2129 = vunpack.c.h.b16 %v778
    %v2130 = vunpack.c.l.b16 %v779
    %v2131 = vunpack.c.h.b16 %v779
    %v2132 = vunpack.c.l.b16 %v780
    %v2133 = vunpack.c.l.b16 %v781
    %v2134 = vunpack.c.h.b16 %v781
    %v2135 = vunpack.c.l.b16 %v782
    %v2136 = vunpack.c.h.b16 %v782
    %v2137 = vunpack.c.l.b16 %v783
    %v2138 = vunpack.c.h.b16 %v783
    %v2139 = vunpack.c.l.b16 %v784
    %v2140 = vunpack.c.h.b16 %v784
    %v2141 = vunpack.c.l.b16 %v785
    %v2142 = vunpack.c.h.b16 %v785
    %v2143 = vunpack.c.l.b16 %v786
    %v2144 = vunpack.c.h.b16 %v786
    %v2145 = vunpack.c.l.b16 %v787
    %v2146 = vunpack.c.h.b16 %v787
    %v2147 = vunpack.c.l.b16 %v788
    %v2148 = vunpack.c.h.b16 %v788
    %v2149 = vunpack.c.l.b16 %v789
    %v2150 = vunpack.c.h.b16 %v789
    %v2151 = vunpack.c.l.b16 %v790
    %v2152 = vunpack.c.l.b16 %v791
    %v2153 = vunpack.c.h.b16 %v791
    %v2154 = vunpack.c.l.b16 %v792
    %v2155 = vunpack.c.h.b16 %v792
    %v2156 = vunpack.c.l.b16 %v793
    %v2157 = vunpack.c.h.b16 %v793
    %v2158 = vunpack.c.l.b16 %v794
    %v2159 = vunpack.c.h.b16 %v794
    %v2160 = vunpack.c.l.b16 %v795
    %v2161 = vunpack.c.h.b16 %v795
    %v2162 = vunpack.c.l.b16 %v796
    %v2163 = vunpack.c.h.b16 %v796
    %v2164 = vunpack.c.l.b16 %v797
    %v2165 = vunpack.c.h.b16 %v797
    %v2166 = vunpack.c.l.b16 %v798
    %v2167 = vunpack.c.h.b16 %v798
    %v2168 = vunpack.c.l.b16 %v799
    %v2169 = vunpack.c.h.b16 %v799
    %v2170 = vunpack.c.l.b16 %v800
    %v2171 = vunpack.c.l.b16 %v801
    %v2172 = vunpack.c.h.b16 %v801
    %v2173 = vunpack.c.l.b16 %v802
    %v2174 = vunpack.c.h.b16 %v802
    %v2175 = vunpack.c.l.b16 %v803
    %v2176 = vunpack.c.h.b16 %v803
    %v2177 = vunpack.c.l.b16 %v804
    %v2178 = vunpack.c.h.b16 %v804
    %v2179 = vunpack.c.l.b16 %v805
    %v2180 = vunpack.c.h.b16 %v805
    %v2181 = vunpack.c.l.b16 %v806
    %v2182 = vunpack.c.h.b16 %v806
    %v2183 = vunpack.c.l.b16 %v807
    %v2184 = vunpack.c.h.b16 %v807
    %v2185 = vunpack.c.l.b16 %v808
    %v2186 = vunpack.c.h.b16 %v808
    %v2187 = vunpack.c.l.b16 %v809
    %v2188 = vunpack.c.h.b16 %v809
    %v2189 = vunpack.c.l.b16 %v810
    %v2190 = vunpack.c.l.b16 %v811
    %v2191 = vunpack.c.h.b16 %v811
    %v2192 = vunpack.c.l.b16 %v812
    %v2193 = vunpack.c.h.b16 %v812
    %v2194 = vunpack.c.l.b16 %v813
    %v2195 = vunpack.c.h.b16 %v813
    %v2196 = vunpack.c.l.b16 %v814
    %v2197 = vunpack.c.h.b16 %v814
    %v2198 = vunpack.c.l.b16 %v815
    %v2199 = vunpack.c.h.b16 %v815
    %v2200 = vunpack.c.l.b16 %v816
    %v2201 = vunpack.c.h.b16 %v816
    %v2202 = vunpack.c.l.b16 %v817
    %v2203 = vunpack.c.h.b16 %v817
    %v2204 = vunpack.c.l.b16 %v818
    %v2205 = vunpack.c.h.b16 %v818
    %v2206 = vunpack.c.l.b16 %v819
    %v2207 = vunpack.c.h.b16 %v819
    %v2208 = vunpack.c.l.b16 %v820
    %v2209 = vunpack.c.l.b16 %v821
    %v2210 = vunpack.c.h.b16 %v821
    %v2211 = vunpack.c.l.b16 %v822
    %v2212 = vunpack.c.h.b16 %v822
    %v2213 = vunpack.c.l.b16 %v823
    %v2214 = vunpack.c.h.b16 %v823
    %v2215 = vunpack.c.l.b16 %v824
    %v2216 = vunpack.c.h.b16 %v824
    %v2217 = vunpack.c.l.b16 %v825
    %v2218 = vunpack.c.h.b16 %v825
    %v2219 = vunpack.c.l.b16 %v826
    %v2220 = vunpack.c.h.b16 %v826
    %v2221 = vunpack.c.l.b16 %v827
    %v2222 = vunpack.c.h.b16 %v827
    %v2223 = vunpack.c.l.b16 %v828
    %v2224 = vunpack.c.h.b16 %v828
    %v2225 = vunpack.c.l.b16 %v829
    %v2226 = vunpack.c.h.b16 %v829
    %v2227 = vunpack.c.l.b16 %v830
    %v2228 = vunpack.c.l.b16 %v831
    %v2229 = vunpack.c.h.b16 %v831
    %v2230 = vunpack.c.l.b16 %v832
    %v2231 = vunpack.c.h.b16 %v832
    %v2232 = vunpack.c.l.b16 %v833
    %v2233 = vunpack.c.h.b16 %v833
    %v2234 = vunpack.c.l.b16 %v834
    %v2235 = vunpack.c.h.b16 %v834
    %v2236 = vunpack.c.l.b16 %v835
    %v2237 = vunpack.c.h.b16 %v835
    %v2238 = vunpack.c.l.b16 %v836
    %v2239 = vunpack.c.h.b16 %v836
    %v2240 = vunpack.c.l.b16 %v837
    %v2241 = vunpack.c.h.b16 %v837
    %v2242 = vunpack.c.l.b16 %v838
    %v2243 = vunpack.c.h.b16 %v838
    %v2244 = vunpack.c.l.b16 %v839
    %v2245 = vunpack.c.h.b16 %v839
    %v2246 = vunpack.c.l.b16 %v840
    %v2247 = vunpack.c.l.b16 %v841
    %v2248 = vunpack.c.h.b16 %v841
    %v2249 = vunpack.c.l.b16 %v842
    %v2250 = vunpack.c.h.b16 %v842
    %v2251 = vunpack.c.l.b16 %v843
    %v2252 = vunpack.c.h.b16 %v843
    %v2253 = vunpack.c.l.b16 %v844
    %v2254 = vunpack.c.h.b16 %v844
    %v2255 = vunpack.c.l.b16 %v845
    %v2256 = vunpack.c.h.b16 %v845
    %v2257 = vunpack.c.l.b16 %v846
    %v2258 = vunpack.c.h.b16 %v846
    %v2259 = vunpack.c.l.b16 %v847
    %v2260 = vunpack.c.h.b16 %v847
    %v2261 = vunpack.c.l.b16 %v848
    %v2262 = vunpack.c.h.b16 %v848
    %v2263 = vunpack.c.l.b16 %v849
    %v2264 = vunpack.c.h.b16 %v849
    %v2265 = vunpack.c.l.b16 %v850
    %v2266 = vunpack.c.l.b16 %v851
    %v2267 = vunpack.c.h.b16 %v851
    %v2268 = vunpack.c.l.b16 %v852
    %v2269 = vunpack.c.h.b16 %v852
    %v2270 = vunpack.c.l.b16 %v853
    %v2271 = vunpack.c.h.b16 %v853
    %v2272 = vunpack.c.l.b16 %v854
    %v2273 = vunpack.c.h.b16 %v854
    %v2274 = vunpack.c.l.b16 %v855
    %v2275 = vunpack.c.h.b16 %v855
    %v2276 = vunpack.c.l.b16 %v856
    %v2277 = vunpack.c.h.b16 %v856
    %v2278 = vunpack.c.l.b16 %v857
    %v2279 = vunpack.c.h.b16 %v857
    %v2280 = vunpack.c.l.b16 %v858
    %v2281 = vunpack.c.h.b16 %v858
    %v2282 = vunpack.c.l.b16 %v859
    %v2283 = vunpack.c.h.b16 %v859
    %v2284 = vunpack.c.l.b16 %v860
    %v2285 = vunpack.c.l.b16 %v861
    %v2286 = vunpack.c.h.b16 %v861
    %v2287 = vunpack.c.l.b16 %v862
    %v2288 = vunpack.c.h.b16 %v862
    %v2289 = vunpack.c.l.b16 %v863
    %v2290 = vunpack.c.h.b16 %v863
    %v2291 = vunpack.c.l.b16 %v864
    %v2292 = vunpack.c.h.b16 %v864
    %v2293 = vunpack.c.l.b16 %v865
    %v2294 = vunpack.c.h.b16 %v865
    %v2295 = vunpack.c.l.b16 %v866
    %v2296 = vunpack.c.h.b16 %v866
    %v2297 = vunpack.c.l.b16 %v867
    %v2298 = vunpack.c.h.b16 %v867
    %v2299 = vunpack.c.l.b16 %v868
    %v2300 = vunpack.c.h.b16 %v868
    %v2301 = vunpack.c.l.b16 %v869
    %v2302 = vunpack.c.h.b16 %v869
    %v2303 = vunpack.c.l.b16 %v870
    %v2304 = vunpack.c.l.b16 %v871
    %v2305 = vunpack.c.h.b16 %v871
    %v2306 = vunpack.c.l.b16 %v872
    %v2307 = vunpack.c.h.b16 %v872
    %v2308 = vunpack.c.l.b16 %v873
    %v2309 = vunpack.c.h.b16 %v873
    %v2310 = vunpack.c.l.b16 %v874
    %v2311 = vunpack.c.h.b16 %v874
    %v2312 = vunpack.c.l.b16 %v875
    %v2313 = vunpack.c.h.b16 %v875
    %v2314 = vunpack.c.l.b16 %v876
    %v2315 = vunpack.c.h.b16 %v876
    %v2316 = vunpack.c.l.b16 %v877
    %v2317 = vunpack.c.h.b16 %v877
    %v2318 = vunpack.c.l.b16 %v878
    %v2319 = vunpack.c.h.b16 %v878
    %v2320 = vunpack.c.l.b16 %v879
    %v2321 = vunpack.c.h.b16 %v879
    %v2322 = vunpack.c.l.b16 %v880
    %v2323 = vunpack.c.l.b16 %v881
    %v2324 = vunpack.c.h.b16 %v881
    %v2325 = vunpack.c.l.b16 %v882
    %v2326 = vunpack.c.h.b16 %v882
    %v2327 = vunpack.c.l.b16 %v883
    %v2328 = vunpack.c.h.b16 %v883
    %v2329 = vunpack.c.l.b16 %v884
    %v2330 = vunpack.c.h.b16 %v884
    %v2331 = vunpack.c.l.b16 %v885
    %v2332 = vunpack.c.h.b16 %v885
    %v2333 = vunpack.c.l.b16 %v886
    %v2334 = vunpack.c.h.b16 %v886
    %v2335 = vunpack.c.l.b16 %v887
    %v2336 = vunpack.c.h.b16 %v887
    %v2337 = vunpack.c.l.b16 %v888
    %v2338 = vunpack.c.h.b16 %v888
    %v2339 = vunpack.c.l.b16 %v889
    %v2340 = vunpack.c.h.b16 %v889
    %v2341 = vunpack.c.l.b16 %v890
    %v2342 = vunpack.c.l.b16 %v891
    %v2343 = vunpack.c.h.b16 %v891
    %v2344 = vunpack.c.l.b16 %v892
    %v2345 = vunpack.c.h.b16 %v892
    %v2346 = vunpack.c.l.b16 %v893
    %v2347 = vunpack.c.h.b16 %v893
    %v2348 = vunpack.c.l.b16 %v894
    %v2349 = vunpack.c.h.b16 %v894
    %v2350 = vunpack.c.l.b16 %v895
    %v2351 = vunpack.c.h.b16 %v895
    %v2352 = vunpack.c.l.b16 %v896
    %v2353 = vunpack.c.h.b16 %v896
    %v2354 = vunpack.c.l.b16 %v897
    %v2355 = vunpack.c.h.b16 %v897
    %v2356 = vunpack.c.l.b16 %v898
    %v2357 = vunpack.c.h.b16 %v898
    %v2358 = vunpack.c.l.b16 %v899
    %v2359 = vunpack.c.h.b16 %v899
    %v2360 = vunpack.c.l.b16 %v900
    %v2361 = vunpack.c.l.b16 %v901
    %v2362 = vunpack.c.h.b16 %v901
    %v2363 = vunpack.c.l.b16 %v902
    %v2364 = vunpack.c.h.b16 %v902
    %v2365 = vunpack.c.l.b16 %v903
    %v2366 = vunpack.c.h.b16 %v903
    %v2367 = vunpack.c.l.b16 %v904
    %v2368 = vunpack.c.h.b16 %v904
    %v2369 = vunpack.c.l.b16 %v905
    %v2370 = vunpack.c.h.b16 %v905
    %v2371 = vunpack.c.l.b16 %v906
    %v2372 = vunpack.c.h.b16 %v906
    %v2373 = vunpack.c.l.b16 %v907
    %v2374 = vunpack.c.h.b16 %v907
    %v2375 = vunpack.c.l.b16 %v908
    %v2376 = vunpack.c.h.b16 %v908
    %v2377 = vunpack.c.l.b16 %v909
    %v2378 = vunpack.c.h.b16 %v909
    %v2379 = vunpack.c.l.b16 %v910
    %v2380 = vunpack.c.l.b16 %v911
    %v2381 = vunpack.c.h.b16 %v911
    %v2382 = vunpack.c.l.b16 %v912
    %v2383 = vunpack.c.h.b16 %v912
    %v2384 = vunpack.c.l.b16 %v913
    %v2385 = vunpack.c.h.b16 %v913
    %v2386 = vunpack.c.l.b16 %v914
    %v2387 = vunpack.c.h.b16 %v914
    %v2388 = vunpack.c.l.b16 %v915
    %v2389 = vunpack.c.h.b16 %v915
    %v2390 = vunpack.c.l.b16 %v916
    %v2391 = vunpack.c.h.b16 %v916
    %v2392 = vunpack.c.l.b16 %v917
    %v2393 = vunpack.c.h.b16 %v917
    %v2394 = vunpack.c.l.b16 %v918
    %v2395 = vunpack.c.h.b16 %v918
    %v2396 = vunpack.c.l.b16 %v919
    %v2397 = vunpack.c.h.b16 %v919
    %v2398 = vunpack.c.l.b16 %v920
    %v2399 = vunpack.c.l.b16 %v921
    %v2400 = vunpack.c.h.b16 %v921
    %v2401 = vunpack.c.l.b16 %v922
    %v2402 = vunpack.c.h.b16 %v922
    %v2403 = vunpack.c.l.b16 %v923
    %v2404 = vunpack.c.h.b16 %v923
    %v2405 = vunpack.c.l.b16 %v924
    %v2406 = vunpack.c.h.b16 %v924
    %v2407 = vunpack.c.l.b16 %v925
    %v2408 = vunpack.c.h.b16 %v925
    %v2409 = vunpack.c.l.b16 %v926
    %v2410 = vunpack.c.h.b16 %v926
    %v2411 = vunpack.c.l.b16 %v927
    %v2412 = vunpack.c.h.b16 %v927
    %v2413 = vunpack.c.l.b16 %v928
    %v2414 = vunpack.c.h.b16 %v928
    %v2415 = vunpack.c.l.b16 %v929
    %v2416 = vunpack.c.h.b16 %v929
    %v2417 = vunpack.c.l.b16 %v930
    %v2418 = vunpack.c.l.b16 %v931
    %v2419 = vunpack.c.h.b16 %v931
    %v2420 = vunpack.c.l.b16 %v932
    %v2421 = vunpack.c.h.b16 %v932
    %v2422 = vunpack.c.l.b16 %v933
    %v2423 = vunpack.c.h.b16 %v933
    %v2424 = vunpack.c.l.b16 %v934
    %v2425 = vunpack.c.h.b16 %v934
    %v2426 = vunpack.c.l.b16 %v935
    %v2427 = vunpack.c.h.b16 %v935
    %v2428 = vunpack.c.l.b16 %v936
    %v2429 = vunpack.c.h.b16 %v936
    %v2430 = vunpack.c.l.b16 %v937
    %v2431 = vunpack.c.h.b16 %v937
    %v2432 = vunpack.c.l.b16 %v938
    %v2433 = vunpack.c.h.b16 %v938
    %v2434 = vunpack.c.l.b16 %v939
    %v2435 = vunpack.c.h.b16 %v939
    %v2436 = vunpack.c.l.b16 %v940
    %v2437 = vunpack.c.l.b16 %v941
    %v2438 = vunpack.c.h.b16 %v941
    %v2439 = vunpack.c.l.b16 %v942
    %v2440 = vunpack.c.h.b16 %v942
    %v2441 = vunpack.c.l.b16 %v943
    %v2442 = vunpack.c.h.b16 %v943
    %v2443 = vunpack.c.l.b16 %v944
    %v2444 = vunpack.c.h.b16 %v944
    %v2445 = vunpack.c.l.b16 %v945
    %v2446 = vunpack.c.h.b16 %v945
    %v2447 = vunpack.c.l.b16 %v946
    %v2448 = vunpack.c.h.b16 %v946
    %v2449 = vunpack.c.l.b16 %v947
    %v2450 = vunpack.c.h.b16 %v947
    %v2451 = vunpack.c.l.b16 %v948
    %v2452 = vunpack.c.h.b16 %v948
    %v2453 = vunpack.c.l.b16 %v949
    %v2454 = vunpack.c.h.b16 %v949
    %v2455 = vunpack.c.l.b16 %v950
    %v2456 = vunpack.c.l.b16 %v951
    %v2457 = vunpack.c.h.b16 %v951
    %v2458 = vunpack.c.l.b16 %v952
    %v2459 = vunpack.c.h.b16 %v952
    %v2460 = vunpack.c.l.b16 %v953
    %v2461 = vunpack.c.h.b16 %v953
    %v2462 = vunpack.c.l.b16 %v954
    %v2463 = vunpack.c.h.b16 %v954
    %v2464 = vunpack.c.l.b16 %v955
    %v2465 = vunpack.c.h.b16 %v955
    %v2466 = vunpack.c.l.b16 %v956
    %v2467 = vunpack.c.h.b16 %v956
    %v2468 = vunpack.c.l.b16 %v957
    %v2469 = vunpack.c.h.b16 %v957
    %v2470 = vunpack.c.l.b16 %v958
    %v2471 = vunpack.c.h.b16 %v958
    %v2472 = vunpack.c.l.b16 %v959
    %v2473 = vunpack.c.h.b16 %v959
    %v2474 = vunpack.c.l.b16 %v960
    %v2475 = vunpack.c.l.b16 %v961
    %v2476 = vunpack.c.h.b16 %v961
    %v2477 = vunpack.c.l.b16 %v962
    %v2478 = vunpack.c.h.b16 %v962
    %v2479 = vunpack.c.l.b16 %v963
    %v2480 = vunpack.c.h.b16 %v963
    %v2481 = vunpack.c.l.b16 %v964
    %v2482 = vunpack.c.h.b16 %v964
    %v2483 = vunpack.c.l.b16 %v965
    %v2484 = vunpack.c.h.b16 %v965
    %v2485 = vunpack.c.l.b16 %v966
    %v2486 = vunpack.c.h.b16 %v966
    %v2487 = vunpack.c.l.b16 %v967
    %v2488 = vunpack.c.h.b16 %v967
    %v2489 = vunpack.c.l.b16 %v968
    %v2490 = vunpack.c.h.b16 %v968
    %v2491 = vunpack.c.l.b16 %v969
    %v2492 = vunpack.c.h.b16 %v969
    %v2493 = vunpack.c.l.b16 %v970
    %v2494 = vunpack.c.l.b16 %v971
    %v2495 = vunpack.c.h.b16 %v971
    %v2496 = vunpack.c.l.b16 %v972
    %v2497 = vunpack.c.h.b16 %v972
    %v2498 = vunpack.c.l.b16 %v973
    %v2499 = vunpack.c.h.b16 %v973
    %v2500 = vunpack.c.l.b16 %v974
    %v2501 = vunpack.c.h.b16 %v974
    %v2502 = vunpack.c.l.b16 %v975
    %v2503 = vunpack.c.h.b16 %v975
    %v2504 = vunpack.c.l.b16 %v976
    %v2505 = vunpack.c.h.b16 %v976
    %v2506 = vunpack.c.l.b16 %v977
    %v2507 = vunpack.c.h.b16 %v977
    %v2508 = vunpack.c.l.b16 %v978
    %v2509 = vunpack.c.h.b16 %v978
    %v2510 = vunpack.c.l.b16 %v979
    %v2511 = vunpack.c.h.b16 %v979
    %v2512 = vunpack.c.l.b16 %v980
    %v2513 = vunpack.c.l.b16 %v981
    %v2514 = vunpack.c.h.b16 %v981
    %v2515 = vunpack.c.l.b16 %v982
    %v2516 = vunpack.c.h.b16 %v982
    %v2517 = vunpack.c.l.b16 %v983
    %v2518 = vunpack.c.h.b16 %v983
    %v2519 = vunpack.c.l.b16 %v984
    %v2520 = vunpack.c.h.b16 %v984
    %v2521 = vunpack.c.l.b16 %v985
    %v2522 = vunpack.c.h.b16 %v985
    %v2523 = vunpack.c.l.b16 %v986
    %v2524 = vunpack.c.h.b16 %v986
    %v2525 = vunpack.c.l.b16 %v987
    %v2526 = vunpack.c.h.b16 %v987
    %v2527 = vunpack.c.l.b16 %v988
    %v2528 = vunpack.c.h.b16 %v988
    %v2529 = vunpack.c.l.b16 %v989
    %v2530 = vunpack.c.h.b16 %v989
    %v2531 = vunpack.c.l.b16 %v990
    %v2532 = vunpack.c.l.b16 %v991
    %v2533 = vunpack.c.h.b16 %v991
    %v2534 = vunpack.c.l.b16 %v992
    %v2535 = vunpack.c.h.b16 %v992
    %v2536 = vunpack.c.l.b16 %v993
    %v2537 = vunpack.c.h.b16 %v993
    %v2538 = vunpack.c.l.b16 %v994
    %v2539 = vunpack.c.h.b16 %v994
    %v2540 = vunpack.c.l.b16 %v995
    %v2541 = vunpack.c.h.b16 %v995
    %v2542 = vunpack.c.l.b16 %v996
    %v2543 = vunpack.c.h.b16 %v996
    %v2544 = vunpack.c.l.b16 %v997
    %v2545 = vunpack.c.h.b16 %v997
    %v2546 = vunpack.c.l.b16 %v998
    %v2547 = vunpack.c.h.b16 %v998
    %v2548 = vunpack.c.l.b16 %v999
    %v2549 = vunpack.c.h.b16 %v999
    %v2550 = vunpack.c.l.b16 %v1000
    %v2551 = vunpack.c.l.b16 %v1001
    %v2552 = vunpack.c.h.b16 %v1001
    %v2553 = vunpack.c.l.b16 %v1002
    %v2554 = vunpack.c.h.b16 %v1002
    %v2555 = vunpack.c.l.b16 %v1003
    %v2556 = vunpack.c.h.b16 %v1003
    %v2557 = vunpack.c.l.b16 %v1004
    %v2558 = vunpack.c.h.b16 %v1004
    %v2559 = vunpack.c.l.b16 %v1005
    %v2560 = vunpack.c.h.b16 %v1005
    %v2561 = vunpack.c.l.b16 %v1006
    %v2562 = vunpack.c.h.b16 %v1006
    %v2563 = vunpack.c.l.b16 %v1007
    %v2564 = vunpack.c.h.b16 %v1007
    %v2565 = vunpack.c.l.b16 %v1008
    %v2566 = vunpack.c.h.b16 %v1008
    %v2567 = vunpack.c.l.b16 %v1009
    %v2568 = vunpack.c.h.b16 %v1009
    %v2569 = vunpack.c.l.b16 %v1010
    %v2570 = vunpack.c.l.b16 %v1011
    %v2571 = vunpack.c.h.b16 %v1011
    %v2572 = vunpack.c.l.b16 %v1012
    %v2573 = vunpack.c.h.b16 %v1012
    %v2574 = vunpack.c.l.b16 %v1013
    %v2575 = vunpack.c.h.b16 %v1013
    %v2576 = vunpack.c.l.b16 %v1014
    %v2577 = vunpack.c.h.b16 %v1014
    %v2578 = vunpack.c.l.b16 %v1015
    %v2579 = vunpack.c.h.b16 %v1015
    %v2580 = vunpack.c.l.b16 %v1016
    %v2581 = vunpack.c.h.b16 %v1016
    %v2582 = vunpack.c.l.b16 %v1017
    %v2583 = vunpack.c.h.b16 %v1017
    %v2584 = vunpack.c.l.b16 %v1018
    %v2585 = vunpack.c.h.b16 %v1018
    %v2586 = vunpack.c.l.b16 %v1019
    %v2587 = vunpack.c.h.b16 %v1019
    %v2588 = vunpack.c.l.b16 %v1020
    %v2589 = vunpack.c.l.b16 %v1021
    %v2590 = vunpack.c.h.b16 %v1021
    %v2591 = vunpack.c.l.b16 %v1022
    %v2592 = vunpack.c.h.b16 %v1022
    %v2593 = vunpack.c.l.b16 %v1023
    %v2594 = vunpack.c.h.b16 %v1023
    %v2595 = vunpack.c.l.b16 %v1024
    %v2596 = vunpack.c.h.b16 %v1024
    %v2597 = vunpack.c.l.b16 %v1025
    %v2598 = vunpack.c.h.b16 %v1025
    %v2599 = vunpack.c.l.b16 %v1026
    %v2600 = vunpack.c.h.b16 %v1026
    %v2601 = vunpack.c.l.b16 %v1027
    %v2602 = vunpack.c.h.b16 %v1027
    %v2603 = vunpack.c.l.b16 %v1028
    %v2604 = vunpack.c.h.b16 %v1028
    %v2605 = vunpack.c.l.b16 %v1029
    %v2606 = vunpack.c.h.b16 %v1029
    %v2607 = vunpack.c.l.b16 %v1030
    %v2608 = vunpack.c.l.b16 %v1031
    %v2609 = vunpack.c.h.b16 %v1031
    %v2610 = vunpack.c.l.b16 %v1032
    %v2611 = vunpack.c.h.b16 %v1032
    %v2612 = vunpack.c.l.b16 %v1033
    %v2613 = vunpack.c.h.b16 %v1033
    %v2614 = vunpack.c.l.b16 %v1034
    %v2615 = vunpack.c.h.b16 %v1034
    %v2616 = vunpack.c.l.b16 %v1035
    %v2617 = vunpack.c.h.b16 %v1035
    %v2618 = vunpack.c.l.b16 %v1036
    %v2619 = vunpack.c.h.b16 %v1036
    %v2620 = vunpack.c.l.b16 %v1037
    %v2621 = vunpack.c.h.b16 %v1037
    %v2622 = vunpack.c.l.b16 %v1038
    %v2623 = vunpack.c.h.b16 %v1038
    %v2624 = vunpack.c.l.b16 %v1039
    %v2625 = vunpack.c.h.b16 %v1039
    %v2626 = vunpack.c.l.b16 %v1040
    %v2627 = vunpack.c.l.b16 %v1041
    %v2628 = vunpack.c.h.b16 %v1041
    %v2629 = vunpack.c.l.b16 %v1042
    %v2630 = vunpack.c.h.b16 %v1042
    %v2631 = vunpack.c.l.b16 %v1043
    %v2632 = vunpack.c.h.b16 %v1043
    %v2633 = vunpack.c.l.b16 %v1044
    %v2634 = vunpack.c.h.b16 %v1044
    %v2635 = vunpack.c.l.b16 %v1045
    %v2636 = vunpack.c.h.b16 %v1045
    %v2637 = vunpack.c.l.b16 %v1046
    %v2638 = vunpack.c.h.b16 %v1046
    %v2639 = vunpack.c.l.b16 %v1047
    %v2640 = vunpack.c.h.b16 %v1047
    %v2641 = vunpack.c.l.b16 %v1048
    %v2642 = vunpack.c.h.b16 %v1048
    %v2643 = vunpack.c.l.b16 %v1049
    %v2644 = vunpack.c.h.b16 %v1049
    %v2645 = vunpack.c.l.b16 %v1050
    %v2646 = vunpack.c.l.b16 %v1051
    %v2647 = vunpack.c.h.b16 %v1051
    %v2648 = vunpack.c.l.b16 %v1052
    %v2649 = vunpack.c.h.b16 %v1052
    %v2650 = vunpack.c.l.b16 %v1053
    %v2651 = vunpack.c.h.b16 %v1053
    %v2652 = vunpack.c.l.b16 %v1054
    %v2653 = vunpack.c.h.b16 %v1054
    %v2654 = vunpack.c.l.b16 %v1055
    %v2655 = vunpack.c.h.b16 %v1055
    %v2656 = vunpack.c.l.b16 %v1056
    %v2657 = vunpack.c.h.b16 %v1056
    %v2658 = vunpack.c.l.b16 %v1057
    %v2659 = vunpack.c.h.b16 %v1057
    %v2660 = vunpack.c.l.b16 %v1058
    %v2661 = vunpack.c.h.b16 %v1058
    %v2662 = vunpack.c.l.b16 %v1059
    %v2663 = vunpack.c.h.b16 %v1059
    %v2664 = vunpack.c.l.b16 %v1060
    %v2665 = vunpack.c.l.b16 %v1061
    %v2666 = vunpack.c.h.b16 %v1061
    %v2667 = vunpack.c.l.b16 %v1062
    %v2668 = vunpack.c.h.b16 %v1062
    %v2669 = vunpack.c.l.b16 %v1063
    %v2670 = vunpack.c.h.b16 %v1063
    %v2671 = vunpack.c.l.b16 %v1064
    %v2672 = vunpack.c.h.b16 %v1064
    %v2673 = vunpack.c.l.b16 %v1065
    %v2674 = vunpack.c.h.b16 %v1065
    %v2675 = vunpack.c.l.b16 %v1066
    %v2676 = vunpack.c.h.b16 %v1066
    %v2677 = vunpack.c.l.b16 %v1067
    %v2678 = vunpack.c.h.b16 %v1067
    %v2679 = vunpack.c.l.b16 %v1068
    %v2680 = vunpack.c.h.b16 %v1068
    %v2681 = vunpack.c.l.b16 %v1069
    %v2682 = vunpack.c.h.b16 %v1069
    %v2683 = vunpack.c.l.b16 %v1070
    %v2684 = vunpack.c.l.b16 %v1071
    %v2685 = vunpack.c.h.b16 %v1071
    %v2686 = vunpack.c.l.b16 %v1072
    %v2687 = vunpack.c.h.b16 %v1072
    %v2688 = vunpack.c.l.b16 %v1073
    %v2689 = vunpack.c.h.b16 %v1073
    %v2690 = vunpack.c.l.b16 %v1074
    %v2691 = vunpack.c.h.b16 %v1074
    %v2692 = vunpack.c.l.b16 %v1075
    %v2693 = vunpack.c.h.b16 %v1075
    %v2694 = vunpack.c.l.b16 %v1076
    %v2695 = vunpack.c.h.b16 %v1076
    %v2696 = vunpack.c.l.b16 %v1077
    %v2697 = vunpack.c.h.b16 %v1077
    %v2698 = vunpack.c.l.b16 %v1078
    %v2699 = vunpack.c.h.b16 %v1078
    %v2700 = vunpack.c.l.b16 %v1079
    %v2701 = vunpack.c.h.b16 %v1079
    %v2702 = vunpack.c.l.b16 %v1080
    %v2703 = vunpack.c.l.b16 %v1081
    %v2704 = vunpack.c.h.b16 %v1081
    %v2705 = vunpack.c.l.b16 %v1082
    %v2706 = vunpack.c.h.b16 %v1082
    %v2707 = vunpack.c.l.b16 %v1083
    %v2708 = vunpack.c.h.b16 %v1083
    %v2709 = vunpack.c.l.b16 %v1084
    %v2710 = vunpack.c.h.b16 %v1084
    %v2711 = vunpack.c.l.b16 %v1085
    %v2712 = vunpack.c.h.b16 %v1085
    %v2713 = vunpack.c.l.b16 %v1086
    %v2714 = vunpack.c.h.b16 %v1086
    %v2715 = vunpack.c.l.b16 %v1087
    %v2716 = vunpack.c.h.b16 %v1087
    %v2717 = vunpack.c.l.b16 %v1088
    %v2718 = vunpack.c.h.b16 %v1088
    %v2719 = vunpack.c.l.b16 %v1089
    %v2720 = vunpack.c.h.b16 %v1089
    %v2721 = vunpack.c.l.b16 %v1090
    %v2722 = vunpack.c.l.b16 %v1091
    %v2723 = vunpack.c.h.b16 %v1091
    %v2724 = vunpack.c.l.b16 %v1092
    %v2725 = vunpack.c.h.b16 %v1092
    %v2726 = vunpack.c.l.b16 %v1093
    %v2727 = vunpack.c.h.b16 %v1093
    %v2728 = vunpack.c.l.b16 %v1094
    %v2729 = vunpack.c.h.b16 %v1094
    %v2730 = vunpack.c.l.b16 %v1095
    %v2731 = vunpack.c.h.b16 %v1095
    %v2732 = vunpack.c.l.b16 %v1096
    %v2733 = vunpack.c.h.b16 %v1096
    %v2734 = vunpack.c.l.b16 %v1097
    %v2735 = vunpack.c.h.b16 %v1097
    %v2736 = vunpack.c.l.b16 %v1098
    %v2737 = vunpack.c.h.b16 %v1098
    %v2738 = vunpack.c.l.b16 %v1099
    %v2739 = vunpack.c.h.b16 %v1099
    %v2740 = vunpack.c.l.b16 %v1100
    %v2741 = vunpack.c.l.b16 %v1101
    %v2742 = vunpack.c.h.b16 %v1101
    %v2743 = vunpack.c.l.b16 %v1102
    %v2744 = vunpack.c.h.b16 %v1102
    %v2745 = vunpack.c.l.b16 %v1103
    %v2746 = vunpack.c.h.b16 %v1103
    %v2747 = vunpack.c.l.b16 %v1104
    %v2748 = vunpack.c.h.b16 %v1104
    %v2749 = vunpack.c.l.b16 %v1105
    %v2750 = vunpack.c.h.b16 %v1105
    %v2751 = vunpack.c.l.b16 %v1106
    %v2752 = vunpack.c.h.b16 %v1106
    %v2753 = vunpack.c.l.b16 %v1107
    %v2754 = vunpack.c.h.b16 %v1107
    %v2755 = vunpack.c.l.b16 %v1108
    %v2756 = vunpack.c.h.b16 %v1108
    %v2757 = vunpack.c.l.b16 %v1109
    %v2758 = vunpack.c.h.b16 %v1109
    %v2759 = vunpack.c.l.b16 %v1110
    %v2760 = vunpack.c.l.b16 %v1111
    %v2761 = vunpack.c.h.b16 %v1111
    %v2762 = vunpack.c.l.b16 %v1112
    %v2763 = vunpack.c.h.b16 %v1112
    %v2764 = vunpack.c.l.b16 %v1113
    %v2765 = vunpack.c.h.b16 %v1113
    %v2766 = vunpack.c.l.b16 %v1114
    %v2767 = vunpack.c.h.b16 %v1114
    %v2768 = vunpack.c.l.b16 %v1115
    %v2769 = vunpack.c.h.b16 %v1115
    %v2770 = vunpack.c.l.b16 %v1116
    %v2771 = vunpack.c.h.b16 %v1116
    %v2772 = vunpack.c.l.b16 %v1117
    %v2773 = vunpack.c.h.b16 %v1117
    %v2774 = vunpack.c.l.b16 %v1118
    %v2775 = vunpack.c.h.b16 %v1118
    %v2776 = vunpack.c.l.b16 %v1119
    %v2777 = vunpack.c.h.b16 %v1119
    %v2778 = vunpack.c.l.b16 %v1120
    %v2779 = vunpack.c.l.b16 %v1121
    %v2780 = vunpack.c.h.b16 %v1121
    %v2781 = vunpack.c.l.b16 %v1122
    %v2782 = vunpack.c.h.b16 %v1122
    %v2783 = vunpack.c.l.b16 %v1123
    %v2784 = vunpack.c.h.b16 %v1123
    %v2785 = vunpack.c.l.b16 %v1124
    %v2786 = vunpack.c.h.b16 %v1124
    %v2787 = vunpack.c.l.b16 %v1125
    %v2788 = vunpack.c.h.b16 %v1125
    %v2789 = vunpack.c.l.b16 %v1126
    %v2790 = vunpack.c.h.b16 %v1126
    %v2791 = vunpack.c.l.b16 %v1127
    %v2792 = vunpack.c.h.b16 %v1127
    %v2793 = vunpack.c.l.b16 %v1128
    %v2794 = vunpack.c.h.b16 %v1128
    %v2795 = vunpack.c.l.b16 %v1129
    %v2796 = vunpack.c.h.b16 %v1129
    %v2797 = vunpack.c.l.b16 %v1130
    %v2798 = vunpack.c.l.b16 %v1131
    %v2799 = vunpack.c.h.b16 %v1131
    %v2800 = vunpack.c.l.b16 %v1132
    %v2801 = vunpack.c.h.b16 %v1132
    %v2802 = vunpack.c.l.b16 %v1133
    %v2803 = vunpack.c.h.b16 %v1133
    %v2804 = vunpack.c.l.b16 %v1134
    %v2805 = vunpack.c.h.b16 %v1134
    %v2806 = vunpack.c.l.b16 %v1135
    %v2807 = vunpack.c.h.b16 %v1135
    %v2808 = vunpack.c.l.b16 %v1136
    %v2809 = vunpack.c.h.b16 %v1136
    %v2810 = vunpack.c.l.b16 %v1137
    %v2811 = vunpack.c.h.b16 %v1137
    %v2812 = vunpack.c.l.b16 %v1138
    %v2813 = vunpack.c.h.b16 %v1138
    %v2814 = vunpack.c.l.b16 %v1139
    %v2815 = vunpack.c.h.b16 %v1139
    %v2816 = vunpack.c.l.b16 %v1140
    %v2817 = vunpack.c.l.b16 %v1141
    %v2818 = vunpack.c.h.b16 %v1141
    %v2819 = vunpack.c.l.b16 %v1142
    %v2820 = vunpack.c.h.b16 %v1142
    %v2821 = vunpack.c.l.b16 %v1143
    %v2822 = vunpack.c.h.b16 %v1143
    %v2823 = vunpack.c.l.b16 %v1144
    %v2824 = vunpack.c.h.b16 %v1144
    %v2825 = vunpack.c.l.b16 %v1145
    %v2826 = vunpack.c.h.b16 %v1145
    %v2827 = vunpack.c.l.b16 %v1146
    %v2828 = vunpack.c.h.b16 %v1146
    %v2829 = vunpack.c.l.b16 %v1147
    %v2830 = vunpack.c.h.b16 %v1147
    %v2831 = vunpack.c.l.b16 %v1148
    %v2832 = vunpack.c.h.b16 %v1148
    %v2833 = vunpack.c.l.b16 %v1149
    %v2834 = vunpack.c.h.b16 %v1149
    %v2835 = vunpack.c.l.b16 %v1150
    %v2836 = vunpack.c.l.b16 %v1151
    %v2837 = vunpack.c.h.b16 %v1151
    %v2838 = vunpack.c.l.b16 %v1152
    %v2839 = vunpack.c.h.b16 %v1152
    %v2840 = vunpack.c.l.b16 %v1153
    %v2841 = vunpack.c.h.b16 %v1153
    %v2842 = vunpack.c.l.b16 %v1154
    %v2843 = vunpack.c.h.b16 %v1154
    %v2844 = vunpack.c.l.b16 %v1155
    %v2845 = vunpack.c.h.b16 %v1155
    %v2846 = vunpack.c.l.b16 %v1156
    %v2847 = vunpack.c.h.b16 %v1156
    %v2848 = vunpack.c.l.b16 %v1157
    %v2849 = vunpack.c.h.b16 %v1157
    %v2850 = vunpack.c.l.b16 %v1158
    %v2851 = vunpack.c.h.b16 %v1158
    %v2852 = vunpack.c.l.b16 %v1159
    %v2853 = vunpack.c.h.b16 %v1159
    %v2854 = vunpack.c.l.b16 %v1160
    %v2855 = vunpack.c.l.b16 %v1161
    %v2856 = vunpack.c.h.b16 %v1161
    %v2857 = vunpack.c.l.b16 %v1162
    %v2858 = vunpack.c.h.b16 %v1162
    %v2859 = vunpack.c.l.b16 %v1163
    %v2860 = vunpack.c.h.b16 %v1163
    %v2861 = vunpack.c.l.b16 %v1164
    %v2862 = vunpack.c.h.b16 %v1164
    %v2863 = vunpack.c.l.b16 %v1165
    %v2864 = vunpack.c.h.b16 %v1165
    %v2865 = vunpack.c.l.b16 %v1166
    %v2866 = vunpack.c.h.b16 %v1166
    %v2867 = vunpack.c.l.b16 %v1167
    %v2868 = vunpack.c.h.b16 %v1167
    %v2869 = vunpack.c.l.b16 %v1168
    %v2870 = vunpack.c.h.b16 %v1168
    %v2871 = vunpack.c.l.b16 %v1169
    %v2872 = vunpack.c.h.b16 %v1169
    %v2873 = vunpack.c.l.b16 %v1170
    %v2874 = vunpack.c.l.b16 %v1171
    %v2875 = vunpack.c.h.b16 %v1171
    %v2876 = vunpack.c.l.b16 %v1172
    %v2877 = vunpack.c.h.b16 %v1172
    %v2878 = vunpack.c.l.b16 %v1173
    %v2879 = vunpack.c.h.b16 %v1173
    %v2880 = vunpack.c.l.b16 %v1174
    %v2881 = vunpack.c.h.b16 %v1174
    %v2882 = vunpack.c.l.b16 %v1175
    %v2883 = vunpack.c.h.b16 %v1175
    %v2884 = vunpack.c.l.b16 %v1176
    %v2885 = vunpack.c.h.b16 %v1176
    %v2886 = vunpack.c.l.b16 %v1177
    %v2887 = vunpack.c.h.b16 %v1177
    %v2888 = vunpack.c.l.b16 %v1178
    %v2889 = vunpack.c.h.b16 %v1178
    %v2890 = vunpack.c.l.b16 %v1179
    %v2891 = vunpack.c.h.b16 %v1179
    %v2892 = vunpack.c.l.b16 %v1180
    %v2893 = vunpack.c.l.b16 %v1181
    %v2894 = vunpack.c.h.b16 %v1181
    %v2895 = vunpack.c.l.b16 %v1182
    %v2896 = vunpack.c.h.b16 %v1182
    %v2897 = vunpack.c.l.b16 %v1183
    %v2898 = vunpack.c.h.b16 %v1183
    %v2899 = vunpack.c.l.b16 %v1184
    %v2900 = vunpack.c.h.b16 %v1184
    %v2901 = vunpack.c.l.b16 %v1185
    %v2902 = vunpack.c.h.b16 %v1185
    %v2903 = vunpack.c.l.b16 %v1186
    %v2904 = vunpack.c.h.b16 %v1186
    %v2905 = vunpack.c.l.b16 %v1187
    %v2906 = vunpack.c.h.b16 %v1187
    %v2907 = vunpack.c.l.b16 %v1188
    %v2908 = vunpack.c.h.b16 %v1188
    %v2909 = vunpack.c.l.b16 %v1189
    %v2910 = vunpack.c.h.b16 %v1189
    %v2911 = vunpack.c.l.b16 %v1190
    %v2912 = vunpack.c.l.b16 %v1191
    %v2913 = vunpack.c.h.b16 %v1191
    %v2914 = vunpack.c.l.b16 %v1192
    %v2915 = vunpack.c.h.b16 %v1192
    %v2916 = vunpack.c.l.b16 %v1193
    %v2917 = vunpack.c.h.b16 %v1193
    %v2918 = vunpack.c.l.b16 %v1194
    %v2919 = vunpack.c.h.b16 %v1194
    %v2920 = vunpack.c.l.b16 %v1195
    %v2921 = vunpack.c.h.b16 %v1195
    %v2922 = vunpack.c.l.b16 %v1196
    %v2923 = vunpack.c.h.b16 %v1196
    %v2924 = vunpack.c.l.b16 %v1197
    %v2925 = vunpack.c.h.b16 %v1197
    %v2926 = vunpack.c.l.b16 %v1198
    %v2927 = vunpack.c.h.b16 %v1198
    %v2928 = vunpack.c.l.b16 %v1199
    %v2929 = vunpack.c.h.b16 %v1199
    %v2930 = vunpack.c.l.b16 %v1200
    %v2931 = vunpack.c.l.b16 %v1201
    %v2932 = vunpack.c.h.b16 %v1201
    %v2933 = vunpack.c.l.b16 %v1202
    %v2934 = vunpack.c.h.b16 %v1202
    %v2935 = vunpack.c.l.b16 %v1203
    %v2936 = vunpack.c.h.b16 %v1203
    %v2937 = vunpack.c.l.b16 %v1204
    %v2938 = vunpack.c.h.b16 %v1204
    %v2939 = vunpack.c.l.b16 %v1205
    %v2940 = vunpack.c.h.b16 %v1205
    %v2941 = vunpack.c.l.b16 %v1206
    %v2942 = vunpack.c.h.b16 %v1206
    %v2943 = vunpack.c.l.b16 %v1207
    %v2944 = vunpack.c.h.b16 %v1207
    %v2945 = vunpack.c.l.b16 %v1208
    %v2946 = vunpack.c.h.b16 %v1208
    %v2947 = vunpack.c.l.b16 %v1209
    %v2948 = vunpack.c.h.b16 %v1209
    %v2949 = vunpack.c.l.b16 %v1210
    %v2950 = vunpack.c.l.b16 %v1211
    %v2951 = vunpack.c.h.b16 %v1211
    %v2952 = vunpack.c.l.b16 %v1212
    %v2953 = vunpack.c.h.b16 %v1212
    %v2954 = vunpack.c.l.b16 %v1213
    %v2955 = vunpack.c.h.b16 %v1213
    %v2956 = vunpack.c.l.b16 %v1214
    %v2957 = vunpack.c.h.b16 %v1214
    %v2958 = vunpack.c.l.b16 %v1215
    %v2959 = vunpack.c.h.b16 %v1215
    %v2960 = vunpack.c.l.b16 %v1216
    %v2961 = vunpack.c.h.b16 %v1216
    %v2962 = vunpack.c.l.b16 %v1217
    %v2963 = vunpack.c.h.b16 %v1217
    %v2964 = vunpack.c.l.b16 %v1218
    %v2965 = vunpack.c.h.b16 %v1218
    %v2966 = vunpack.c.l.b16 %v1219
    %v2967 = vunpack.c.h.b16 %v1219
    %v2968 = vunpack.c.l.b16 %v1220
    %v2969 = vunpack.c.l.b16 %v1221
    %v2970 = vunpack.c.h.b16 %v1221
    %v2971 = vunpack.c.l.b16 %v1222
    %v2972 = vunpack.c.h.b16 %v1222
    %v2973 = vunpack.c.l.b16 %v1223
    %v2974 = vunpack.c.h.b16 %v1223
    %v2975 = vunpack.c.l.b16 %v1224
    %v2976 = vunpack.c.h.b16 %v1224
    %v2977 = vunpack.c.l.b16 %v1225
    %v2978 = vunpack.c.h.b16 %v1225
    %v2979 = vunpack.c.l.b16 %v1226
    %v2980 = vunpack.c.h.b16 %v1226
    %v2981 = vunpack.c.l.b16 %v1227
    %v2982 = vunpack.c.h.b16 %v1227
    %v2983 = vunpack.c.l.b16 %v1228
    %v2984 = vunpack.c.h.b16 %v1228
    %v2985 = vunpack.c.l.b16 %v1229
    %v2986 = vunpack.c.h.b16 %v1229
    %v2987 = vunpack.c.l.b16 %v1230
    %v2988 = vunpack.c.l.b16 %v1231
    %v2989 = vunpack.c.h.b16 %v1231
    %v2990 = vunpack.c.l.b16 %v1232
    %v2991 = vunpack.c.h.b16 %v1232
    %v2992 = vunpack.c.l.b16 %v1233
    %v2993 = vunpack.c.h.b16 %v1233
    %v2994 = vunpack.c.l.b16 %v1234
    %v2995 = vunpack.c.h.b16 %v1234
    %v2996 = vunpack.c.l.b16 %v1235
    %v2997 = vunpack.c.h.b16 %v1235
    %v2998 = vunpack.c.l.b16 %v1236
    %v2999 = vunpack.c.h.b16 %v1236
    %v3000 = vunpack.c.l.b16 %v1237
    %v3001 = vunpack.c.h.b16 %v1237
    %v3002 = vunpack.c.l.b16 %v1238
    %v3003 = vunpack.c.h.b16 %v1238
    %v3004 = vunpack.c.l.b16 %v1239
    %v3005 = vunpack.c.h.b16 %v1239
    %v3006 = vunpack.c.l.b16 %v1240
    %v3007 = vunpack.c.l.b16 %v1241
    %v3008 = vunpack.c.h.b16 %v1241
    %v3009 = vunpack.c.l.b16 %v1242
    %v3010 = vunpack.c.h.b16 %v1242
    %v3011 = vunpack.c.l.b16 %v1243
    %v3012 = vunpack.c.h.b16 %v1243
    %v3013 = vunpack.c.l.b16 %v1244
    %v3014 = vunpack.c.h.b16 %v1244
    %v3015 = vunpack.c.l.b16 %v1245
    %v3016 = vunpack.c.h.b16 %v1245
    %v3017 = vunpack.c.l.b16 %v1246
    %v3018 = vunpack.c.h.b16 %v1246
    %v3019 = vunpack.c.l.b16 %v1247
    %v3020 = vunpack.c.h.b16 %v1247
    %v3021 = vunpack.c.l.b16 %v1248
    %v3022 = vunpack.c.h.b16 %v1248
    %v3023 = vunpack.c.l.b16 %v1249
    %v3024 = vunpack.c.h.b16 %v1249
    %v3025 = vunpack.c.l.b16 %v1250
    %v3026 = vunpack.c.l.b16 %v1251
    %v3027 = vunpack.c.h.b16 %v1251
    %v3028 = vunpack.c.l.b16 %v1252
    %v3029 = vunpack.c.h.b16 %v1252
    %v3030 = vunpack.c.l.b16 %v1253
    %v3031 = vunpack.c.h.b16 %v1253
    %v3032 = vunpack.c.l.b16 %v1254
    %v3033 = vunpack.c.h.b16 %v1254
    %v3034 = vunpack.c.l.b16 %v1255
    %v3035 = vunpack.c.h.b16 %v1255
    %v3036 = vunpack.c.l.b16 %v1256
    %v3037 = vunpack.c.h.b16 %v1256
    %v3038 = vunpack.c.l.b16 %v1257
    %v3039 = vunpack.c.h.b16 %v1257
    %v3040 = vunpack.c.l.b16 %v1258
    %v3041 = vunpack.c.h.b16 %v1258
    %v3042 = vunpack.c.l.b16 %v1259
    %v3043 = vunpack.c.h.b16 %v1259
    %v3044 = vunpack.c.l.b16 %v1260
    %v3045 = vunpack.c.l.b16 %v1261
    %v3046 = vunpack.c.h.b16 %v1261
    %v3047 = vunpack.c.l.b16 %v1262
    %v3048 = vunpack.c.h.b16 %v1262
    %v3049 = vunpack.c.l.b16 %v1263
    %v3050 = vunpack.c.h.b16 %v1263
    %v3051 = vunpack.c.l.b16 %v1264
    %v3052 = vunpack.c.h.b16 %v1264
    %v3053 = vunpack.c.l.b16 %v1265
    %v3054 = vunpack.c.h.b16 %v1265
    %v3055 = vunpack.c.l.b16 %v1266
    %v3056 = vunpack.c.h.b16 %v1266
    %v3057 = vunpack.c.l.b16 %v1267
    %v3058 = vunpack.c.h.b16 %v1267
    %v3059 = vunpack.c.l.b16 %v1268
    %v3060 = vunpack.c.h.b16 %v1268
    %v3061 = vunpack.c.l.b16 %v1269
    %v3062 = vunpack.c.h.b16 %v1269
    %v3063 = vunpack.c.l.b16 %v1270
    %v3064 = vunpack.c.l.b16 %v1271
    %v3065 = vunpack.c.h.b16 %v1271
    %v3066 = vunpack.c.l.b16 %v1272
    %v3067 = vunpack.c.h.b16 %v1272
    %v3068 = vunpack.c.l.b16 %v1273
    %v3069 = vunpack.c.h.b16 %v1273
    %v3070 = vunpack.c.l.b16 %v1274
    %v3071 = vunpack.c.h.b16 %v1274
    %v3072 = vunpack.c.l.b16 %v1275
    %v3073 = vunpack.c.h.b16 %v1275
    %v3074 = vunpack.c.l.b16 %v1276
    %v3075 = vunpack.c.h.b16 %v1276
    %v3076 = vunpack.c.l.b16 %v1277
    %v3077 = vunpack.c.h.b16 %v1277
    %v3078 = vunpack.c.l.b16 %v1278
    %v3079 = vunpack.c.h.b16 %v1278
    %v3080 = vunpack.c.l.b16 %v1279
    %v3081 = vunpack.c.h.b16 %v1279
    %v3082 = vunpack.c.l.b16 %v1280
    %v3083 = vunpack.c.l.b16 %v1281
    %v3084 = vunpack.c.h.b16 %v1281
    %v3085 = vunpack.c.l.b16 %v1282
    %v3086 = vunpack.c.h.b16 %v1282
    %v3087 = vunpack.c.l.b16 %v1283
    %v3088 = vunpack.c.h.b16 %v1283
    %v3089 = vunpack.c.l.b16 %v1284
    %v3090 = vunpack.c.h.b16 %v1284
    %v3091 = vunpack.c.l.b16 %v1285
    %v3092 = vunpack.c.h.b16 %v1285
    %v3093 = vunpack.c.l.b16 %v1286
    %v3094 = vunpack.c.h.b16 %v1286
    %v3095 = vunpack.c.l.b16 %v1287
    %v3096 = vunpack.c.h.b16 %v1287
    %v3097 = vunpack.c.l.b16 %v1288
    %v3098 = vunpack.c.h.b16 %v1288
    %v3099 = vunpack.c.l.b16 %v1289
    %v3100 = vunpack.c.h.b16 %v1289
    %v3101 = vunpack.c.l.b16 %v1290
    %v3102 = vunpack.c.l.b16 %v1291
    %v3103 = vunpack.c.h.b16 %v1291
    %v3104 = vunpack.c.l.b16 %v1292
    %v3105 = vunpack.c.h.b16 %v1292
    %v3106 = vunpack.c.l.b16 %v1293
    %v3107 = vunpack.c.h.b16 %v1293
    %v3108 = vunpack.c.l.b16 %v1294
    %v3109 = vunpack.c.h.b16 %v1294
    %v3110 = vunpack.c.l.b16 %v1295
    %v3111 = vunpack.c.h.b16 %v1295
    %v3112 = vunpack.c.l.b16 %v1296
    %v3113 = vunpack.c.h.b16 %v1296
    %v3114 = vunpack.c.l.b16 %v1297
    %v3115 = vunpack.c.h.b16 %v1297
    %v3116 = vunpack.c.l.b16 %v1298
    %v3117 = vunpack.c.h.b16 %v1298
    %v3118 = vunpack.c.l.b16 %v1299
    %v3119 = vunpack.c.h.b16 %v1299
    %v3120 = vunpack.c.l.b16 %v1300
    %v3121 = vunpack.c.l.b16 %v1301
    %v3122 = vunpack.c.h.b16 %v1301
    %v3123 = vunpack.c.l.b16 %v1302
    %v3124 = vunpack.c.h.b16 %v1302
    %v3125 = vunpack.c.l.b16 %v1303
    %v3126 = vunpack.c.h.b16 %v1303
    %v3127 = vunpack.c.l.b16 %v1304
    %v3128 = vunpack.c.h.b16 %v1304
    %v3129 = vunpack.c.l.b16 %v1305
    %v3130 = vunpack.c.h.b16 %v1305
    %v3131 = vunpack.c.l.b16 %v1306
    %v3132 = vunpack.c.h.b16 %v1306
    %v3133 = vunpack.c.l.b16 %v1307
    %v3134 = vunpack.c.h.b16 %v1307
    %v3135 = vunpack.c.l.b16 %v1308
    %v3136 = vunpack.c.h.b16 %v1308
    %v3137 = vunpack.c.l.b16 %v1309
    %v3138 = vunpack.c.h.b16 %v1309
    %v3139 = vunpack.c.l.b16 %v1310
    %v3140 = vunpack.c.l.b16 %v1311
    %v3141 = vunpack.c.h.b16 %v1311
    %v3142 = vunpack.c.l.b16 %v1312
    %v3143 = vunpack.c.h.b16 %v1312
    %v3144 = vunpack.c.l.b16 %v1313
    %v3145 = vunpack.c.h.b16 %v1313
    %v3146 = vunpack.c.l.b16 %v1314
    %v3147 = vunpack.c.h.b16 %v1314
    %v3148 = vunpack.c.l.b16 %v1315
    %v3149 = vunpack.c.h.b16 %v1315
    %v3150 = vunpack.c.l.b16 %v1316
    %v3151 = vunpack.c.h.b16 %v1316
    %v3152 = vunpack.c.l.b16 %v1317
    %v3153 = vunpack.c.h.b16 %v1317
    %v3154 = vunpack.c.l.b16 %v1318
    %v3155 = vunpack.c.h.b16 %v1318
    %v3156 = vunpack.c.l.b16 %v1319
    %v3157 = vunpack.c.h.b16 %v1319
    %v3158 = vunpack.c.l.b16 %v1320
    %v3159 = vunpack.c.l.b16 %v1321
    %v3160 = vunpack.c.h.b16 %v1321
    %v3161 = vunpack.c.l.b16 %v1322
    %v3162 = vunpack.c.h.b16 %v1322
    %v3163 = vunpack.c.l.b16 %v1323
    %v3164 = vunpack.c.h.b16 %v1323
    %v3165 = vunpack.c.l.b16 %v1324
    %v3166 = vunpack.c.h.b16 %v1324
    %v3167 = vunpack.c.l.b16 %v1325
    %v3168 = vunpack.c.h.b16 %v1325
    %v3169 = vunpack.c.l.b16 %v1326
    %v3170 = vunpack.c.h.b16 %v1326
    %v3171 = vunpack.c.l.b16 %v1327
    %v3172 = vunpack.c.h.b16 %v1327
    %v3173 = vunpack.c.l.b16 %v1328
    %v3174 = vunpack.c.h.b16 %v1328
    %v3175 = vunpack.c.l.b16 %v1329
    %v3176 = vunpack.c.h.b16 %v1329
    %v3177 = vunpack.c.l.b16 %v1330
    %v3178 = vunpack.c.l.b16 %v1331
    %v3179 = vunpack.c.h.b16 %v1331
    %v3180 = vunpack.c.l.b16 %v1332
    %v3181 = vunpack.c.h.b16 %v1332
    %v3182 = vunpack.c.l.b16 %v1333
    %v3183 = vunpack.c.h.b16 %v1333
    %v3184 = vunpack.c.l.b16 %v1334
    %v3185 = vunpack.c.h.b16 %v1334
    %v3186 = vunpack.c.l.b16 %v1335
    %v3187 = vunpack.c.h.b16 %v1335
    %v3188 = vunpack.c.l.b16 %v1336
    %v3189 = vunpack.c.h.b16 %v1336
    %v3190 = vunpack.c.l.b16 %v1337
    %v3191 = vunpack.c.h.b16 %v1337
    %v3192 = vunpack.c.l.b16 %v1338
    %v3193 = vunpack.c.h.b16 %v1338
    %v3194 = vunpack.c.l.b16 %v1339
    %v3195 = vunpack.c.h.b16 %v1339
    %v3196 = vunpack.c.l.b16 %v1340
    %v3197 = vpack.c.b16 %v2000, %v1981
    %v3198 = vpack.c.b16 %v2001, %v1982
    %v3199 = vpack.c.b16 %v2002, %v1983
    %v3200 = vpack.c.b16 %v2003, %v1984
    %v3201 = vpack.c.b16 %v2004, %v1985
    %v3202 = vpack.c.b16 %v2005, %v1986
    %v3203 = vpack.c.b16 %v2006, %v1987
    %v3204 = vpack.c.b16 %v2007, %v1988
    %v3205 = vpack.c.b16 %v2008, %v1989
    %v3206 = vpack.c.b16 %v2009, %v1990
    %v3207 = vpack.c.b16 %v2010, %v1991
    %v3208 = vpack.c.b16 %v2011, %v1992
    %v3209 = vpack.c.b16 %v2012, %v1993
    %v3210 = vpack.c.b16 %v2013, %v1994
    %v3211 = vpack.c.b16 %v2014, %v1995
    %v3212 = vpack.c.b16 %v2015, %v1996
    %v3213 = vpack.c.b16 %v2016, %v1997
    %v3214 = vpack.c.b16 %v2017, %v1998
    %v3215 = vpack.c.b16 %v2018, %v1999
    %v3216 = vpack.c.b16 %v2038, %v2019
    %v3217 = vpack.c.b16 %v2039, %v2020
    %v3218 = vpack.c.b16 %v2040, %v2021
    %v3219 = vpack.c.b16 %v2041, %v2022
    %v3220 = vpack.c.b16 %v2042, %v2023
    %v3221 = vpack.c.b16 %v2043, %v2024
    %v3222 = vpack.c.b16 %v2044, %v2025
    %v3223 = vpack.c.b16 %v2045, %v2026
    %v3224 = vpack.c.b16 %v2046, %v2027
    %v3225 = vpack.c.b16 %v2047, %v2028
    %v3226 = vpack.c.b16 %v2048, %v2029
    %v3227 = vpack.c.b16 %v2049, %v2030
    %v3228 = vpack.c.b16 %v2050, %v2031
    %v3229 = vpack.c.b16 %v2051, %v2032
    %v3230 = vpack.c.b16 %v2052, %v2033
    %v3231 = vpack.c.b16 %v2053, %v2034
    %v3232 = vpack.c.b16 %v2054, %v2035
    %v3233 = vpack.c.b16 %v2055, %v2036
    %v3234 = vpack.c.b16 %v2056, %v2037
    %v3235 = vpack.c.b16 %v2076, %v2057
    %v3236 = vpack.c.b16 %v2077, %v2058
    %v3237 = vpack.c.b16 %v2078, %v2059
    %v3238 = vpack.c.b16 %v2079, %v2060
    %v3239 = vpack.c.b16 %v2080, %v2061
    %v3240 = vpack.c.b16 %v2081, %v2062
    %v3241 = vpack.c.b16 %v2082, %v2063
    %v3242 = vpack.c.b16 %v2083, %v2064
    %v3243 = vpack.c.b16 %v2084, %v2065
    %v3244 = vpack.c.b16 %v2085, %v2066
    %v3245 = vpack.c.b16 %v2086, %v2067
    %v3246 = vpack.c.b16 %v2087, %v2068
    %v3247 = vpack.c.b16 %v2088, %v2069
    %v3248 = vpack.c.b16 %v2089, %v2070
    %v3249 = vpack.c.b16 %v2090, %v2071
    %v3250 = vpack.c.b16 %v2091, %v2072
    %v3251 = vpack.c.b16 %v2092, %v2073
    %v3252 = vpack.c.b16 %v2093, %v2074
    %v3253 = vpack.c.b16 %v2094, %v2075
    %v3254 = vpack.c.b16 %v2114, %v2095
    %v3255 = vpack.c.b16 %v2115, %v2096
    %v3256 = vpack.c.b16 %v2116, %v2097
    %v3257 = vpack.c.b16 %v2117, %v2098
    %v3258 = vpack.c.b16 %v2118, %v2099
    %v3259 = vpack.c.b16 %v2119, %v2100
    %v3260 = vpack.c.b16 %v2120, %v2101
    %v3261 = vpack.c.b16 %v2121, %v2102
    %v3262 = vpack.c.b16 %v2122, %v2103
    %v3263 = vpack.c.b16 %v2123, %v2104
    %v3264 = vpack.c.b16 %v2124, %v2105
    %v3265 = vpack.c.b16 %v2125, %v2106
    %v3266 = vpack.c.b16 %v2126, %v2107
    %v3267 = vpack.c.b16 %v2127, %v2108
    %v3268 = vpack.c.b16 %v2128, %v2109
    %v3269 = vpack.c.b16 %v2129, %v2110
    %v3270 = vpack.c.b16 %v2130, %v2111
    %v3271 = vpack.c.b16 %v2131, %v2112
    %v3272 = vpack.c.b16 %v2132, %v2113
    %v3273 = vpack.c.b16 %v2152, %v2133
    %v3274 = vpack.c.b16 %v2153, %v2134
    %v3275 = vpack.c.b16 %v2154, %v2135
    %v3276 = vpack.c.b16 %v2155, %v2136
    %v3277 = vpack.c.b16 %v2156, %v2137
    %v3278 = vpack.c.b16 %v2157, %v2138
    %v3279 = vpack.c.b16 %v2158, %v2139
    %v3280 = vpack.c.b16 %v2159, %v2140
    %v3281 = vpack.c.b16 %v2160, %v2141
    %v3282 = vpack.c.b16 %v2161, %v2142
    %v3283 = vpack.c.b16 %v2162, %v2143
    %v3284 = vpack.c.b16 %v2163, %v2144
    %v3285 = vpack.c.b16 %v2164, %v2145
    %v3286 = vpack.c.b16 %v2165, %v2146
    %v3287 = vpack.c.b16 %v2166, %v2147
    %v3288 = vpack.c.b16 %v2167, %v2148
    %v3289 = vpack.c.b16 %v2168, %v2149
    %v3290 = vpack.c.b16 %v2169, %v2150
    %v3291 = vpack.c.b16 %v2170, %v2151
    %v3292 = vpack.c.b16 %v2190, %v2171
    %v3293 = vpack.c.b16 %v2191, %v2172
    %v3294 = vpack.c.b16 %v2192, %v2173
    %v3295 = vpack.c.b16 %v2193, %v2174
    %v3296 = vpack.c.b16 %v2194, %v2175
    %v3297 = vpack.c.b16 %v2195, %v2176
    %v3298 = vpack.c.b16 %v2196, %v2177
    %v3299 = vpack.c.b16 %v2197, %v2178
    %v3300 = vpack.c.b16 %v2198, %v2179
    %v3301 = vpack.c.b16 %v2199, %v2180
    %v3302 = vpack.c.b16 %v2200, %v2181
    %v3303 = vpack.c.b16 %v2201, %v2182
    %v3304 = vpack.c.b16 %v2202, %v2183
    %v3305 = vpack.c.b16 %v2203, %v2184
    %v3306 = vpack.c.b16 %v2204, %v2185
    %v3307 = vpack.c.b16 %v2205, %v2186
    %v3308 = vpack.c.b16 %v2206, %v2187
    %v3309 = vpack.c.b16 %v2207, %v2188
    %v3310 = vpack.c.b16 %v2208, %v2189
    %v3311 = vpack.c.b16 %v2228, %v2209
    %v3312 = vpack.c.b16 %v2229, %v2210
    %v3313 = vpack.c.b16 %v2230, %v2211
    %v3314 = vpack.c.b16 %v2231, %v2212
    %v3315 = vpack.c.b16 %v2232, %v2213
    %v3316 = vpack.c.b16 %v2233, %v2214
    %v3317 = vpack.c.b16 %v2234, %v2215
    %v3318 = vpack.c.b16 %v2235, %v2216
    %v3319 = vpack.c.b16 %v2236, %v2217
    %v3320 = vpack.c.b16 %v2237, %v2218
    %v3321 = vpack.c.b16 %v2238, %v2219
    %v3322 = vpack.c.b16 %v2239, %v2220
    %v3323 = vpack.c.b16 %v2240, %v2221
    %v3324 = vpack.c.b16 %v2241, %v2222
    %v3325 = vpack.c.b16 %v2242, %v2223
    %v3326 = vpack.c.b16 %v2243, %v2224
    %v3327 = vpack.c.b16 %v2244, %v2225
    %v3328 = vpack.c.b16 %v2245, %v2226
    %v3329 = vpack.c.b16 %v2246, %v2227
    %v3330 = vpack.c.b16 %v2266, %v2247
    %v3331 = vpack.c.b16 %v2267, %v2248
    %v3332 = vpack.c.b16 %v2268, %v2249
    %v3333 = vpack.c.b16 %v2269, %v2250
    %v3334 = vpack.c.b16 %v2270, %v2251
    %v3335 = vpack.c.b16 %v2271, %v2252
    %v3336 = vpack.c.b16 %v2272, %v2253
    %v3337 = vpack.c.b16 %v2273, %v2254
    %v3338 = vpack.c.b16 %v2274, %v2255
    %v3339 = vpack.c.b16 %v2275, %v2256
    %v3340 = vpack.c.b16 %v2276, %v2257
    %v3341 = vpack.c.b16 %v2277, %v2258
    %v3342 = vpack.c.b16 %v2278, %v2259
    %v3343 = vpack.c.b16 %v2279, %v2260
    %v3344 = vpack.c.b16 %v2280, %v2261
    %v3345 = vpack.c.b16 %v2281, %v2262
    %v3346 = vpack.c.b16 %v2282, %v2263
    %v3347 = vpack.c.b16 %v2283, %v2264
    %v3348 = vpack.c.b16 %v2284, %v2265
    %v3349 = vpack.c.b16 %v2304, %v2285
    %v3350 = vpack.c.b16 %v2305, %v2286
    %v3351 = vpack.c.b16 %v2306, %v2287
    %v3352 = vpack.c.b16 %v2307, %v2288
    %v3353 = vpack.c.b16 %v2308, %v2289
    %v3354 = vpack.c.b16 %v2309, %v2290
    %v3355 = vpack.c.b16 %v2310, %v2291
    %v3356 = vpack.c.b16 %v2311, %v2292
    %v3357 = vpack.c.b16 %v2312, %v2293
    %v3358 = vpack.c.b16 %v2313, %v2294
    %v3359 = vpack.c.b16 %v2314, %v2295
    %v3360 = vpack.c.b16 %v2315, %v2296
    %v3361 = vpack.c.b16 %v2316, %v2297
    %v3362 = vpack.c.b16 %v2317, %v2298
    %v3363 = vpack.c.b16 %v2318, %v2299
    %v3364 = vpack.c.b16 %v2319, %v2300
    %v3365 = vpack.c.b16 %v2320, %v2301
    %v3366 = vpack.c.b16 %v2321, %v2302
    %v3367 = vpack.c.b16 %v2322, %v2303
    %v3368 = vpack.c.b16 %v2342, %v2323
    %v3369 = vpack.c.b16 %v2343, %v2324
    %v3370 = vpack.c.b16 %v2344, %v2325
    %v3371 = vpack.c.b16 %v2345, %v2326
    %v3372 = vpack.c.b16 %v2346, %v2327
    %v3373 = vpack.c.b16 %v2347, %v2328
    %v3374 = vpack.c.b16 %v2348, %v2329
    %v3375 = vpack.c.b16 %v2349, %v2330
    %v3376 = vpack.c.b16 %v2350, %v2331
    %v3377 = vpack.c.b16 %v2351, %v2332
    %v3378 = vpack.c.b16 %v2352, %v2333
    %v3379 = vpack.c.b16 %v2353, %v2334
    %v3380 = vpack.c.b16 %v2354, %v2335
    %v3381 = vpack.c.b16 %v2355, %v2336
    %v3382 = vpack.c.b16 %v2356, %v2337
    %v3383 = vpack.c.b16 %v2357, %v2338
    %v3384 = vpack.c.b16 %v2358, %v2339
    %v3385 = vpack.c.b16 %v2359, %v2340
    %v3386 = vpack.c.b16 %v2360, %v2341
    %v3387 = vpack.c.b16 %v2380, %v2361
    %v3388 = vpack.c.b16 %v2381, %v2362
    %v3389 = vpack.c.b16 %v2382, %v2363
    %v3390 = vpack.c.b16 %v2383, %v2364
    %v3391 = vpack.c.b16 %v2384, %v2365
    %v3392 = vpack.c.b16 %v2385, %v2366
    %v3393 = vpack.c.b16 %v2386, %v2367
    %v3394 = vpack.c.b16 %v2387, %v2368
    %v3395 = vpack.c.b16 %v2388, %v2369
    %v3396 = vpack.c.b16 %v2389, %v2370
    %v3397 = vpack.c.b16 %v2390, %v2371
    %v3398 = vpack.c.b16 %v2391, %v2372
    %v3399 = vpack.c.b16 %v2392, %v2373
    %v3400 = vpack.c.b16 %v2393, %v2374
    %v3401 = vpack.c.b16 %v2394, %v2375
    %v3402 = vpack.c.b16 %v2395, %v2376
    %v3403 = vpack.c.b16 %v2396, %v2377
    %v3404 = vpack.c.b16 %v2397, %v2378
    %v3405 = vpack.c.b16 %v2398, %v2379
    %v3406 = vpack.c.b16 %v2418, %v2399
    %v3407 = vpack.c.b16 %v2419, %v2400
    %v3408 = vpack.c.b16 %v2420, %v2401
    %v3409 = vpack.c.b16 %v2421, %v2402
    %v3410 = vpack.c.b16 %v2422, %v2403
    %v3411 = vpack.c.b16 %v2423, %v2404
    %v3412 = vpack.c.b16 %v2424, %v2405
    %v3413 = vpack.c.b16 %v2425, %v2406
    %v3414 = vpack.c.b16 %v2426, %v2407
    %v3415 = vpack.c.b16 %v2427, %v2408
    %v3416 = vpack.c.b16 %v2428, %v2409
    %v3417 = vpack.c.b16 %v2429, %v2410
    %v3418 = vpack.c.b16 %v2430, %v2411
    %v3419 = vpack.c.b16 %v2431, %v2412
    %v3420 = vpack.c.b16 %v2432, %v2413
    %v3421 = vpack.c.b16 %v2433, %v2414
    %v3422 = vpack.c.b16 %v2434, %v2415
    %v3423 = vpack.c.b16 %v2435, %v2416
    %v3424 = vpack.c.b16 %v2436, %v2417
    %v3425 = vpack.c.b16 %v2456, %v2437
    %v3426 = vpack.c.b16 %v2457, %v2438
    %v3427 = vpack.c.b16 %v2458, %v2439
    %v3428 = vpack.c.b16 %v2459, %v2440
    %v3429 = vpack.c.b16 %v2460, %v2441
    %v3430 = vpack.c.b16 %v2461, %v2442
    %v3431 = vpack.c.b16 %v2462, %v2443
    %v3432 = vpack.c.b16 %v2463, %v2444
    %v3433 = vpack.c.b16 %v2464, %v2445
    %v3434 = vpack.c.b16 %v2465, %v2446
    %v3435 = vpack.c.b16 %v2466, %v2447
    %v3436 = vpack.c.b16 %v2467, %v2448
    %v3437 = vpack.c.b16 %v2468, %v2449
    %v3438 = vpack.c.b16 %v2469, %v2450
    %v3439 = vpack.c.b16 %v2470, %v2451
    %v3440 = vpack.c.b16 %v2471, %v2452
    %v3441 = vpack.c.b16 %v2472, %v2453
    %v3442 = vpack.c.b16 %v2473, %v2454
    %v3443 = vpack.c.b16 %v2474, %v2455
    %v3444 = vpack.c.b16 %v2494, %v2475
    %v3445 = vpack.c.b16 %v2495, %v2476
    %v3446 = vpack.c.b16 %v2496, %v2477
    %v3447 = vpack.c.b16 %v2497, %v2478
    %v3448 = vpack.c.b16 %v2498, %v2479
    %v3449 = vpack.c.b16 %v2499, %v2480
    %v3450 = vpack.c.b16 %v2500, %v2481
    %v3451 = vpack.c.b16 %v2501, %v2482
    %v3452 = vpack.c.b16 %v2502, %v2483
    %v3453 = vpack.c.b16 %v2503, %v2484
    %v3454 = vpack.c.b16 %v2504, %v2485
    %v3455 = vpack.c.b16 %v2505, %v2486
    %v3456 = vpack.c.b16 %v2506, %v2487
    %v3457 = vpack.c.b16 %v2507, %v2488
    %v3458 = vpack.c.b16 %v2508, %v2489
    %v3459 = vpack.c.b16 %v2509, %v2490
    %v3460 = vpack.c.b16 %v2510, %v2491
    %v3461 = vpack.c.b16 %v2511, %v2492
    %v3462 = vpack.c.b16 %v2512, %v2493
    %v3463 = vpack.c.b16 %v2532, %v2513
    %v3464 = vpack.c.b16 %v2533, %v2514
    %v3465 = vpack.c.b16 %v2534, %v2515
    %v3466 = vpack.c.b16 %v2535, %v2516
    %v3467 = vpack.c.b16 %v2536, %v2517
    %v3468 = vpack.c.b16 %v2537, %v2518
    %v3469 = vpack.c.b16 %v2538, %v2519
    %v3470 = vpack.c.b16 %v2539, %v2520
    %v3471 = vpack.c.b16 %v2540, %v2521
    %v3472 = vpack.c.b16 %v2541, %v2522
    %v3473 = vpack.c.b16 %v2542, %v2523
    %v3474 = vpack.c.b16 %v2543, %v2524
    %v3475 = vpack.c.b16 %v2544, %v2525
    %v3476 = vpack.c.b16 %v2545, %v2526
    %v3477 = vpack.c.b16 %v2546, %v2527
    %v3478 = vpack.c.b16 %v2547, %v2528
    %v3479 = vpack.c.b16 %v2548, %v2529
    %v3480 = vpack.c.b16 %v2549, %v2530
    %v3481 = vpack.c.b16 %v2550, %v2531
    %v3482 = vpack.c.b16 %v2570, %v2551
    %v3483 = vpack.c.b16 %v2571, %v2552
    %v3484 = vpack.c.b16 %v2572, %v2553
    %v3485 = vpack.c.b16 %v2573, %v2554
    %v3486 = vpack.c.b16 %v2574, %v2555
    %v3487 = vpack.c.b16 %v2575, %v2556
    %v3488 = vpack.c.b16 %v2576, %v2557
    %v3489 = vpack.c.b16 %v2577, %v2558
    %v3490 = vpack.c.b16 %v2578, %v2559
    %v3491 = vpack.c.b16 %v2579, %v2560
    %v3492 = vpack.c.b16 %v2580, %v2561
    %v3493 = vpack.c.b16 %v2581, %v2562
    %v3494 = vpack.c.b16 %v2582, %v2563
    %v3495 = vpack.c.b16 %v2583, %v2564
    %v3496 = vpack.c.b16 %v2584, %v2565
    %v3497 = vpack.c.b16 %v2585, %v2566
    %v3498 = vpack.c.b16 %v2586, %v2567
    %v3499 = vpack.c.b16 %v2587, %v2568
    %v3500 = vpack.c.b16 %v2588, %v2569
    %v3501 = vpack.c.b16 %v2608, %v2589
    %v3502 = vpack.c.b16 %v2609, %v2590
    %v3503 = vpack.c.b16 %v2610, %v2591
    %v3504 = vpack.c.b16 %v2611, %v2592
    %v3505 = vpack.c.b16 %v2612, %v2593
    %v3506 = vpack.c.b16 %v2613, %v2594
    %v3507 = vpack.c.b16 %v2614, %v2595
    %v3508 = vpack.c.b16 %v2615, %v2596
    %v3509 = vpack.c.b16 %v2616, %v2597
    %v3510 = vpack.c.b16 %v2617, %v2598
    %v3511 = vpack.c.b16 %v2618, %v2599
    %v3512 = vpack.c.b16 %v2619, %v2600
    %v3513 = vpack.c.b16 %v2620, %v2601
    %v3514 = vpack.c.b16 %v2621, %v2602
    %v3515 = vpack.c.b16 %v2622, %v2603
    %v3516 = vpack.c.b16 %v2623, %v2604
    %v3517 = vpack.c.b16 %v2624, %v2605
    %v3518 = vpack.c.b16 %v2625, %v2606
    %v3519 = vpack.c.b16 %v2626, %v2607
    %v3520 = vpack.c.b16 %v2646, %v2627
    %v3521 = vpack.c.b16 %v2647, %v2628
    %v3522 = vpack.c.b16 %v2648, %v2629
    %v3523 = vpack.c.b16 %v2649, %v2630
    %v3524 = vpack.c.b16 %v2650, %v2631
    %v3525 = vpack.c.b16 %v2651, %v2632
    %v3526 = vpack.c.b16 %v2652, %v2633
    %v3527 = vpack.c.b16 %v2653, %v2634
    %v3528 = vpack.c.b16 %v2654, %v2635
    %v3529 = vpack.c.b16 %v2655, %v2636
    %v3530 = vpack.c.b16 %v2656, %v2637
    %v3531 = vpack.c.b16 %v2657, %v2638
    %v3532 = vpack.c.b16 %v2658, %v2639
    %v3533 = vpack.c.b16 %v2659, %v2640
    %v3534 = vpack.c.b16 %v2660, %v2641
    %v3535 = vpack.c.b16 %v2661, %v2642
    %v3536 = vpack.c.b16 %v2662, %v2643
    %v3537 = vpack.c.b16 %v2663, %v2644
    %v3538 = vpack.c.b16 %v2664, %v2645
    %v3539 = vpack.c.b16 %v2684, %v2665
    %v3540 = vpack.c.b16 %v2685, %v2666
    %v3541 = vpack.c.b16 %v2686, %v2667
    %v3542 = vpack.c.b16 %v2687, %v2668
    %v3543 = vpack.c.b16 %v2688, %v2669
    %v3544 = vpack.c.b16 %v2689, %v2670
    %v3545 = vpack.c.b16 %v2690, %v2671
    %v3546 = vpack.c.b16 %v2691, %v2672
    %v3547 = vpack.c.b16 %v2692, %v2673
    %v3548 = vpack.c.b16 %v2693, %v2674
    %v3549 = vpack.c.b16 %v2694, %v2675
    %v3550 = vpack.c.b16 %v2695, %v2676
    %v3551 = vpack.c.b16 %v2696, %v2677
    %v3552 = vpack.c.b16 %v2697, %v2678
    %v3553 = vpack.c.b16 %v2698, %v2679
    %v3554 = vpack.c.b16 %v2699, %v2680
    %v3555 = vpack.c.b16 %v2700, %v2681
    %v3556 = vpack.c.b16 %v2701, %v2682
    %v3557 = vpack.c.b16 %v2702, %v2683
    %v3558 = vpack.c.b16 %v2722, %v2703
    %v3559 = vpack.c.b16 %v2723, %v2704
    %v3560 = vpack.c.b16 %v2724, %v2705
    %v3561 = vpack.c.b16 %v2725, %v2706
    %v3562 = vpack.c.b16 %v2726, %v2707
    %v3563 = vpack.c.b16 %v2727, %v2708
    %v3564 = vpack.c.b16 %v2728, %v2709
    %v3565 = vpack.c.b16 %v2729, %v2710
    %v3566 = vpack.c.b16 %v2730, %v2711
    %v3567 = vpack.c.b16 %v2731, %v2712
    %v3568 = vpack.c.b16 %v2732, %v2713
    %v3569 = vpack.c.b16 %v2733, %v2714
    %v3570 = vpack.c.b16 %v2734, %v2715
    %v3571 = vpack.c.b16 %v2735, %v2716
    %v3572 = vpack.c.b16 %v2736, %v2717
    %v3573 = vpack.c.b16 %v2737, %v2718
    %v3574 = vpack.c.b16 %v2738, %v2719
    %v3575 = vpack.c.b16 %v2739, %v2720
    %v3576 = vpack.c.b16 %v2740, %v2721
    %v3577 = vpack.c.b16 %v2760, %v2741
    %v3578 = vpack.c.b16 %v2761, %v2742
    %v3579 = vpack.c.b16 %v2762, %v2743
    %v3580 = vpack.c.b16 %v2763, %v2744
    %v3581 = vpack.c.b16 %v2764, %v2745
    %v3582 = vpack.c.b16 %v2765, %v2746
    %v3583 = vpack.c.b16 %v2766, %v2747
    %v3584 = vpack.c.b16 %v2767, %v2748
    %v3585 = vpack.c.b16 %v2768, %v2749
    %v3586 = vpack.c.b16 %v2769, %v2750
    %v3587 = vpack.c.b16 %v2770, %v2751
    %v3588 = vpack.c.b16 %v2771, %v2752
    %v3589 = vpack.c.b16 %v2772, %v2753
    %v3590 = vpack.c.b16 %v2773, %v2754
    %v3591 = vpack.c.b16 %v2774, %v2755
    %v3592 = vpack.c.b16 %v2775, %v2756
    %v3593 = vpack.c.b16 %v2776, %v2757
    %v3594 = vpack.c.b16 %v2777, %v2758
    %v3595 = vpack.c.b16 %v2778, %v2759
    %v3596 = vpack.c.b16 %v2798, %v2779
    %v3597 = vpack.c.b16 %v2799, %v2780
    %v3598 = vpack.c.b16 %v2800, %v2781
    %v3599 = vpack.c.b16 %v2801, %v2782
    %v3600 = vpack.c.b16 %v2802, %v2783
    %v3601 = vpack.c.b16 %v2803, %v2784
    %v3602 = vpack.c.b16 %v2804, %v2785
    %v3603 = vpack.c.b16 %v2805, %v2786
    %v3604 = vpack.c.b16 %v2806, %v2787
    %v3605 = vpack.c.b16 %v2807, %v2788
    %v3606 = vpack.c.b16 %v2808, %v2789
    %v3607 = vpack.c.b16 %v2809, %v2790
    %v3608 = vpack.c.b16 %v2810, %v2791
    %v3609 = vpack.c.b16 %v2811, %v2792
    %v3610 = vpack.c.b16 %v2812, %v2793
    %v3611 = vpack.c.b16 %v2813, %v2794
    %v3612 = vpack.c.b16 %v2814, %v2795
    %v3613 = vpack.c.b16 %v2815, %v2796
    %v3614 = vpack.c.b16 %v2816, %v2797
    %v3615 = vpack.c.b16 %v2836, %v2817
    %v3616 = vpack.c.b16 %v2837, %v2818
    %v3617 = vpack.c.b16 %v2838, %v2819
    %v3618 = vpack.c.b16 %v2839, %v2820
    %v3619 = vpack.c.b16 %v2840, %v2821
    %v3620 = vpack.c.b16 %v2841, %v2822
    %v3621 = vpack.c.b16 %v2842, %v2823
    %v3622 = vpack.c.b16 %v2843, %v2824
    %v3623 = vpack.c.b16 %v2844, %v2825
    %v3624 = vpack.c.b16 %v2845, %v2826
    %v3625 = vpack.c.b16 %v2846, %v2827
    %v3626 = vpack.c.b16 %v2847, %v2828
    %v3627 = vpack.c.b16 %v2848, %v2829
    %v3628 = vpack.c.b16 %v2849, %v2830
    %v3629 = vpack.c.b16 %v2850, %v2831
    %v3630 = vpack.c.b16 %v2851, %v2832
    %v3631 = vpack.c.b16 %v2852, %v2833
    %v3632 = vpack.c.b16 %v2853, %v2834
    %v3633 = vpack.c.b16 %v2854, %v2835
    %v3634 = vpack.c.b16 %v2874, %v2855
    %v3635 = vpack.c.b16 %v2875, %v2856
    %v3636 = vpack.c.b16 %v2876, %v2857
    %v3637 = vpack.c.b16 %v2877, %v2858
    %v3638 = vpack.c.b16 %v2878, %v2859
    %v3639 = vpack.c.b16 %v2879, %v2860
    %v3640 = vpack.c.b16 %v2880, %v2861
    %v3641 = vpack.c.b16 %v2881, %v2862
    %v3642 = vpack.c.b16 %v2882, %v2863
    %v3643 = vpack.c.b16 %v2883, %v2864
    %v3644 = vpack.c.b16 %v2884, %v2865
    %v3645 = vpack.c.b16 %v2885, %v2866
    %v3646 = vpack.c.b16 %v2886, %v2867
    %v3647 = vpack.c.b16 %v2887, %v2868
    %v3648 = vpack.c.b16 %v2888, %v2869
    %v3649 = vpack.c.b16 %v2889, %v2870
    %v3650 = vpack.c.b16 %v2890, %v2871
    %v3651 = vpack.c.b16 %v2891, %v2872
    %v3652 = vpack.c.b16 %v2892, %v2873
    %v3653 = vpack.c.b16 %v2912, %v2893
    %v3654 = vpack.c.b16 %v2913, %v2894
    %v3655 = vpack.c.b16 %v2914, %v2895
    %v3656 = vpack.c.b16 %v2915, %v2896
    %v3657 = vpack.c.b16 %v2916, %v2897
    %v3658 = vpack.c.b16 %v2917, %v2898
    %v3659 = vpack.c.b16 %v2918, %v2899
    %v3660 = vpack.c.b16 %v2919, %v2900
    %v3661 = vpack.c.b16 %v2920, %v2901
    %v3662 = vpack.c.b16 %v2921, %v2902
    %v3663 = vpack.c.b16 %v2922, %v2903
    %v3664 = vpack.c.b16 %v2923, %v2904
    %v3665 = vpack.c.b16 %v2924, %v2905
    %v3666 = vpack.c.b16 %v2925, %v2906
    %v3667 = vpack.c.b16 %v2926, %v2907
    %v3668 = vpack.c.b16 %v2927, %v2908
    %v3669 = vpack.c.b16 %v2928, %v2909
    %v3670 = vpack.c.b16 %v2929, %v2910
    %v3671 = vpack.c.b16 %v2930, %v2911
    %v3672 = vpack.c.b16 %v2950, %v2931
    %v3673 = vpack.c.b16 %v2951, %v2932
    %v3674 = vpack.c.b16 %v2952, %v2933
    %v3675 = vpack.c.b16 %v2953, %v2934
    %v3676 = vpack.c.b16 %v2954, %v2935
    %v3677 = vpack.c.b16 %v2955, %v2936
    %v3678 = vpack.c.b16 %v2956, %v2937
    %v3679 = vpack.c.b16 %v2957, %v2938
    %v3680 = vpack.c.b16 %v2958, %v2939
    %v3681 = vpack.c.b16 %v2959, %v2940
    %v3682 = vpack.c.b16 %v2960, %v2941
    %v3683 = vpack.c.b16 %v2961, %v2942
    %v3684 = vpack.c.b16 %v2962, %v2943
    %v3685 = vpack.c.b16 %v2963, %v2944
    %v3686 = vpack.c.b16 %v2964, %v2945
    %v3687 = vpack.c.b16 %v2965, %v2946
    %v3688 = vpack.c.b16 %v2966, %v2947
    %v3689 = vpack.c.b16 %v2967, %v2948
    %v3690 = vpack.c.b16 %v2968, %v2949
    %v3691 = vpack.c.b16 %v2988, %v2969
    %v3692 = vpack.c.b16 %v2989, %v2970
    %v3693 = vpack.c.b16 %v2990, %v2971
    %v3694 = vpack.c.b16 %v2991, %v2972
    %v3695 = vpack.c.b16 %v2992, %v2973
    %v3696 = vpack.c.b16 %v2993, %v2974
    %v3697 = vpack.c.b16 %v2994, %v2975
    %v3698 = vpack.c.b16 %v2995, %v2976
    %v3699 = vpack.c.b16 %v2996, %v2977
    %v3700 = vpack.c.b16 %v2997, %v2978
    %v3701 = vpack.c.b16 %v2998, %v2979
    %v3702 = vpack.c.b16 %v2999, %v2980
    %v3703 = vpack.c.b16 %v3000, %v2981
    %v3704 = vpack.c.b16 %v3001, %v2982
    %v3705 = vpack.c.b16 %v3002, %v2983
    %v3706 = vpack.c.b16 %v3003, %v2984
    %v3707 = vpack.c.b16 %v3004, %v2985
    %v3708 = vpack.c.b16 %v3005, %v2986
    %v3709 = vpack.c.b16 %v3006, %v2987
    %v3710 = vpack.c.b16 %v3026, %v3007
    %v3711 = vpack.c.b16 %v3027, %v3008
    %v3712 = vpack.c.b16 %v3028, %v3009
    %v3713 = vpack.c.b16 %v3029, %v3010
    %v3714 = vpack.c.b16 %v3030, %v3011
    %v3715 = vpack.c.b16 %v3031, %v3012
    %v3716 = vpack.c.b16 %v3032, %v3013
    %v3717 = vpack.c.b16 %v3033, %v3014
    %v3718 = vpack.c.b16 %v3034, %v3015
    %v3719 = vpack.c.b16 %v3035, %v3016
    %v3720 = vpack.c.b16 %v3036, %v3017
    %v3721 = vpack.c.b16 %v3037, %v3018
    %v3722 = vpack.c.b16 %v3038, %v3019
    %v3723 = vpack.c.b16 %v3039, %v3020
    %v3724 = vpack.c.b16 %v3040, %v3021
    %v3725 = vpack.c.b16 %v3041, %v3022
    %v3726 = vpack.c.b16 %v3042, %v3023
    %v3727 = vpack.c.b16 %v3043, %v3024
    %v3728 = vpack.c.b16 %v3044, %v3025
    %v3729 = vpack.c.b16 %v3064, %v3045
    %v3730 = vpack.c.b16 %v3065, %v3046
    %v3731 = vpack.c.b16 %v3066, %v3047
    %v3732 = vpack.c.b16 %v3067, %v3048
    %v3733 = vpack.c.b16 %v3068, %v3049
    %v3734 = vpack.c.b16 %v3069, %v3050
    %v3735 = vpack.c.b16 %v3070, %v3051
    %v3736 = vpack.c.b16 %v3071, %v3052
    %v3737 = vpack.c.b16 %v3072, %v3053
    %v3738 = vpack.c.b16 %v3073, %v3054
    %v3739 = vpack.c.b16 %v3074, %v3055
    %v3740 = vpack.c.b16 %v3075, %v3056
    %v3741 = vpack.c.b16 %v3076, %v3057
    %v3742 = vpack.c.b16 %v3077, %v3058
    %v3743 = vpack.c.b16 %v3078, %v3059
    %v3744 = vpack.c.b16 %v3079, %v3060
    %v3745 = vpack.c.b16 %v3080, %v3061
    %v3746 = vpack.c.b16 %v3081, %v3062
    %v3747 = vpack.c.b16 %v3082, %v3063
    %v3748 = vpack.c.b16 %v3102, %v3083
    %v3749 = vpack.c.b16 %v3103, %v3084
    %v3750 = vpack.c.b16 %v3104, %v3085
    %v3751 = vpack.c.b16 %v3105, %v3086
    %v3752 = vpack.c.b16 %v3106, %v3087
    %v3753 = vpack.c.b16 %v3107, %v3088
    %v3754 = vpack.c.b16 %v3108, %v3089
    %v3755 = vpack.c.b16 %v3109, %v3090
    %v3756 = vpack.c.b16 %v3110, %v3091
    %v3757 = vpack.c.b16 %v3111, %v3092
    %v3758 = vpack.c.b16 %v3112, %v3093
    %v3759 = vpack.c.b16 %v3113, %v3094
    %v3760 = vpack.c.b16 %v3114, %v3095
    %v3761 = vpack.c.b16 %v3115, %v3096
    %v3762 = vpack.c.b16 %v3116, %v3097
    %v3763 = vpack.c.b16 %v3117, %v3098
    %v3764 = vpack.c.b16 %v3118, %v3099
    %v3765 = vpack.c.b16 %v3119, %v3100
    %v3766 = vpack.c.b16 %v3120, %v3101
    %v3767 = vpack.c.b16 %v3140, %v3121
    %v3768 = vpack.c.b16 %v3141, %v3122
    %v3769 = vpack.c.b16 %v3142, %v3123
    %v3770 = vpack.c.b16 %v3143, %v3124
    %v3771 = vpack.c.b16 %v3144, %v3125
    %v3772 = vpack.c.b16 %v3145, %v3126
    %v3773 = vpack.c.b16 %v3146, %v3127
    %v3774 = vpack.c.b16 %v3147, %v3128
    %v3775 = vpack.c.b16 %v3148, %v3129
    %v3776 = vpack.c.b16 %v3149, %v3130
    %v3777 = vpack.c.b16 %v3150, %v3131
    %v3778 = vpack.c.b16 %v3151, %v3132
    %v3779 = vpack.c.b16 %v3152, %v3133
    %v3780 = vpack.c.b16 %v3153, %v3134
    %v3781 = vpack.c.b16 %v3154, %v3135
    %v3782 = vpack.c.b16 %v3155, %v3136
    %v3783 = vpack.c.b16 %v3156, %v3137
    %v3784 = vpack.c.b16 %v3157, %v3138
    %v3785 = vpack.c.b16 %v3158, %v3139
    %v3786 = vpack.c.b16 %v3178, %v3159
    %v3787 = vpack.c.b16 %v3179, %v3160
    %v3788 = vpack.c.b16 %v3180, %v3161
    %v3789 = vpack.c.b16 %v3181, %v3162
    %v3790 = vpack.c.b16 %v3182, %v3163
    %v3791 = vpack.c.b16 %v3183, %v3164
    %v3792 = vpack.c.b16 %v3184, %v3165
    %v3793 = vpack.c.b16 %v3185, %v3166
    %v3794 = vpack.c.b16 %v3186, %v3167
    %v3795 = vpack.c.b16 %v3187, %v3168
    %v3796 = vpack.c.b16 %v3188, %v3169
    %v3797 = vpack.c.b16 %v3189, %v3170
    %v3798 = vpack.c.b16 %v3190, %v3171
    %v3799 = vpack.c.b16 %v3191, %v3172
    %v3800 = vpack.c.b16 %v3192, %v3173
    %v3801 = vpack.c.b16 %v3193, %v3174
    %v3802 = vpack.c.b16 %v3194, %v3175
    %v3803 = vpack.c.b16 %v3195, %v3176
    %v3804 = vpack.c.b16 %v3196, %v3177
    %4413 = vmatpush.bf16.msra.mxu0 %v3330
    %4414 = vmatpush.bf16.msra.mxu0 %v3311
    %4415 = vmatpush.bf16.msra.mxu0 %v3292
    %4416 = vmatpush.bf16.msra.mxu0 %v3273
    %4417 = vmatpush.bf16.msra.mxu0 %v3254
    %4418 = vmatpush.bf16.msra.mxu0 %v3235
    %4419 = vmatpush.bf16.msra.mxu0 %v3216
    %4420 = vmatpush.bf16.msra.mxu0 %v3197
    %4421 = vmatmul.bf16.gmra.mxu0 %v697
    %v4422 = vpop.f32.mrf.mxu0
    %v4423 = vadd.f32 0.0, %v4422
    %v4424 = vpop.f32.mrf.mxu0
    %4425 = vdwg.mxu0
    %4426 = vmatpush.bf16.msra.mxu0 %v3482
    %4427 = vmatpush.bf16.msra.mxu0 %v3463
    %4428 = vmatpush.bf16.msra.mxu0 %v3444
    %4429 = vmatpush.bf16.msra.mxu0 %v3425
    %4430 = vmatpush.bf16.msra.mxu0 %v3406
    %4431 = vmatpush.bf16.msra.mxu0 %v3387
    %4432 = vmatpush.bf16.msra.mxu0 %v3368
    %4433 = vmatpush.bf16.msra.mxu0 %v3349
    %4434 = vmatmul.bf16.gmra.mxu0 %v698
    %v4435 = vpop.f32.mrf.mxu0
    %v4436 = vadd.f32 %v4423, %v4435
    %v4437 = vpop.f32.mrf.mxu0
    %4438 = vdwg.mxu0
    %4439 = vmatpush.bf16.msra.mxu0 %v3634
    %4440 = vmatpush.bf16.msra.mxu0 %v3615
    %4441 = vmatpush.bf16.msra.mxu0 %v3596
    %4442 = vmatpush.bf16.msra.mxu0 %v3577
    %4443 = vmatpush.bf16.msra.mxu0 %v3558
    %4444 = vmatpush.bf16.msra.mxu0 %v3539
    %4445 = vmatpush.bf16.msra.mxu0 %v3520
    %4446 = vmatpush.bf16.msra.mxu0 %v3501
    %4447 = vmatmul.bf16.gmra.mxu0 %v699
    %v4448 = vpop.f32.mrf.mxu0
    %v4449 = vadd.f32 %v4436, %v4448
    %v4450 = vpop.f32.mrf.mxu0
    %4451 = vdwg.mxu0
    %4452 = vmatpush.bf16.msra.mxu0 %v3786
    %4453 = vmatpush.bf16.msra.mxu0 %v3767
    %4454 = vmatpush.bf16.msra.mxu0 %v3748
    %4455 = vmatpush.bf16.msra.mxu0 %v3729
    %4456 = vmatpush.bf16.msra.mxu0 %v3710
    %4457 = vmatpush.bf16.msra.mxu0 %v3691
    %4458 = vmatpush.bf16.msra.mxu0 %v3672
    %4459 = vmatpush.bf16.msra.mxu0 %v3653
    %4460 = vmatmul.bf16.gmra.mxu0 %v700
    %v4461 = vpop.f32.mrf.mxu0
    %v4462 = vadd.f32 %v4449, %v4461
    %v4463 = vpop.f32.mrf.mxu0
    %4464 = vdwg.mxu0
    %4465 = vmatpush.bf16.msra.mxu0 %v3331
    %4466 = vmatpush.bf16.msra.mxu0 %v3312
    %4467 = vmatpush.bf16.msra.mxu0 %v3293
    %4468 = vmatpush.bf16.msra.mxu0 %v3274
    %4469 = vmatpush.bf16.msra.mxu0 %v3255
    %4470 = vmatpush.bf16.msra.mxu0 %v3236
    %4471 = vmatpush.bf16.msra.mxu0 %v3217
    %4472 = vmatpush.bf16.msra.mxu0 %v3198
    %4473 = vmatmul.bf16.gmra.mxu0 %v697
    %v4474 = vpop.f32.mrf.mxu0
    %v4475 = vadd.f32 0.0, %v4474
    %v4476 = vpop.f32.mrf.mxu0
    %4477 = vdwg.mxu0
    %4478 = vmatpush.bf16.msra.mxu0 %v3483
    %4479 = vmatpush.bf16.msra.mxu0 %v3464
    %4480 = vmatpush.bf16.msra.mxu0 %v3445
    %4481 = vmatpush.bf16.msra.mxu0 %v3426
    %4482 = vmatpush.bf16.msra.mxu0 %v3407
    %4483 = vmatpush.bf16.msra.mxu0 %v3388
    %4484 = vmatpush.bf16.msra.mxu0 %v3369
    %4485 = vmatpush.bf16.msra.mxu0 %v3350
    %4486 = vmatmul.bf16.gmra.mxu0 %v698
    %v4487 = vpop.f32.mrf.mxu0
    %v4488 = vadd.f32 %v4475, %v4487
    %v4489 = vpop.f32.mrf.mxu0
    %4490 = vdwg.mxu0
    %4491 = vmatpush.bf16.msra.mxu0 %v3635
    %4492 = vmatpush.bf16.msra.mxu0 %v3616
    %4493 = vmatpush.bf16.msra.mxu0 %v3597
    %4494 = vmatpush.bf16.msra.mxu0 %v3578
    %4495 = vmatpush.bf16.msra.mxu0 %v3559
    %4496 = vmatpush.bf16.msra.mxu0 %v3540
    %4497 = vmatpush.bf16.msra.mxu0 %v3521
    %4498 = vmatpush.bf16.msra.mxu0 %v3502
    %4499 = vmatmul.bf16.gmra.mxu0 %v699
    %v4500 = vpop.f32.mrf.mxu0
    %v4501 = vadd.f32 %v4488, %v4500
    %v4502 = vpop.f32.mrf.mxu0
    %4503 = vdwg.mxu0
    %4504 = vmatpush.bf16.msra.mxu0 %v3787
    %4505 = vmatpush.bf16.msra.mxu0 %v3768
    %4506 = vmatpush.bf16.msra.mxu0 %v3749
    %4507 = vmatpush.bf16.msra.mxu0 %v3730
    %4508 = vmatpush.bf16.msra.mxu0 %v3711
    %4509 = vmatpush.bf16.msra.mxu0 %v3692
    %4510 = vmatpush.bf16.msra.mxu0 %v3673
    %4511 = vmatpush.bf16.msra.mxu0 %v3654
    %4512 = vmatmul.bf16.gmra.mxu0 %v700
    %v4513 = vpop.f32.mrf.mxu0
    %v4514 = vadd.f32 %v4501, %v4513
    %v4515 = vpop.f32.mrf.mxu0
    %4516 = vdwg.mxu0
    %4517 = vmatpush.bf16.msra.mxu0 %v3332
    %4518 = vmatpush.bf16.msra.mxu0 %v3313
    %4519 = vmatpush.bf16.msra.mxu0 %v3294
    %4520 = vmatpush.bf16.msra.mxu0 %v3275
    %4521 = vmatpush.bf16.msra.mxu0 %v3256
    %4522 = vmatpush.bf16.msra.mxu0 %v3237
    %4523 = vmatpush.bf16.msra.mxu0 %v3218
    %4524 = vmatpush.bf16.msra.mxu0 %v3199
    %4525 = vmatmul.bf16.gmra.mxu0 %v697
    %v4526 = vpop.f32.mrf.mxu0
    %v4527 = vadd.f32 0.0, %v4526
    %v4528 = vpop.f32.mrf.mxu0
    %4529 = vdwg.mxu0
    %4530 = vmatpush.bf16.msra.mxu0 %v3484
    %4531 = vmatpush.bf16.msra.mxu0 %v3465
    %4532 = vmatpush.bf16.msra.mxu0 %v3446
    %4533 = vmatpush.bf16.msra.mxu0 %v3427
    %4534 = vmatpush.bf16.msra.mxu0 %v3408
    %4535 = vmatpush.bf16.msra.mxu0 %v3389
    %4536 = vmatpush.bf16.msra.mxu0 %v3370
    %4537 = vmatpush.bf16.msra.mxu0 %v3351
    %4538 = vmatmul.bf16.gmra.mxu0 %v698
    %v4539 = vpop.f32.mrf.mxu0
    %v4540 = vadd.f32 %v4527, %v4539
    %v4541 = vpop.f32.mrf.mxu0
    %4542 = vdwg.mxu0
    %4543 = vmatpush.bf16.msra.mxu0 %v3636
    %4544 = vmatpush.bf16.msra.mxu0 %v3617
    %4545 = vmatpush.bf16.msra.mxu0 %v3598
    %4546 = vmatpush.bf16.msra.mxu0 %v3579
    %4547 = vmatpush.bf16.msra.mxu0 %v3560
    %4548 = vmatpush.bf16.msra.mxu0 %v3541
    %4549 = vmatpush.bf16.msra.mxu0 %v3522
    %4550 = vmatpush.bf16.msra.mxu0 %v3503
    %4551 = vmatmul.bf16.gmra.mxu0 %v699
    %v4552 = vpop.f32.mrf.mxu0
    %v4553 = vadd.f32 %v4540, %v4552
    %v4554 = vpop.f32.mrf.mxu0
    %4555 = vdwg.mxu0
    %4556 = vmatpush.bf16.msra.mxu0 %v3788
    %4557 = vmatpush.bf16.msra.mxu0 %v3769
    %4558 = vmatpush.bf16.msra.mxu0 %v3750
    %4559 = vmatpush.bf16.msra.mxu0 %v3731
    %4560 = vmatpush.bf16.msra.mxu0 %v3712
    %4561 = vmatpush.bf16.msra.mxu0 %v3693
    %4562 = vmatpush.bf16.msra.mxu0 %v3674
    %4563 = vmatpush.bf16.msra.mxu0 %v3655
    %4564 = vmatmul.bf16.gmra.mxu0 %v700
    %v4565 = vpop.f32.mrf.mxu0
    %v4566 = vadd.f32 %v4553, %v4565
    %v4567 = vpop.f32.mrf.mxu0
    %4568 = vdwg.mxu0
    %4569 = vmatpush.bf16.msra.mxu0 %v3333
    %4570 = vmatpush.bf16.msra.mxu0 %v3314
    %4571 = vmatpush.bf16.msra.mxu0 %v3295
    %4572 = vmatpush.bf16.msra.mxu0 %v3276
    %4573 = vmatpush.bf16.msra.mxu0 %v3257
    %4574 = vmatpush.bf16.msra.mxu0 %v3238
    %4575 = vmatpush.bf16.msra.mxu0 %v3219
    %4576 = vmatpush.bf16.msra.mxu0 %v3200
    %4577 = vmatmul.bf16.gmra.mxu0 %v697
    %v4578 = vpop.f32.mrf.mxu0
    %v4579 = vadd.f32 0.0, %v4578
    %v4580 = vpop.f32.mrf.mxu0
    %4581 = vdwg.mxu0
    %4582 = vmatpush.bf16.msra.mxu0 %v3485
    %4583 = vmatpush.bf16.msra.mxu0 %v3466
    %4584 = vmatpush.bf16.msra.mxu0 %v3447
    %4585 = vmatpush.bf16.msra.mxu0 %v3428
    %4586 = vmatpush.bf16.msra.mxu0 %v3409
    %4587 = vmatpush.bf16.msra.mxu0 %v3390
    %4588 = vmatpush.bf16.msra.mxu0 %v3371
    %4589 = vmatpush.bf16.msra.mxu0 %v3352
    %4590 = vmatmul.bf16.gmra.mxu0 %v698
    %v4591 = vpop.f32.mrf.mxu0
    %v4592 = vadd.f32 %v4579, %v4591
    %v4593 = vpop.f32.mrf.mxu0
    %4594 = vdwg.mxu0
    %4595 = vmatpush.bf16.msra.mxu0 %v3637
    %4596 = vmatpush.bf16.msra.mxu0 %v3618
    %4597 = vmatpush.bf16.msra.mxu0 %v3599
    %4598 = vmatpush.bf16.msra.mxu0 %v3580
    %4599 = vmatpush.bf16.msra.mxu0 %v3561
    %4600 = vmatpush.bf16.msra.mxu0 %v3542
    %4601 = vmatpush.bf16.msra.mxu0 %v3523
    %4602 = vmatpush.bf16.msra.mxu0 %v3504
    %4603 = vmatmul.bf16.gmra.mxu0 %v699
    %v4604 = vpop.f32.mrf.mxu0
    %v4605 = vadd.f32 %v4592, %v4604
    %v4606 = vpop.f32.mrf.mxu0
    %4607 = vdwg.mxu0
    %4608 = vmatpush.bf16.msra.mxu0 %v3789
    %4609 = vmatpush.bf16.msra.mxu0 %v3770
    %4610 = vmatpush.bf16.msra.mxu0 %v3751
    %4611 = vmatpush.bf16.msra.mxu0 %v3732
    %4612 = vmatpush.bf16.msra.mxu0 %v3713
    %4613 = vmatpush.bf16.msra.mxu0 %v3694
    %4614 = vmatpush.bf16.msra.mxu0 %v3675
    %4615 = vmatpush.bf16.msra.mxu0 %v3656
    %4616 = vmatmul.bf16.gmra.mxu0 %v700
    %v4617 = vpop.f32.mrf.mxu0
    %v4618 = vadd.f32 %v4605, %v4617
    %v4619 = vpop.f32.mrf.mxu0
    %4620 = vdwg.mxu0
    %4621 = vmatpush.bf16.msra.mxu0 %v3334
    %4622 = vmatpush.bf16.msra.mxu0 %v3315
    %4623 = vmatpush.bf16.msra.mxu0 %v3296
    %4624 = vmatpush.bf16.msra.mxu0 %v3277
    %4625 = vmatpush.bf16.msra.mxu0 %v3258
    %4626 = vmatpush.bf16.msra.mxu0 %v3239
    %4627 = vmatpush.bf16.msra.mxu0 %v3220
    %4628 = vmatpush.bf16.msra.mxu0 %v3201
    %4629 = vmatmul.bf16.gmra.mxu0 %v697
    %v4630 = vpop.f32.mrf.mxu0
    %v4631 = vadd.f32 0.0, %v4630
    %v4632 = vpop.f32.mrf.mxu0
    %4633 = vdwg.mxu0
    %4634 = vmatpush.bf16.msra.mxu0 %v3486
    %4635 = vmatpush.bf16.msra.mxu0 %v3467
    %4636 = vmatpush.bf16.msra.mxu0 %v3448
    %4637 = vmatpush.bf16.msra.mxu0 %v3429
    %4638 = vmatpush.bf16.msra.mxu0 %v3410
    %4639 = vmatpush.bf16.msra.mxu0 %v3391
    %4640 = vmatpush.bf16.msra.mxu0 %v3372
    %4641 = vmatpush.bf16.msra.mxu0 %v3353
    %4642 = vmatmul.bf16.gmra.mxu0 %v698
    %v4643 = vpop.f32.mrf.mxu0
    %v4644 = vadd.f32 %v4631, %v4643
    %v4645 = vpop.f32.mrf.mxu0
    %4646 = vdwg.mxu0
    %4647 = vmatpush.bf16.msra.mxu0 %v3638
    %4648 = vmatpush.bf16.msra.mxu0 %v3619
    %4649 = vmatpush.bf16.msra.mxu0 %v3600
    %4650 = vmatpush.bf16.msra.mxu0 %v3581
    %4651 = vmatpush.bf16.msra.mxu0 %v3562
    %4652 = vmatpush.bf16.msra.mxu0 %v3543
    %4653 = vmatpush.bf16.msra.mxu0 %v3524
    %4654 = vmatpush.bf16.msra.mxu0 %v3505
    %4655 = vmatmul.bf16.gmra.mxu0 %v699
    %v4656 = vpop.f32.mrf.mxu0
    %v4657 = vadd.f32 %v4644, %v4656
    %v4658 = vpop.f32.mrf.mxu0
    %4659 = vdwg.mxu0
    %4660 = vmatpush.bf16.msra.mxu0 %v3790
    %4661 = vmatpush.bf16.msra.mxu0 %v3771
    %4662 = vmatpush.bf16.msra.mxu0 %v3752
    %4663 = vmatpush.bf16.msra.mxu0 %v3733
    %4664 = vmatpush.bf16.msra.mxu0 %v3714
    %4665 = vmatpush.bf16.msra.mxu0 %v3695
    %4666 = vmatpush.bf16.msra.mxu0 %v3676
    %4667 = vmatpush.bf16.msra.mxu0 %v3657
    %4668 = vmatmul.bf16.gmra.mxu0 %v700
    %v4669 = vpop.f32.mrf.mxu0
    %v4670 = vadd.f32 %v4657, %v4669
    %v4671 = vpop.f32.mrf.mxu0
    %4672 = vdwg.mxu0
    %4673 = vmatpush.bf16.msra.mxu0 %v3335
    %4674 = vmatpush.bf16.msra.mxu0 %v3316
    %4675 = vmatpush.bf16.msra.mxu0 %v3297
    %4676 = vmatpush.bf16.msra.mxu0 %v3278
    %4677 = vmatpush.bf16.msra.mxu0 %v3259
    %4678 = vmatpush.bf16.msra.mxu0 %v3240
    %4679 = vmatpush.bf16.msra.mxu0 %v3221
    %4680 = vmatpush.bf16.msra.mxu0 %v3202
    %4681 = vmatmul.bf16.gmra.mxu0 %v697
    %v4682 = vpop.f32.mrf.mxu0
    %v4683 = vadd.f32 0.0, %v4682
    %v4684 = vpop.f32.mrf.mxu0
    %4685 = vdwg.mxu0
    %4686 = vmatpush.bf16.msra.mxu0 %v3487
    %4687 = vmatpush.bf16.msra.mxu0 %v3468
    %4688 = vmatpush.bf16.msra.mxu0 %v3449
    %4689 = vmatpush.bf16.msra.mxu0 %v3430
    %4690 = vmatpush.bf16.msra.mxu0 %v3411
    %4691 = vmatpush.bf16.msra.mxu0 %v3392
    %4692 = vmatpush.bf16.msra.mxu0 %v3373
    %4693 = vmatpush.bf16.msra.mxu0 %v3354
    %4694 = vmatmul.bf16.gmra.mxu0 %v698
    %v4695 = vpop.f32.mrf.mxu0
    %v4696 = vadd.f32 %v4683, %v4695
    %v4697 = vpop.f32.mrf.mxu0
    %4698 = vdwg.mxu0
    %4699 = vmatpush.bf16.msra.mxu0 %v3639
    %4700 = vmatpush.bf16.msra.mxu0 %v3620
    %4701 = vmatpush.bf16.msra.mxu0 %v3601
    %4702 = vmatpush.bf16.msra.mxu0 %v3582
    %4703 = vmatpush.bf16.msra.mxu0 %v3563
    %4704 = vmatpush.bf16.msra.mxu0 %v3544
    %4705 = vmatpush.bf16.msra.mxu0 %v3525
    %4706 = vmatpush.bf16.msra.mxu0 %v3506
    %4707 = vmatmul.bf16.gmra.mxu0 %v699
    %v4708 = vpop.f32.mrf.mxu0
    %v4709 = vadd.f32 %v4696, %v4708
    %v4710 = vpop.f32.mrf.mxu0
    %4711 = vdwg.mxu0
    %4712 = vmatpush.bf16.msra.mxu0 %v3791
    %4713 = vmatpush.bf16.msra.mxu0 %v3772
    %4714 = vmatpush.bf16.msra.mxu0 %v3753
    %4715 = vmatpush.bf16.msra.mxu0 %v3734
    %4716 = vmatpush.bf16.msra.mxu0 %v3715
    %4717 = vmatpush.bf16.msra.mxu0 %v3696
    %4718 = vmatpush.bf16.msra.mxu0 %v3677
    %4719 = vmatpush.bf16.msra.mxu0 %v3658
    %4720 = vmatmul.bf16.gmra.mxu0 %v700
    %v4721 = vpop.f32.mrf.mxu0
    %v4722 = vadd.f32 %v4709, %v4721
    %v4723 = vpop.f32.mrf.mxu0
    %4724 = vdwg.mxu0
    %4725 = vmatpush.bf16.msra.mxu0 %v3336
    %4726 = vmatpush.bf16.msra.mxu0 %v3317
    %4727 = vmatpush.bf16.msra.mxu0 %v3298
    %4728 = vmatpush.bf16.msra.mxu0 %v3279
    %4729 = vmatpush.bf16.msra.mxu0 %v3260
    %4730 = vmatpush.bf16.msra.mxu0 %v3241
    %4731 = vmatpush.bf16.msra.mxu0 %v3222
    %4732 = vmatpush.bf16.msra.mxu0 %v3203
    %4733 = vmatmul.bf16.gmra.mxu0 %v697
    %v4734 = vpop.f32.mrf.mxu0
    %v4735 = vadd.f32 0.0, %v4734
    %v4736 = vpop.f32.mrf.mxu0
    %4737 = vdwg.mxu0
    %4738 = vmatpush.bf16.msra.mxu0 %v3488
    %4739 = vmatpush.bf16.msra.mxu0 %v3469
    %4740 = vmatpush.bf16.msra.mxu0 %v3450
    %4741 = vmatpush.bf16.msra.mxu0 %v3431
    %4742 = vmatpush.bf16.msra.mxu0 %v3412
    %4743 = vmatpush.bf16.msra.mxu0 %v3393
    %4744 = vmatpush.bf16.msra.mxu0 %v3374
    %4745 = vmatpush.bf16.msra.mxu0 %v3355
    %4746 = vmatmul.bf16.gmra.mxu0 %v698
    %v4747 = vpop.f32.mrf.mxu0
    %v4748 = vadd.f32 %v4735, %v4747
    %v4749 = vpop.f32.mrf.mxu0
    %4750 = vdwg.mxu0
    %4751 = vmatpush.bf16.msra.mxu0 %v3640
    %4752 = vmatpush.bf16.msra.mxu0 %v3621
    %4753 = vmatpush.bf16.msra.mxu0 %v3602
    %4754 = vmatpush.bf16.msra.mxu0 %v3583
    %4755 = vmatpush.bf16.msra.mxu0 %v3564
    %4756 = vmatpush.bf16.msra.mxu0 %v3545
    %4757 = vmatpush.bf16.msra.mxu0 %v3526
    %4758 = vmatpush.bf16.msra.mxu0 %v3507
    %4759 = vmatmul.bf16.gmra.mxu0 %v699
    %v4760 = vpop.f32.mrf.mxu0
    %v4761 = vadd.f32 %v4748, %v4760
    %v4762 = vpop.f32.mrf.mxu0
    %4763 = vdwg.mxu0
    %4764 = vmatpush.bf16.msra.mxu0 %v3792
    %4765 = vmatpush.bf16.msra.mxu0 %v3773
    %4766 = vmatpush.bf16.msra.mxu0 %v3754
    %4767 = vmatpush.bf16.msra.mxu0 %v3735
    %4768 = vmatpush.bf16.msra.mxu0 %v3716
    %4769 = vmatpush.bf16.msra.mxu0 %v3697
    %4770 = vmatpush.bf16.msra.mxu0 %v3678
    %4771 = vmatpush.bf16.msra.mxu0 %v3659
    %4772 = vmatmul.bf16.gmra.mxu0 %v700
    %v4773 = vpop.f32.mrf.mxu0
    %v4774 = vadd.f32 %v4761, %v4773
    %v4775 = vpop.f32.mrf.mxu0
    %4776 = vdwg.mxu0
    %4777 = vmatpush.bf16.msra.mxu0 %v3337
    %4778 = vmatpush.bf16.msra.mxu0 %v3318
    %4779 = vmatpush.bf16.msra.mxu0 %v3299
    %4780 = vmatpush.bf16.msra.mxu0 %v3280
    %4781 = vmatpush.bf16.msra.mxu0 %v3261
    %4782 = vmatpush.bf16.msra.mxu0 %v3242
    %4783 = vmatpush.bf16.msra.mxu0 %v3223
    %4784 = vmatpush.bf16.msra.mxu0 %v3204
    %4785 = vmatmul.bf16.gmra.mxu0 %v697
    %v4786 = vpop.f32.mrf.mxu0
    %v4787 = vadd.f32 0.0, %v4786
    %v4788 = vpop.f32.mrf.mxu0
    %4789 = vdwg.mxu0
    %4790 = vmatpush.bf16.msra.mxu0 %v3489
    %4791 = vmatpush.bf16.msra.mxu0 %v3470
    %4792 = vmatpush.bf16.msra.mxu0 %v3451
    %4793 = vmatpush.bf16.msra.mxu0 %v3432
    %4794 = vmatpush.bf16.msra.mxu0 %v3413
    %4795 = vmatpush.bf16.msra.mxu0 %v3394
    %4796 = vmatpush.bf16.msra.mxu0 %v3375
    %4797 = vmatpush.bf16.msra.mxu0 %v3356
    %4798 = vmatmul.bf16.gmra.mxu0 %v698
    %v4799 = vpop.f32.mrf.mxu0
    %v4800 = vadd.f32 %v4787, %v4799
    %v4801 = vpop.f32.mrf.mxu0
    %4802 = vdwg.mxu0
    %4803 = vmatpush.bf16.msra.mxu0 %v3641
    %4804 = vmatpush.bf16.msra.mxu0 %v3622
    %4805 = vmatpush.bf16.msra.mxu0 %v3603
    %4806 = vmatpush.bf16.msra.mxu0 %v3584
    %4807 = vmatpush.bf16.msra.mxu0 %v3565
    %4808 = vmatpush.bf16.msra.mxu0 %v3546
    %4809 = vmatpush.bf16.msra.mxu0 %v3527
    %4810 = vmatpush.bf16.msra.mxu0 %v3508
    %4811 = vmatmul.bf16.gmra.mxu0 %v699
    %v4812 = vpop.f32.mrf.mxu0
    %v4813 = vadd.f32 %v4800, %v4812
    %v4814 = vpop.f32.mrf.mxu0
    %4815 = vdwg.mxu0
    %4816 = vmatpush.bf16.msra.mxu0 %v3793
    %4817 = vmatpush.bf16.msra.mxu0 %v3774
    %4818 = vmatpush.bf16.msra.mxu0 %v3755
    %4819 = vmatpush.bf16.msra.mxu0 %v3736
    %4820 = vmatpush.bf16.msra.mxu0 %v3717
    %4821 = vmatpush.bf16.msra.mxu0 %v3698
    %4822 = vmatpush.bf16.msra.mxu0 %v3679
    %4823 = vmatpush.bf16.msra.mxu0 %v3660
    %4824 = vmatmul.bf16.gmra.mxu0 %v700
    %v4825 = vpop.f32.mrf.mxu0
    %v4826 = vadd.f32 %v4813, %v4825
    %v4827 = vpop.f32.mrf.mxu0
    %4828 = vdwg.mxu0
    %4829 = vmatpush.bf16.msra.mxu0 %v3338
    %4830 = vmatpush.bf16.msra.mxu0 %v3319
    %4831 = vmatpush.bf16.msra.mxu0 %v3300
    %4832 = vmatpush.bf16.msra.mxu0 %v3281
    %4833 = vmatpush.bf16.msra.mxu0 %v3262
    %4834 = vmatpush.bf16.msra.mxu0 %v3243
    %4835 = vmatpush.bf16.msra.mxu0 %v3224
    %4836 = vmatpush.bf16.msra.mxu0 %v3205
    %4837 = vmatmul.bf16.gmra.mxu0 %v697
    %v4838 = vpop.f32.mrf.mxu0
    %v4839 = vadd.f32 0.0, %v4838
    %v4840 = vpop.f32.mrf.mxu0
    %4841 = vdwg.mxu0
    %4842 = vmatpush.bf16.msra.mxu0 %v3490
    %4843 = vmatpush.bf16.msra.mxu0 %v3471
    %4844 = vmatpush.bf16.msra.mxu0 %v3452
    %4845 = vmatpush.bf16.msra.mxu0 %v3433
    %4846 = vmatpush.bf16.msra.mxu0 %v3414
    %4847 = vmatpush.bf16.msra.mxu0 %v3395
    %4848 = vmatpush.bf16.msra.mxu0 %v3376
    %4849 = vmatpush.bf16.msra.mxu0 %v3357
    %4850 = vmatmul.bf16.gmra.mxu0 %v698
    %v4851 = vpop.f32.mrf.mxu0
    %v4852 = vadd.f32 %v4839, %v4851
    %v4853 = vpop.f32.mrf.mxu0
    %4854 = vdwg.mxu0
    %4855 = vmatpush.bf16.msra.mxu0 %v3642
    %4856 = vmatpush.bf16.msra.mxu0 %v3623
    %4857 = vmatpush.bf16.msra.mxu0 %v3604
    %4858 = vmatpush.bf16.msra.mxu0 %v3585
    %4859 = vmatpush.bf16.msra.mxu0 %v3566
    %4860 = vmatpush.bf16.msra.mxu0 %v3547
    %4861 = vmatpush.bf16.msra.mxu0 %v3528
    %4862 = vmatpush.bf16.msra.mxu0 %v3509
    %4863 = vmatmul.bf16.gmra.mxu0 %v699
    %v4864 = vpop.f32.mrf.mxu0
    %v4865 = vadd.f32 %v4852, %v4864
    %v4866 = vpop.f32.mrf.mxu0
    %4867 = vdwg.mxu0
    %4868 = vmatpush.bf16.msra.mxu0 %v3794
    %4869 = vmatpush.bf16.msra.mxu0 %v3775
    %4870 = vmatpush.bf16.msra.mxu0 %v3756
    %4871 = vmatpush.bf16.msra.mxu0 %v3737
    %4872 = vmatpush.bf16.msra.mxu0 %v3718
    %4873 = vmatpush.bf16.msra.mxu0 %v3699
    %4874 = vmatpush.bf16.msra.mxu0 %v3680
    %4875 = vmatpush.bf16.msra.mxu0 %v3661
    %4876 = vmatmul.bf16.gmra.mxu0 %v700
    %v4877 = vpop.f32.mrf.mxu0
    %v4878 = vadd.f32 %v4865, %v4877
    %v4879 = vpop.f32.mrf.mxu0
    %4880 = vdwg.mxu0
    %4881 = vmatpush.bf16.msra.mxu0 %v3339
    %4882 = vmatpush.bf16.msra.mxu0 %v3320
    %4883 = vmatpush.bf16.msra.mxu0 %v3301
    %4884 = vmatpush.bf16.msra.mxu0 %v3282
    %4885 = vmatpush.bf16.msra.mxu0 %v3263
    %4886 = vmatpush.bf16.msra.mxu0 %v3244
    %4887 = vmatpush.bf16.msra.mxu0 %v3225
    %4888 = vmatpush.bf16.msra.mxu0 %v3206
    %4889 = vmatmul.bf16.gmra.mxu0 %v697
    %v4890 = vpop.f32.mrf.mxu0
    %v4891 = vadd.f32 0.0, %v4890
    %v4892 = vpop.f32.mrf.mxu0
    %4893 = vdwg.mxu0
    %4894 = vmatpush.bf16.msra.mxu0 %v3491
    %4895 = vmatpush.bf16.msra.mxu0 %v3472
    %4896 = vmatpush.bf16.msra.mxu0 %v3453
    %4897 = vmatpush.bf16.msra.mxu0 %v3434
    %4898 = vmatpush.bf16.msra.mxu0 %v3415
    %4899 = vmatpush.bf16.msra.mxu0 %v3396
    %4900 = vmatpush.bf16.msra.mxu0 %v3377
    %4901 = vmatpush.bf16.msra.mxu0 %v3358
    %4902 = vmatmul.bf16.gmra.mxu0 %v698
    %v4903 = vpop.f32.mrf.mxu0
    %v4904 = vadd.f32 %v4891, %v4903
    %v4905 = vpop.f32.mrf.mxu0
    %4906 = vdwg.mxu0
    %4907 = vmatpush.bf16.msra.mxu0 %v3643
    %4908 = vmatpush.bf16.msra.mxu0 %v3624
    %4909 = vmatpush.bf16.msra.mxu0 %v3605
    %4910 = vmatpush.bf16.msra.mxu0 %v3586
    %4911 = vmatpush.bf16.msra.mxu0 %v3567
    %4912 = vmatpush.bf16.msra.mxu0 %v3548
    %4913 = vmatpush.bf16.msra.mxu0 %v3529
    %4914 = vmatpush.bf16.msra.mxu0 %v3510
    %4915 = vmatmul.bf16.gmra.mxu0 %v699
    %v4916 = vpop.f32.mrf.mxu0
    %v4917 = vadd.f32 %v4904, %v4916
    %v4918 = vpop.f32.mrf.mxu0
    %4919 = vdwg.mxu0
    %4920 = vmatpush.bf16.msra.mxu0 %v3795
    %4921 = vmatpush.bf16.msra.mxu0 %v3776
    %4922 = vmatpush.bf16.msra.mxu0 %v3757
    %4923 = vmatpush.bf16.msra.mxu0 %v3738
    %4924 = vmatpush.bf16.msra.mxu0 %v3719
    %4925 = vmatpush.bf16.msra.mxu0 %v3700
    %4926 = vmatpush.bf16.msra.mxu0 %v3681
    %4927 = vmatpush.bf16.msra.mxu0 %v3662
    %4928 = vmatmul.bf16.gmra.mxu0 %v700
    %v4929 = vpop.f32.mrf.mxu0
    %v4930 = vadd.f32 %v4917, %v4929
    %v4931 = vpop.f32.mrf.mxu0
    %4932 = vdwg.mxu0
    %4933 = vmatpush.bf16.msra.mxu0 %v3340
    %4934 = vmatpush.bf16.msra.mxu0 %v3321
    %4935 = vmatpush.bf16.msra.mxu0 %v3302
    %4936 = vmatpush.bf16.msra.mxu0 %v3283
    %4937 = vmatpush.bf16.msra.mxu0 %v3264
    %4938 = vmatpush.bf16.msra.mxu0 %v3245
    %4939 = vmatpush.bf16.msra.mxu0 %v3226
    %4940 = vmatpush.bf16.msra.mxu0 %v3207
    %4941 = vmatmul.bf16.gmra.mxu0 %v697
    %v4942 = vpop.f32.mrf.mxu0
    %v4943 = vadd.f32 0.0, %v4942
    %v4944 = vpop.f32.mrf.mxu0
    %4945 = vdwg.mxu0
    %4946 = vmatpush.bf16.msra.mxu0 %v3492
    %4947 = vmatpush.bf16.msra.mxu0 %v3473
    %4948 = vmatpush.bf16.msra.mxu0 %v3454
    %4949 = vmatpush.bf16.msra.mxu0 %v3435
    %4950 = vmatpush.bf16.msra.mxu0 %v3416
    %4951 = vmatpush.bf16.msra.mxu0 %v3397
    %4952 = vmatpush.bf16.msra.mxu0 %v3378
    %4953 = vmatpush.bf16.msra.mxu0 %v3359
    %4954 = vmatmul.bf16.gmra.mxu0 %v698
    %v4955 = vpop.f32.mrf.mxu0
    %v4956 = vadd.f32 %v4943, %v4955
    %v4957 = vpop.f32.mrf.mxu0
    %4958 = vdwg.mxu0
    %4959 = vmatpush.bf16.msra.mxu0 %v3644
    %4960 = vmatpush.bf16.msra.mxu0 %v3625
    %4961 = vmatpush.bf16.msra.mxu0 %v3606
    %4962 = vmatpush.bf16.msra.mxu0 %v3587
    %4963 = vmatpush.bf16.msra.mxu0 %v3568
    %4964 = vmatpush.bf16.msra.mxu0 %v3549
    %4965 = vmatpush.bf16.msra.mxu0 %v3530
    %4966 = vmatpush.bf16.msra.mxu0 %v3511
    %4967 = vmatmul.bf16.gmra.mxu0 %v699
    %v4968 = vpop.f32.mrf.mxu0
    %v4969 = vadd.f32 %v4956, %v4968
    %v4970 = vpop.f32.mrf.mxu0
    %4971 = vdwg.mxu0
    %4972 = vmatpush.bf16.msra.mxu0 %v3796
    %4973 = vmatpush.bf16.msra.mxu0 %v3777
    %4974 = vmatpush.bf16.msra.mxu0 %v3758
    %4975 = vmatpush.bf16.msra.mxu0 %v3739
    %4976 = vmatpush.bf16.msra.mxu0 %v3720
    %4977 = vmatpush.bf16.msra.mxu0 %v3701
    %4978 = vmatpush.bf16.msra.mxu0 %v3682
    %4979 = vmatpush.bf16.msra.mxu0 %v3663
    %4980 = vmatmul.bf16.gmra.mxu0 %v700
    %v4981 = vpop.f32.mrf.mxu0
    %v4982 = vadd.f32 %v4969, %v4981
    %v4983 = vpop.f32.mrf.mxu0
    %4984 = vdwg.mxu0
    %4985 = vmatpush.bf16.msra.mxu0 %v3341
    %4986 = vmatpush.bf16.msra.mxu0 %v3322
    %4987 = vmatpush.bf16.msra.mxu0 %v3303
    %4988 = vmatpush.bf16.msra.mxu0 %v3284
    %4989 = vmatpush.bf16.msra.mxu0 %v3265
    %4990 = vmatpush.bf16.msra.mxu0 %v3246
    %4991 = vmatpush.bf16.msra.mxu0 %v3227
    %4992 = vmatpush.bf16.msra.mxu0 %v3208
    %4993 = vmatmul.bf16.gmra.mxu0 %v697
    %v4994 = vpop.f32.mrf.mxu0
    %v4995 = vadd.f32 0.0, %v4994
    %v4996 = vpop.f32.mrf.mxu0
    %4997 = vdwg.mxu0
    %4998 = vmatpush.bf16.msra.mxu0 %v3493
    %4999 = vmatpush.bf16.msra.mxu0 %v3474
    %5000 = vmatpush.bf16.msra.mxu0 %v3455
    %5001 = vmatpush.bf16.msra.mxu0 %v3436
    %5002 = vmatpush.bf16.msra.mxu0 %v3417
    %5003 = vmatpush.bf16.msra.mxu0 %v3398
    %5004 = vmatpush.bf16.msra.mxu0 %v3379
    %5005 = vmatpush.bf16.msra.mxu0 %v3360
    %5006 = vmatmul.bf16.gmra.mxu0 %v698
    %v5007 = vpop.f32.mrf.mxu0
    %v5008 = vadd.f32 %v4995, %v5007
    %v5009 = vpop.f32.mrf.mxu0
    %5010 = vdwg.mxu0
    %5011 = vmatpush.bf16.msra.mxu0 %v3645
    %5012 = vmatpush.bf16.msra.mxu0 %v3626
    %5013 = vmatpush.bf16.msra.mxu0 %v3607
    %5014 = vmatpush.bf16.msra.mxu0 %v3588
    %5015 = vmatpush.bf16.msra.mxu0 %v3569
    %5016 = vmatpush.bf16.msra.mxu0 %v3550
    %5017 = vmatpush.bf16.msra.mxu0 %v3531
    %5018 = vmatpush.bf16.msra.mxu0 %v3512
    %5019 = vmatmul.bf16.gmra.mxu0 %v699
    %v5020 = vpop.f32.mrf.mxu0
    %v5021 = vadd.f32 %v5008, %v5020
    %v5022 = vpop.f32.mrf.mxu0
    %5023 = vdwg.mxu0
    %5024 = vmatpush.bf16.msra.mxu0 %v3797
    %5025 = vmatpush.bf16.msra.mxu0 %v3778
    %5026 = vmatpush.bf16.msra.mxu0 %v3759
    %5027 = vmatpush.bf16.msra.mxu0 %v3740
    %5028 = vmatpush.bf16.msra.mxu0 %v3721
    %5029 = vmatpush.bf16.msra.mxu0 %v3702
    %5030 = vmatpush.bf16.msra.mxu0 %v3683
    %5031 = vmatpush.bf16.msra.mxu0 %v3664
    %5032 = vmatmul.bf16.gmra.mxu0 %v700
    %v5033 = vpop.f32.mrf.mxu0
    %v5034 = vadd.f32 %v5021, %v5033
    %v5035 = vpop.f32.mrf.mxu0
    %5036 = vdwg.mxu0
    %5037 = vmatpush.bf16.msra.mxu0 %v3342
    %5038 = vmatpush.bf16.msra.mxu0 %v3323
    %5039 = vmatpush.bf16.msra.mxu0 %v3304
    %5040 = vmatpush.bf16.msra.mxu0 %v3285
    %5041 = vmatpush.bf16.msra.mxu0 %v3266
    %5042 = vmatpush.bf16.msra.mxu0 %v3247
    %5043 = vmatpush.bf16.msra.mxu0 %v3228
    %5044 = vmatpush.bf16.msra.mxu0 %v3209
    %5045 = vmatmul.bf16.gmra.mxu0 %v697
    %v5046 = vpop.f32.mrf.mxu0
    %v5047 = vadd.f32 0.0, %v5046
    %v5048 = vpop.f32.mrf.mxu0
    %5049 = vdwg.mxu0
    %5050 = vmatpush.bf16.msra.mxu0 %v3494
    %5051 = vmatpush.bf16.msra.mxu0 %v3475
    %5052 = vmatpush.bf16.msra.mxu0 %v3456
    %5053 = vmatpush.bf16.msra.mxu0 %v3437
    %5054 = vmatpush.bf16.msra.mxu0 %v3418
    %5055 = vmatpush.bf16.msra.mxu0 %v3399
    %5056 = vmatpush.bf16.msra.mxu0 %v3380
    %5057 = vmatpush.bf16.msra.mxu0 %v3361
    %5058 = vmatmul.bf16.gmra.mxu0 %v698
    %v5059 = vpop.f32.mrf.mxu0
    %v5060 = vadd.f32 %v5047, %v5059
    %v5061 = vpop.f32.mrf.mxu0
    %5062 = vdwg.mxu0
    %5063 = vmatpush.bf16.msra.mxu0 %v3646
    %5064 = vmatpush.bf16.msra.mxu0 %v3627
    %5065 = vmatpush.bf16.msra.mxu0 %v3608
    %5066 = vmatpush.bf16.msra.mxu0 %v3589
    %5067 = vmatpush.bf16.msra.mxu0 %v3570
    %5068 = vmatpush.bf16.msra.mxu0 %v3551
    %5069 = vmatpush.bf16.msra.mxu0 %v3532
    %5070 = vmatpush.bf16.msra.mxu0 %v3513
    %5071 = vmatmul.bf16.gmra.mxu0 %v699
    %v5072 = vpop.f32.mrf.mxu0
    %v5073 = vadd.f32 %v5060, %v5072
    %v5074 = vpop.f32.mrf.mxu0
    %5075 = vdwg.mxu0
    %5076 = vmatpush.bf16.msra.mxu0 %v3798
    %5077 = vmatpush.bf16.msra.mxu0 %v3779
    %5078 = vmatpush.bf16.msra.mxu0 %v3760
    %5079 = vmatpush.bf16.msra.mxu0 %v3741
    %5080 = vmatpush.bf16.msra.mxu0 %v3722
    %5081 = vmatpush.bf16.msra.mxu0 %v3703
    %5082 = vmatpush.bf16.msra.mxu0 %v3684
    %5083 = vmatpush.bf16.msra.mxu0 %v3665
    %5084 = vmatmul.bf16.gmra.mxu0 %v700
    %v5085 = vpop.f32.mrf.mxu0
    %v5086 = vadd.f32 %v5073, %v5085
    %v5087 = vpop.f32.mrf.mxu0
    %5088 = vdwg.mxu0
    %5089 = vmatpush.bf16.msra.mxu0 %v3343
    %5090 = vmatpush.bf16.msra.mxu0 %v3324
    %5091 = vmatpush.bf16.msra.mxu0 %v3305
    %5092 = vmatpush.bf16.msra.mxu0 %v3286
    %5093 = vmatpush.bf16.msra.mxu0 %v3267
    %5094 = vmatpush.bf16.msra.mxu0 %v3248
    %5095 = vmatpush.bf16.msra.mxu0 %v3229
    %5096 = vmatpush.bf16.msra.mxu0 %v3210
    %5097 = vmatmul.bf16.gmra.mxu0 %v697
    %v5098 = vpop.f32.mrf.mxu0
    %v5099 = vadd.f32 0.0, %v5098
    %v5100 = vpop.f32.mrf.mxu0
    %5101 = vdwg.mxu0
    %5102 = vmatpush.bf16.msra.mxu0 %v3495
    %5103 = vmatpush.bf16.msra.mxu0 %v3476
    %5104 = vmatpush.bf16.msra.mxu0 %v3457
    %5105 = vmatpush.bf16.msra.mxu0 %v3438
    %5106 = vmatpush.bf16.msra.mxu0 %v3419
    %5107 = vmatpush.bf16.msra.mxu0 %v3400
    %5108 = vmatpush.bf16.msra.mxu0 %v3381
    %5109 = vmatpush.bf16.msra.mxu0 %v3362
    %5110 = vmatmul.bf16.gmra.mxu0 %v698
    %v5111 = vpop.f32.mrf.mxu0
    %v5112 = vadd.f32 %v5099, %v5111
    %v5113 = vpop.f32.mrf.mxu0
    %5114 = vdwg.mxu0
    %5115 = vmatpush.bf16.msra.mxu0 %v3647
    %5116 = vmatpush.bf16.msra.mxu0 %v3628
    %5117 = vmatpush.bf16.msra.mxu0 %v3609
    %5118 = vmatpush.bf16.msra.mxu0 %v3590
    %5119 = vmatpush.bf16.msra.mxu0 %v3571
    %5120 = vmatpush.bf16.msra.mxu0 %v3552
    %5121 = vmatpush.bf16.msra.mxu0 %v3533
    %5122 = vmatpush.bf16.msra.mxu0 %v3514
    %5123 = vmatmul.bf16.gmra.mxu0 %v699
    %v5124 = vpop.f32.mrf.mxu0
    %v5125 = vadd.f32 %v5112, %v5124
    %v5126 = vpop.f32.mrf.mxu0
    %5127 = vdwg.mxu0
    %5128 = vmatpush.bf16.msra.mxu0 %v3799
    %5129 = vmatpush.bf16.msra.mxu0 %v3780
    %5130 = vmatpush.bf16.msra.mxu0 %v3761
    %5131 = vmatpush.bf16.msra.mxu0 %v3742
    %5132 = vmatpush.bf16.msra.mxu0 %v3723
    %5133 = vmatpush.bf16.msra.mxu0 %v3704
    %5134 = vmatpush.bf16.msra.mxu0 %v3685
    %5135 = vmatpush.bf16.msra.mxu0 %v3666
    %5136 = vmatmul.bf16.gmra.mxu0 %v700
    %v5137 = vpop.f32.mrf.mxu0
    %v5138 = vadd.f32 %v5125, %v5137
    %v5139 = vpop.f32.mrf.mxu0
    %5140 = vdwg.mxu0
    %5141 = vmatpush.bf16.msra.mxu0 %v3344
    %5142 = vmatpush.bf16.msra.mxu0 %v3325
    %5143 = vmatpush.bf16.msra.mxu0 %v3306
    %5144 = vmatpush.bf16.msra.mxu0 %v3287
    %5145 = vmatpush.bf16.msra.mxu0 %v3268
    %5146 = vmatpush.bf16.msra.mxu0 %v3249
    %5147 = vmatpush.bf16.msra.mxu0 %v3230
    %5148 = vmatpush.bf16.msra.mxu0 %v3211
    %5149 = vmatmul.bf16.gmra.mxu0 %v697
    %v5150 = vpop.f32.mrf.mxu0
    %v5151 = vadd.f32 0.0, %v5150
    %v5152 = vpop.f32.mrf.mxu0
    %5153 = vdwg.mxu0
    %5154 = vmatpush.bf16.msra.mxu0 %v3496
    %5155 = vmatpush.bf16.msra.mxu0 %v3477
    %5156 = vmatpush.bf16.msra.mxu0 %v3458
    %5157 = vmatpush.bf16.msra.mxu0 %v3439
    %5158 = vmatpush.bf16.msra.mxu0 %v3420
    %5159 = vmatpush.bf16.msra.mxu0 %v3401
    %5160 = vmatpush.bf16.msra.mxu0 %v3382
    %5161 = vmatpush.bf16.msra.mxu0 %v3363
    %5162 = vmatmul.bf16.gmra.mxu0 %v698
    %v5163 = vpop.f32.mrf.mxu0
    %v5164 = vadd.f32 %v5151, %v5163
    %v5165 = vpop.f32.mrf.mxu0
    %5166 = vdwg.mxu0
    %5167 = vmatpush.bf16.msra.mxu0 %v3648
    %5168 = vmatpush.bf16.msra.mxu0 %v3629
    %5169 = vmatpush.bf16.msra.mxu0 %v3610
    %5170 = vmatpush.bf16.msra.mxu0 %v3591
    %5171 = vmatpush.bf16.msra.mxu0 %v3572
    %5172 = vmatpush.bf16.msra.mxu0 %v3553
    %5173 = vmatpush.bf16.msra.mxu0 %v3534
    %5174 = vmatpush.bf16.msra.mxu0 %v3515
    %5175 = vmatmul.bf16.gmra.mxu0 %v699
    %v5176 = vpop.f32.mrf.mxu0
    %v5177 = vadd.f32 %v5164, %v5176
    %v5178 = vpop.f32.mrf.mxu0
    %5179 = vdwg.mxu0
    %5180 = vmatpush.bf16.msra.mxu0 %v3800
    %5181 = vmatpush.bf16.msra.mxu0 %v3781
    %5182 = vmatpush.bf16.msra.mxu0 %v3762
    %5183 = vmatpush.bf16.msra.mxu0 %v3743
    %5184 = vmatpush.bf16.msra.mxu0 %v3724
    %5185 = vmatpush.bf16.msra.mxu0 %v3705
    %5186 = vmatpush.bf16.msra.mxu0 %v3686
    %5187 = vmatpush.bf16.msra.mxu0 %v3667
    %5188 = vmatmul.bf16.gmra.mxu0 %v700
    %v5189 = vpop.f32.mrf.mxu0
    %v5190 = vadd.f32 %v5177, %v5189
    %v5191 = vpop.f32.mrf.mxu0
    %5192 = vdwg.mxu0
    %5193 = vmatpush.bf16.msra.mxu0 %v3345
    %5194 = vmatpush.bf16.msra.mxu0 %v3326
    %5195 = vmatpush.bf16.msra.mxu0 %v3307
    %5196 = vmatpush.bf16.msra.mxu0 %v3288
    %5197 = vmatpush.bf16.msra.mxu0 %v3269
    %5198 = vmatpush.bf16.msra.mxu0 %v3250
    %5199 = vmatpush.bf16.msra.mxu0 %v3231
    %5200 = vmatpush.bf16.msra.mxu0 %v3212
    %5201 = vmatmul.bf16.gmra.mxu0 %v697
    %v5202 = vpop.f32.mrf.mxu0
    %v5203 = vadd.f32 0.0, %v5202
    %v5204 = vpop.f32.mrf.mxu0
    %5205 = vdwg.mxu0
    %5206 = vmatpush.bf16.msra.mxu0 %v3497
    %5207 = vmatpush.bf16.msra.mxu0 %v3478
    %5208 = vmatpush.bf16.msra.mxu0 %v3459
    %5209 = vmatpush.bf16.msra.mxu0 %v3440
    %5210 = vmatpush.bf16.msra.mxu0 %v3421
    %5211 = vmatpush.bf16.msra.mxu0 %v3402
    %5212 = vmatpush.bf16.msra.mxu0 %v3383
    %5213 = vmatpush.bf16.msra.mxu0 %v3364
    %5214 = vmatmul.bf16.gmra.mxu0 %v698
    %v5215 = vpop.f32.mrf.mxu0
    %v5216 = vadd.f32 %v5203, %v5215
    %v5217 = vpop.f32.mrf.mxu0
    %5218 = vdwg.mxu0
    %5219 = vmatpush.bf16.msra.mxu0 %v3649
    %5220 = vmatpush.bf16.msra.mxu0 %v3630
    %5221 = vmatpush.bf16.msra.mxu0 %v3611
    %5222 = vmatpush.bf16.msra.mxu0 %v3592
    %5223 = vmatpush.bf16.msra.mxu0 %v3573
    %5224 = vmatpush.bf16.msra.mxu0 %v3554
    %5225 = vmatpush.bf16.msra.mxu0 %v3535
    %5226 = vmatpush.bf16.msra.mxu0 %v3516
    %5227 = vmatmul.bf16.gmra.mxu0 %v699
    %v5228 = vpop.f32.mrf.mxu0
    %v5229 = vadd.f32 %v5216, %v5228
    %v5230 = vpop.f32.mrf.mxu0
    %5231 = vdwg.mxu0
    %5232 = vmatpush.bf16.msra.mxu0 %v3801
    %5233 = vmatpush.bf16.msra.mxu0 %v3782
    %5234 = vmatpush.bf16.msra.mxu0 %v3763
    %5235 = vmatpush.bf16.msra.mxu0 %v3744
    %5236 = vmatpush.bf16.msra.mxu0 %v3725
    %5237 = vmatpush.bf16.msra.mxu0 %v3706
    %5238 = vmatpush.bf16.msra.mxu0 %v3687
    %5239 = vmatpush.bf16.msra.mxu0 %v3668
    %5240 = vmatmul.bf16.gmra.mxu0 %v700
    %v5241 = vpop.f32.mrf.mxu0
    %v5242 = vadd.f32 %v5229, %v5241
    %v5243 = vpop.f32.mrf.mxu0
    %5244 = vdwg.mxu0
    %5245 = vmatpush.bf16.msra.mxu0 %v3346
    %5246 = vmatpush.bf16.msra.mxu0 %v3327
    %5247 = vmatpush.bf16.msra.mxu0 %v3308
    %5248 = vmatpush.bf16.msra.mxu0 %v3289
    %5249 = vmatpush.bf16.msra.mxu0 %v3270
    %5250 = vmatpush.bf16.msra.mxu0 %v3251
    %5251 = vmatpush.bf16.msra.mxu0 %v3232
    %5252 = vmatpush.bf16.msra.mxu0 %v3213
    %5253 = vmatmul.bf16.gmra.mxu0 %v697
    %v5254 = vpop.f32.mrf.mxu0
    %v5255 = vadd.f32 0.0, %v5254
    %v5256 = vpop.f32.mrf.mxu0
    %5257 = vdwg.mxu0
    %5258 = vmatpush.bf16.msra.mxu0 %v3498
    %5259 = vmatpush.bf16.msra.mxu0 %v3479
    %5260 = vmatpush.bf16.msra.mxu0 %v3460
    %5261 = vmatpush.bf16.msra.mxu0 %v3441
    %5262 = vmatpush.bf16.msra.mxu0 %v3422
    %5263 = vmatpush.bf16.msra.mxu0 %v3403
    %5264 = vmatpush.bf16.msra.mxu0 %v3384
    %5265 = vmatpush.bf16.msra.mxu0 %v3365
    %5266 = vmatmul.bf16.gmra.mxu0 %v698
    %v5267 = vpop.f32.mrf.mxu0
    %v5268 = vadd.f32 %v5255, %v5267
    %v5269 = vpop.f32.mrf.mxu0
    %5270 = vdwg.mxu0
    %5271 = vmatpush.bf16.msra.mxu0 %v3650
    %5272 = vmatpush.bf16.msra.mxu0 %v3631
    %5273 = vmatpush.bf16.msra.mxu0 %v3612
    %5274 = vmatpush.bf16.msra.mxu0 %v3593
    %5275 = vmatpush.bf16.msra.mxu0 %v3574
    %5276 = vmatpush.bf16.msra.mxu0 %v3555
    %5277 = vmatpush.bf16.msra.mxu0 %v3536
    %5278 = vmatpush.bf16.msra.mxu0 %v3517
    %5279 = vmatmul.bf16.gmra.mxu0 %v699
    %v5280 = vpop.f32.mrf.mxu0
    %v5281 = vadd.f32 %v5268, %v5280
    %v5282 = vpop.f32.mrf.mxu0
    %5283 = vdwg.mxu0
    %5284 = vmatpush.bf16.msra.mxu0 %v3802
    %5285 = vmatpush.bf16.msra.mxu0 %v3783
    %5286 = vmatpush.bf16.msra.mxu0 %v3764
    %5287 = vmatpush.bf16.msra.mxu0 %v3745
    %5288 = vmatpush.bf16.msra.mxu0 %v3726
    %5289 = vmatpush.bf16.msra.mxu0 %v3707
    %5290 = vmatpush.bf16.msra.mxu0 %v3688
    %5291 = vmatpush.bf16.msra.mxu0 %v3669
    %5292 = vmatmul.bf16.gmra.mxu0 %v700
    %v5293 = vpop.f32.mrf.mxu0
    %v5294 = vadd.f32 %v5281, %v5293
    %v5295 = vpop.f32.mrf.mxu0
    %5296 = vdwg.mxu0
    %5297 = vmatpush.bf16.msra.mxu0 %v3347
    %5298 = vmatpush.bf16.msra.mxu0 %v3328
    %5299 = vmatpush.bf16.msra.mxu0 %v3309
    %5300 = vmatpush.bf16.msra.mxu0 %v3290
    %5301 = vmatpush.bf16.msra.mxu0 %v3271
    %5302 = vmatpush.bf16.msra.mxu0 %v3252
    %5303 = vmatpush.bf16.msra.mxu0 %v3233
    %5304 = vmatpush.bf16.msra.mxu0 %v3214
    %5305 = vmatmul.bf16.gmra.mxu0 %v697
    %v5306 = vpop.f32.mrf.mxu0
    %v5307 = vadd.f32 0.0, %v5306
    %v5308 = vpop.f32.mrf.mxu0
    %5309 = vdwg.mxu0
    %5310 = vmatpush.bf16.msra.mxu0 %v3499
    %5311 = vmatpush.bf16.msra.mxu0 %v3480
    %5312 = vmatpush.bf16.msra.mxu0 %v3461
    %5313 = vmatpush.bf16.msra.mxu0 %v3442
    %5314 = vmatpush.bf16.msra.mxu0 %v3423
    %5315 = vmatpush.bf16.msra.mxu0 %v3404
    %5316 = vmatpush.bf16.msra.mxu0 %v3385
    %5317 = vmatpush.bf16.msra.mxu0 %v3366
    %5318 = vmatmul.bf16.gmra.mxu0 %v698
    %v5319 = vpop.f32.mrf.mxu0
    %v5320 = vadd.f32 %v5307, %v5319
    %v5321 = vpop.f32.mrf.mxu0
    %5322 = vdwg.mxu0
    %5323 = vmatpush.bf16.msra.mxu0 %v3651
    %5324 = vmatpush.bf16.msra.mxu0 %v3632
    %5325 = vmatpush.bf16.msra.mxu0 %v3613
    %5326 = vmatpush.bf16.msra.mxu0 %v3594
    %5327 = vmatpush.bf16.msra.mxu0 %v3575
    %5328 = vmatpush.bf16.msra.mxu0 %v3556
    %5329 = vmatpush.bf16.msra.mxu0 %v3537
    %5330 = vmatpush.bf16.msra.mxu0 %v3518
    %5331 = vmatmul.bf16.gmra.mxu0 %v699
    %v5332 = vpop.f32.mrf.mxu0
    %v5333 = vadd.f32 %v5320, %v5332
    %v5334 = vpop.f32.mrf.mxu0
    %5335 = vdwg.mxu0
    %5336 = vmatpush.bf16.msra.mxu0 %v3803
    %5337 = vmatpush.bf16.msra.mxu0 %v3784
    %5338 = vmatpush.bf16.msra.mxu0 %v3765
    %5339 = vmatpush.bf16.msra.mxu0 %v3746
    %5340 = vmatpush.bf16.msra.mxu0 %v3727
    %5341 = vmatpush.bf16.msra.mxu0 %v3708
    %5342 = vmatpush.bf16.msra.mxu0 %v3689
    %5343 = vmatpush.bf16.msra.mxu0 %v3670
    %5344 = vmatmul.bf16.gmra.mxu0 %v700
    %v5345 = vpop.f32.mrf.mxu0
    %v5346 = vadd.f32 %v5333, %v5345
    %v5347 = vpop.f32.mrf.mxu0
    %5348 = vdwg.mxu0
    %5349 = vmatpush.bf16.msra.mxu0 %v3348
    %5350 = vmatpush.bf16.msra.mxu0 %v3329
    %5351 = vmatpush.bf16.msra.mxu0 %v3310
    %5352 = vmatpush.bf16.msra.mxu0 %v3291
    %5353 = vmatpush.bf16.msra.mxu0 %v3272
    %5354 = vmatpush.bf16.msra.mxu0 %v3253
    %5355 = vmatpush.bf16.msra.mxu0 %v3234
    %5356 = vmatpush.bf16.msra.mxu0 %v3215
    %5357 = vmatmul.bf16.gmra.mxu0 %v697
    %v5358 = vpop.f32.mrf.mxu0
    %v5359 = vadd.f32 0.0, %v5358
    %v5360 = vpop.f32.mrf.mxu0
    %5361 = vdwg.mxu0
    %5362 = vmatpush.bf16.msra.mxu0 %v3500
    %5363 = vmatpush.bf16.msra.mxu0 %v3481
    %5364 = vmatpush.bf16.msra.mxu0 %v3462
    %5365 = vmatpush.bf16.msra.mxu0 %v3443
    %5366 = vmatpush.bf16.msra.mxu0 %v3424
    %5367 = vmatpush.bf16.msra.mxu0 %v3405
    %5368 = vmatpush.bf16.msra.mxu0 %v3386
    %5369 = vmatpush.bf16.msra.mxu0 %v3367
    %5370 = vmatmul.bf16.gmra.mxu0 %v698
    %v5371 = vpop.f32.mrf.mxu0
    %v5372 = vadd.f32 %v5359, %v5371
    %v5373 = vpop.f32.mrf.mxu0
    %5374 = vdwg.mxu0
    %5375 = vmatpush.bf16.msra.mxu0 %v3652
    %5376 = vmatpush.bf16.msra.mxu0 %v3633
    %5377 = vmatpush.bf16.msra.mxu0 %v3614
    %5378 = vmatpush.bf16.msra.mxu0 %v3595
    %5379 = vmatpush.bf16.msra.mxu0 %v3576
    %5380 = vmatpush.bf16.msra.mxu0 %v3557
    %5381 = vmatpush.bf16.msra.mxu0 %v3538
    %5382 = vmatpush.bf16.msra.mxu0 %v3519
    %5383 = vmatmul.bf16.gmra.mxu0 %v699
    %v5384 = vpop.f32.mrf.mxu0
    %v5385 = vadd.f32 %v5372, %v5384
    %v5386 = vpop.f32.mrf.mxu0
    %5387 = vdwg.mxu0
    %5388 = vmatpush.bf16.msra.mxu0 %v3804
    %5389 = vmatpush.bf16.msra.mxu0 %v3785
    %5390 = vmatpush.bf16.msra.mxu0 %v3766
    %5391 = vmatpush.bf16.msra.mxu0 %v3747
    %5392 = vmatpush.bf16.msra.mxu0 %v3728
    %5393 = vmatpush.bf16.msra.mxu0 %v3709
    %5394 = vmatpush.bf16.msra.mxu0 %v3690
    %5395 = vmatpush.bf16.msra.mxu0 %v3671
    %5396 = vmatmul.bf16.gmra.mxu0 %v700
    %v5397 = vpop.f32.mrf.mxu0
    %v5398 = vadd.f32 %v5385, %v5397
    %v5399 = vpop.f32.mrf.mxu0
    %5400 = vdwg.mxu0
    %v5401 = vld [vmem:[#allocation13] sm:$0xff]
    %v5402 = vld [vmem:[#allocation13 + $0x8] sm:$0xff]
    %v5403 = vld [vmem:[#allocation13 + $0x10] sm:$0x7]
    %v5407 = vperm.slane %v5401, 0
    %v5408 = vperm.slane %v5401, 1
    %v5409 = vperm.slane %v5401, 2
    %v5410 = vperm.slane %v5401, 3
    %v5411 = vperm.slane %v5401, 4
    %v5412 = vperm.slane %v5401, 5
    %v5413 = vperm.slane %v5401, 6
    %v5414 = vperm.slane %v5401, 7
    %v5415 = vperm.slane %v5402, 0
    %v5416 = vperm.slane %v5402, 1
    %v5417 = vperm.slane %v5402, 2
    %v5418 = vperm.slane %v5402, 3
    %v5419 = vperm.slane %v5402, 4
    %v5420 = vperm.slane %v5402, 5
    %v5421 = vperm.slane %v5402, 6
    %v5422 = vperm.slane %v5402, 7
    %v5423 = vperm.slane %v5403, 0
    %v5424 = vperm.slane %v5403, 1
    %v5425 = vperm.slane %v5403, 2
    %v5445 = vadd.f32 %v4462, %v5407
    %v5446 = vadd.f32 %v4514, %v5408
    %v5447 = vadd.f32 %v4566, %v5409
    %v5448 = vadd.f32 %v4618, %v5410
    %v5449 = vadd.f32 %v4670, %v5411
    %v5450 = vadd.f32 %v4722, %v5412
    %v5451 = vadd.f32 %v4774, %v5413
    %v5452 = vadd.f32 %v4826, %v5414
    %v5453 = vadd.f32 %v4878, %v5415
    %v5454 = vadd.f32 %v4930, %v5416
    %v5455 = vadd.f32 %v4982, %v5417
    %v5456 = vadd.f32 %v5034, %v5418
    %v5457 = vadd.f32 %v5086, %v5419
    %v5458 = vadd.f32 %v5138, %v5420
    %v5459 = vadd.f32 %v5190, %v5421
    %v5460 = vadd.f32 %v5242, %v5422
    %v5461 = vadd.f32 %v5294, %v5423
    %v5462 = vadd.f32 %v5346, %v5424
    %v5463 = vadd.f32 %v5398, %v5425
    %v5464 = vsub.f32 0.0, %v5445
    %v5465 = vsub.f32 0.0, %v5446
    %v5466 = vsub.f32 0.0, %v5447
    %v5467 = vsub.f32 0.0, %v5448
    %v5468 = vsub.f32 0.0, %v5449
    %v5469 = vsub.f32 0.0, %v5450
    %v5470 = vsub.f32 0.0, %v5451
    %v5471 = vsub.f32 0.0, %v5452
    %v5472 = vsub.f32 0.0, %v5453
    %v5473 = vsub.f32 0.0, %v5454
    %v5474 = vsub.f32 0.0, %v5455
    %v5475 = vsub.f32 0.0, %v5456
    %v5476 = vsub.f32 0.0, %v5457
    %v5477 = vsub.f32 0.0, %v5458
    %v5478 = vsub.f32 0.0, %v5459
    %v5479 = vsub.f32 0.0, %v5460
    %v5480 = vsub.f32 0.0, %v5461
    %v5481 = vsub.f32 0.0, %v5462
    %v5482 = vsub.f32 0.0, %v5463
    %v5483 = vmul.f32 %v5464, 1.442695
    %v5484 = vpow.pop %v5483
    %v5485 = vmul.f32 %v5465, 1.442695
    %v5486 = vpow.pop %v5485
    %v5487 = vmul.f32 %v5466, 1.442695
    %v5488 = vpow.pop %v5487
    %v5489 = vmul.f32 %v5467, 1.442695
    %v5490 = vpow.pop %v5489
    %v5491 = vmul.f32 %v5468, 1.442695
    %v5492 = vpow.pop %v5491
    %v5493 = vmul.f32 %v5469, 1.442695
    %v5494 = vpow.pop %v5493
    %v5495 = vmul.f32 %v5470, 1.442695
    %v5496 = vpow.pop %v5495
    %v5497 = vmul.f32 %v5471, 1.442695
    %v5498 = vpow.pop %v5497
    %v5499 = vmul.f32 %v5472, 1.442695
    %v5500 = vpow.pop %v5499
    %v5501 = vmul.f32 %v5473, 1.442695
    %v5502 = vpow.pop %v5501
    %v5503 = vmul.f32 %v5474, 1.442695
    %v5504 = vpow.pop %v5503
    %v5505 = vmul.f32 %v5475, 1.442695
    %v5506 = vpow.pop %v5505
    %v5507 = vmul.f32 %v5476, 1.442695
    %v5508 = vpow.pop %v5507
    %v5509 = vmul.f32 %v5477, 1.442695
    %v5510 = vpow.pop %v5509
    %v5511 = vmul.f32 %v5478, 1.442695
    %v5512 = vpow.pop %v5511
    %v5513 = vmul.f32 %v5479, 1.442695
    %v5514 = vpow.pop %v5513
    %v5515 = vmul.f32 %v5480, 1.442695
    %v5516 = vpow.pop %v5515
    %v5517 = vmul.f32 %v5481, 1.442695
    %v5518 = vpow.pop %v5517
    %v5519 = vmul.f32 %v5482, 1.442695
    %v5520 = vpow.pop %v5519
    %v5521 = vadd.f32 %v5484, 1.0
    %v5522 = vadd.f32 %v5486, 1.0
    %v5523 = vadd.f32 %v5488, 1.0
    %v5524 = vadd.f32 %v5490, 1.0
    %v5525 = vadd.f32 %v5492, 1.0
    %v5526 = vadd.f32 %v5494, 1.0
    %v5527 = vadd.f32 %v5496, 1.0
    %v5528 = vadd.f32 %v5498, 1.0
    %v5529 = vadd.f32 %v5500, 1.0
    %v5530 = vadd.f32 %v5502, 1.0
    %v5531 = vadd.f32 %v5504, 1.0
    %v5532 = vadd.f32 %v5506, 1.0
    %v5533 = vadd.f32 %v5508, 1.0
    %v5534 = vadd.f32 %v5510, 1.0
    %v5535 = vadd.f32 %v5512, 1.0
    %v5536 = vadd.f32 %v5514, 1.0
    %v5537 = vadd.f32 %v5516, 1.0
    %v5538 = vadd.f32 %v5518, 1.0
    %v5539 = vadd.f32 %v5520, 1.0
    %v5540 = vrcp.pop %v5521
    %v5541 = vrcp.pop %v5522
    %v5542 = vrcp.pop %v5523
    %v5543 = vrcp.pop %v5524
    %v5544 = vrcp.pop %v5525
    %v5545 = vrcp.pop %v5526
    %v5546 = vrcp.pop %v5527
    %v5547 = vrcp.pop %v5528
    %v5548 = vrcp.pop %v5529
    %v5549 = vrcp.pop %v5530
    %v5550 = vrcp.pop %v5531
    %v5551 = vrcp.pop %v5532
    %v5552 = vrcp.pop %v5533
    %v5553 = vrcp.pop %v5534
    %v5554 = vrcp.pop %v5535
    %v5555 = vrcp.pop %v5536
    %v5556 = vrcp.pop %v5537
    %v5557 = vrcp.pop %v5538
    %v5558 = vrcp.pop %v5539
    %5559 = vst [vmem:[#allocation14] sm:$0xff] %v5540
    %5560 = vst [vmem:[#allocation14 + $0x8] sm:$0xff] %v5541
    %5561 = vst [vmem:[#allocation14 + $0x10] sm:$0xff] %v5542
    %5562 = vst [vmem:[#allocation14 + $0x18] sm:$0xff] %v5543
    %5563 = vst [vmem:[#allocation14 + $0x20] sm:$0xff] %v5544
    %5564 = vst [vmem:[#allocation14 + $0x28] sm:$0xff] %v5545
    %5565 = vst [vmem:[#allocation14 + $0x30] sm:$0xff] %v5546
    %5566 = vst [vmem:[#allocation14 + $0x38] sm:$0xff] %v5547
    %5567 = vst [vmem:[#allocation14 + $0x40] sm:$0xff] %v5548
    %5568 = vst [vmem:[#allocation14 + $0x48] sm:$0xff] %v5549
    %5569 = vst [vmem:[#allocation14 + $0x50] sm:$0xff] %v5550
    %5570 = vst [vmem:[#allocation14 + $0x58] sm:$0xff] %v5551
    %5571 = vst [vmem:[#allocation14 + $0x60] sm:$0xff] %v5552
    %5572 = vst [vmem:[#allocation14 + $0x68] sm:$0xff] %v5553
    %5573 = vst [vmem:[#allocation14 + $0x70] sm:$0xff] %v5554
    %5574 = vst [vmem:[#allocation14 + $0x78] sm:$0xff] %v5555
    %5575 = vst [vmem:[#allocation14 + $0x80] sm:$0xff] %v5556
    %5576 = vst [vmem:[#allocation14 + $0x88] sm:$0xff] %v5557
    %vm5577 = vcmask 392192
    %5578 = vst.msk [vmem:[#allocation14 + $0x90] sm:$0xff] %vm5577, %v5558
    // Predicated region
    $region58: #{tpu_custom_call.1} parent=1 // pred_check
      _
    $region59: #{tpu_custom_call.1} parent=1 // pred_check_branch
      %5580 = sbr.rel (0) target = $region61
    $region60: #{tpu_custom_call.1} parent=1 // pred_region
      %5582 = vsyncadd [#allocation4], 0
      %s5584 = sshll.u32 [#allocation14], 4
      %s5585 = int_to_ptr.vmem [resolvable:$true] %s5584
      %s5586 = sshll.u32 %s7, 4
      %s5587 = int_to_ptr.hbm [resolvable:$true] %s5586
      %5589 = dma.vmem_to_hbm [thread:$0]  %s5585, 2432, %s5587, [#allocation4]
    $region61: #{tpu_custom_call.1} parent=1 // pred_fallthru
      _
    // Predicated region
    $region62: #{tpu_custom_call.1} parent=1 // pred_check
      _
    $region63: #{tpu_custom_call.1} parent=1 // pred_check_branch
      %5591 = sbr.rel (0) target = $region65
    $region64: #{tpu_custom_call.1} parent=1 // pred_region
      %5593 = dma.done [#allocation4], 2432
    $region65: #{tpu_custom_call.1} parent=1 // pred_fallthru
      _
    %5594 = vsyncpa [#allocation3], 1
    %5595 = vsyncpa [#allocation6], 1
    %5596 = vsyncpa [#allocation9], 1
    %5597 = vsyncpa [#allocation12], 1
    %5598 = vsyncpa [#allocation4], 1

</llo_original>
